<compile_context>
chip_gen: v7x
topology: tpu7x:2x2x1
jax: 0.10.0
libtpu: 0.0.40
codegen_flags: <defaults>
</compile_context>

<pallas_src>
import functools

import jax
import jax.numpy as jnp
import numpy as np
from jax.experimental import pallas as pl
from jax.experimental.pallas import tpu as pltpu


# ----------------------------- shared math ---------------------------------
def _layer_norm(x, g, b, eps=1e-5):
    mu = jnp.mean(x, axis=-1, keepdims=True)
    var = jnp.mean((x - mu) ** 2, axis=-1, keepdims=True)
    return (x - mu) * jax.lax.rsqrt(var + eps) * g + b


# ------------------------------ Pallas kernel -------------------------------
def encoder_layer_kernel(num_heads, compute_dtype, approx_softmax,
                         emb_ref, mask_ref, keep_ref,
                         wqkv_ref, bqkv_ref, wo_ref, bo_ref,
                         ln1g_ref, ln1b_ref,
                         w1_ref, b1_ref, w2_ref, b2_ref,
                         ln2g_ref, ln2b_ref,
                         out_ref, x_ref, o_ref):
    """One encoder layer for one batch block per grid step; grid = (N//B, L)."""
    l = pl.program_id(1)
    num_l = pl.num_programs(1)

    # Initialize the carried activation from the embedding block at layer 0.
    @pl.when(l == 0)
    def _init():
        x_ref[...] = emb_ref[...]

    B, T, E = x_ref.shape
    H = num_heads
    Dh = E // H

    def cm(a):
        # Cast MXU operands only; VPU math stays f32 (v5e has no bf16 VPU).
        return a.astype(compute_dtype) if compute_dtype != jnp.float32 else a

    def mm(a, w):
        return jnp.dot(cm(a), w, preferred_element_type=jnp.float32)

    x2 = x_ref[...].reshape(B * T, E)          # merged [B*T, E] activation

    # ---------------- Multi-head self-attention sublayer -------------------
    # Fused QKV projection: one [B*T, E] @ [E, 3E] matmul.
    qkv = mm(x2, wqkv_ref[0]) + bqkv_ref[0]                      # [B*T, 3E]

    # Hoist the additive-mask broadcast out of the head loop (no CSE in JAX).
    mask_b = jnp.broadcast_to(mask_ref[...], (B, T, T))          # [B, T, T]

    for h in range(H):                                           # static, small H
        q_h = qkv[:, h * Dh:(h + 1) * Dh].reshape(B, T, Dh)
        k_h = qkv[:, E + h * Dh:E + (h + 1) * Dh].reshape(B, T, Dh)
        v_h = qkv[:, 2 * E + h * Dh:2 * E + (h + 1) * Dh].reshape(B, T, Dh)

        # NOTE: the reference module does NOT scale scores by 1/sqrt(Dh).
        s = jnp.einsum('btd,bsd->bts', cm(q_h), cm(k_h),
                       preferred_element_type=jnp.float32) + mask_b
        m = jnp.max(s, axis=-1, keepdims=True)
        e = jnp.exp(s - m)
        den = jnp.sum(e, axis=-1, keepdims=True)
        if approx_softmax:
            alpha = e * pl.reciprocal(den, approx=True)          # EUP reciprocal
        else:
            alpha = e / den                                      # exact (validation)

        o_h = jnp.einsum('bts,bsd->btd', cm(alpha), cm(v_h),
                         preferred_element_type=jnp.float32)     # [B, T, Dh]
        # Assemble heads at static lane offsets (masked stores, no concat).
        o_ref[:, :, h * Dh:(h + 1) * Dh] = o_h

    # Single full-K output projection + wo's ReLU.
    z = jnp.maximum(mm(o_ref[...].reshape(B * T, E), wo_ref[0]) + bo_ref[0], 0.0)
    x2 = jnp.maximum(x2 + z, 0.0)                    # ResidualsNorm: ReLU(x + z)
    x2 = _layer_norm(x2, ln1g_ref[0], ln1b_ref[0])

    # --------------------------- FFN sublayer -------------------------------
    hdn = jnp.maximum(mm(x2, w1_ref[0]) + b1_ref[0], 0.0)        # [B*T, 4E]
    z = mm(hdn, w2_ref[0]) + b2_ref[0]                           # [B*T, E]
    x2 = jnp.maximum(x2 + z, 0.0)
    x2 = _layer_norm(x2, ln2g_ref[0], ln2b_ref[0])

    # Carry for the next layer iteration.
    x_ref[...] = x2.reshape(B, T, E)

    # Final masking on the last layer: (mask.permute(0,2,1) >= 0) * x,
    # via the precomputed [B, T, 1] keep mask.
    @pl.when(l == num_l - 1)
    def _finalize():
        out_ref[...] = x2.reshape(B, T, E) * keep_ref[...]


# ------------------------------- wrapper -------------------------------------
def transformer_encoder(token_ids, pos_ids, input_mask, params, num_heads,
                        compute_dtype=jnp.float32, batch_tile=None,
                        approx_softmax=False):
    N, T = token_ids.shape
    E = params["tok_emb"].shape[1]
    L = params["wq"].shape[0]

    # Embedding lookups (gather) stay in plain JAX glue.
    # TODO(synk): embedding gather is not implemented inside the Pallas kernel.
    emb = (params["tok_emb"][token_ids] +
           params["pos_emb"][pos_ids]).astype(jnp.float32)       # [N, T, E]
    mask = input_mask.astype(jnp.float32)                        # [N, 1, T]
    # Precomputed keep mask (replaces the O(T^2) in-kernel diagonal trick).
    keep = (jnp.transpose(mask, (0, 2, 1)) >= 0.0).astype(jnp.float32)  # [N, T, 1]

    # Fuse Q/K/V weights -> single [L, E, 3E] matmul operand (+ fused bias).
    wqkv = jnp.concatenate([params["wq"], params["wk"], params["wv"]], axis=-1)
    bqkv = jnp.concatenate([params["bq"], params["bk"], params["bv"]], axis=-1)

    def wcast(w):
        # Stream big matmul weights in compute_dtype (halves HBM traffic when
        # bf16); biases / LN params stay f32 (added on the f32 VPU path).
        return w.astype(compute_dtype) if compute_dtype != jnp.float32 else w

    weights = [wcast(wqkv), bqkv, wcast(params["wo"]), params["bo"],
               params["ln1g"], params["ln1b"],
               wcast(params["w1"]), params["b1"],
               wcast(params["w2"]), params["b2"],
               params["ln2g"], params["ln2b"]]

    # --- batch block size: amortize weight DMA, fill the MXU M dimension ----
    if batch_tile is None:
        batch_tile = 1
        for bt in range(N, 0, -1):
            if N % bt == 0 and bt * T <= 512:
                batch_tile = bt
                break
    B_tile = int(batch_tile)
    assert N % B_tile == 0

    # Stream one layer's weights per grid step along the (arbitrary) layer axis.
    def layer_spec(arr):
        blk = (1,) + arr.shape[1:]
        return pl.BlockSpec(blk, lambda nb, l: (l, 0, 0))

    w_specs = [layer_spec(w) for w in weights]

    # --- hardware-aware VMEM budget -----------------------------------------
    act_tile = B_tile * T * E * 4
    w_bytes = sum(int(np.prod(w.shape[1:])) * w.dtype.itemsize for w in weights)
    interm = B_tile * T * (3 * E + 4 * E) * 4 + B_tile * T * T * 4
    needed = (2 * w_bytes           # double-buffered per-layer weights
              + 4 * act_tile        # emb + out blocks (double-buffered)
              + 2 * act_tile        # carried x + head-assembly scratch
              + interm + (1 << 20))
    try:
        vmem_cap = int(pltpu.get_tpu_info().vmem_capacity_bytes)
    except Exception:
        vmem_cap = 64 * 2**20       # conservative: v7x physical VMEM
    vmem_limit = int(max(32 * 2**20, min(int(0.8 * vmem_cap), 2 * needed)))

    kernel = functools.partial(encoder_layer_kernel, num_heads, compute_dtype,
                               approx_softmax)

    # TODO(synk): for large E/T, chunk w1/w2 along the hidden dim and block the
    # attention over the KV axis (flash-style) to bound VMEM on v7x.
    out = pl.pallas_call(
        kernel,
        out_shape=jax.ShapeDtypeStruct((N, T, E), jnp.float32),
        grid_spec=pltpu.PrefetchScalarGridSpec(
            num_scalar_prefetch=0,
            grid=(N // B_tile, L),                    # layer axis last (inner)
            in_specs=[
                pl.BlockSpec((B_tile, T, E), lambda nb, l: (nb, 0, 0)),  # emb
                pl.BlockSpec((B_tile, 1, T), lambda nb, l: (nb, 0, 0)),  # add-mask
                pl.BlockSpec((B_tile, T, 1), lambda nb, l: (nb, 0, 0)),  # keep
            ] + w_specs,
            out_specs=pl.BlockSpec((B_tile, T, E), lambda nb, l: (nb, 0, 0)),
            scratch_shapes=[pltpu.VMEM((B_tile, T, E), jnp.float32),   # carried x
                            pltpu.VMEM((B_tile, T, E), jnp.float32)],  # head assembly
        ),
        compiler_params=pltpu.CompilerParams(
            dimension_semantics=("parallel", "arbitrary"),
            vmem_limit_bytes=vmem_limit),
    )(emb, mask, keep, *weights)
    return out


# --------------------------- pure-JAX reference ------------------------------
def reference_forward(token_ids, pos_ids, input_mask, params, num_heads):
    hp = jax.lax.Precision.HIGHEST
    x = (params["tok_emb"][token_ids] +
         params["pos_emb"][pos_ids]).astype(jnp.float32)
    mask = input_mask.astype(jnp.float32)            # [N,1,T]
    mask4 = mask[:, None, :, :]                      # [N,1,1,T]
    N, T, E = x.shape
    L = params["wq"].shape[0]
    Dh = E // num_heads

    def split(a):
        return jnp.transpose(a.reshape(N, T, num_heads, Dh), (0, 2, 1, 3))

    for l in range(L):
        q = jnp.matmul(x, params["wq"][l], precision=hp) + params["bq"][l]
        k = jnp.matmul(x, params["wk"][l], precision=hp) + params["bk"][l]
        v = jnp.matmul(x, params["wv"][l], precision=hp) + params["bv"][l]
        qh, kh, vh = split(q), split(k), split(v)
        scores = jnp.matmul(qh, jnp.transpose(kh, (0, 1, 3, 2)), precision=hp)
        scores = scores + mask4
        alpha = jax.nn.softmax(scores, axis=-1)
        o = jnp.matmul(alpha, vh, precision=hp)
        o = jnp.transpose(o, (0, 2, 1, 3)).reshape(N, T, E)
        z = jnp.maximum(
            jnp.matmul(o, params["wo"][l], precision=hp) + params["bo"][l], 0.0)
        x = jnp.maximum(x + z, 0.0)
        x = _layer_norm(x, params["ln1g"][l], params["ln1b"][l])
        h = jnp.maximum(
            jnp.matmul(x, params["w1"][l], precision=hp) + params["b1"][l], 0.0)
        z = jnp.matmul(h, params["w2"][l], precision=hp) + params["b2"][l]
        x = jnp.maximum(x + z, 0.0)
        x = _layer_norm(x, params["ln2g"][l], params["ln2b"][l])

    keep = (jnp.transpose(mask, (0, 2, 1)) >= 0.0).astype(x.dtype)
    return x * keep


# ------------------------------ parameters -----------------------------------
def make_params(key, vocab_size, hidden_size, max_seq_length, encoder_layers):
    E, L = hidden_size, encoder_layers
    ks = jax.random.split(key, 16)

    def nrm(k, shape, scale=0.02):
        return jax.random.normal(k, shape, jnp.float32) * scale

    return {
        "tok_emb": nrm(ks[0], (vocab_size, E)),
        "pos_emb": nrm(ks[1], (max_seq_length, E)),
        "wq": nrm(ks[2], (L, E, E)),      "bq": nrm(ks[3], (L, 1, E)),
        "wk": nrm(ks[4], (L, E, E)),      "bk": nrm(ks[5], (L, 1, E)),
        "wv": nrm(ks[6], (L, E, E)),      "bv": nrm(ks[7], (L, 1, E)),
        "wo": nrm(ks[8], (L, E, E)),      "bo": nrm(ks[9], (L, 1, E)),
        "ln1g": jnp.ones((L, 1, E), jnp.float32),
        "ln1b": jnp.zeros((L, 1, E), jnp.float32),
        "w1": nrm(ks[10], (L, E, 4 * E)), "b1": nrm(ks[11], (L, 1, 4 * E)),
        "w2": nrm(ks[12], (L, 4 * E, E)), "b2": nrm(ks[13], (L, 1, E)),
        "ln2g": jnp.ones((L, 1, E), jnp.float32),
        "ln2b": jnp.zeros((L, 1, E), jnp.float32),
    }


# --------------------------------- main ---------------------------------------
if __name__ == "__main__":
    # small config consistent with the module's forward
    vocab_size, hidden_size, num_header = 50, 32, 4
    max_seq_length, encoder_layers = 16, 2
    N, T = 2, 8

    key = jax.random.PRNGKey(0)
    k_par, k_tok = jax.random.split(key)
    params = make_params(k_par, vocab_size, hidden_size,
                         max_seq_length, encoder_layers)

    token_ids = jax.random.randint(k_tok, (N, T), 0, vocab_size, jnp.int32)
    pos_ids = jnp.tile(jnp.arange(T, dtype=jnp.int32)[None, :], (N, 1))
    # additive mask: 0 for valid tokens, -10000 for padding (batch 1 pads last 3)
    valid = jnp.array([[1.0] * T,
                       [1.0] * (T - 3) + [0.0] * 3], dtype=jnp.float32)
    input_mask = ((valid - 1.0) * 10000.0)[:, None, :]      # [N, 1, T]

    out = transformer_encoder(token_ids, pos_ids, input_mask, params,
                              num_header, compute_dtype=jnp.float32)
    out = jax.block_until_ready(out)

    ref = jax.block_until_ready(
        reference_forward(token_ids, pos_ids, input_mask, params, num_header))

    np.testing.assert_allclose(np.asarray(out), np.asarray(ref),
                               rtol=2e-3, atol=2e-3)
    print("KERNEL_OK")
</pallas_src>

<mosaic_0001>
module attributes {stable_mosaic.version = 11 : i64} {
  func.func @encoder_layer_kernel(%arg0: i32, %arg1: i32, %arg2: memref<2x8x32xf32, #tpu.memory_space<vmem>>, %arg3: memref<2x1x8xf32, #tpu.memory_space<vmem>>, %arg4: memref<2x8x1xf32, #tpu.memory_space<vmem>>, %arg5: memref<1x32x96xf32, #tpu.memory_space<vmem>>, %arg6: memref<1x1x96xf32, #tpu.memory_space<vmem>>, %arg7: memref<1x32x32xf32, #tpu.memory_space<vmem>>, %arg8: memref<1x1x32xf32, #tpu.memory_space<vmem>>, %arg9: memref<1x1x32xf32, #tpu.memory_space<vmem>>, %arg10: memref<1x1x32xf32, #tpu.memory_space<vmem>>, %arg11: memref<1x32x128xf32, #tpu.memory_space<vmem>>, %arg12: memref<1x1x128xf32, #tpu.memory_space<vmem>>, %arg13: memref<1x128x32xf32, #tpu.memory_space<vmem>>, %arg14: memref<1x1x32xf32, #tpu.memory_space<vmem>>, %arg15: memref<1x1x32xf32, #tpu.memory_space<vmem>>, %arg16: memref<1x1x32xf32, #tpu.memory_space<vmem>>, %arg17: memref<2x8x32xf32, #tpu.memory_space<vmem>>, %arg18: memref<2x8x32xf32, #tpu.memory_space<vmem>>, %arg19: memref<2x8x32xf32, #tpu.memory_space<vmem>>) attributes {dimension_semantics = [#tpu.dimension_semantics<parallel>, #tpu.dimension_semantics<arbitrary>], iteration_bounds = array<i64: 1, 2>, scalar_prefetch = 0 : i64, scratch_operands = 2 : i64, tpu.core_type = #tpu.core_type<tc>, window_params = [{transform_indices = @transform_0, window_bounds = array<i64: 2, 8, 32>}, {transform_indices = @transform_1, window_bounds = array<i64: 2, 1, 8>}, {transform_indices = @transform_2, window_bounds = array<i64: 2, 8, 1>}, {transform_indices = @transform_3, window_bounds = array<i64: 1, 32, 96>}, {transform_indices = @transform_4, window_bounds = array<i64: 1, 1, 96>}, {transform_indices = @transform_5, window_bounds = array<i64: 1, 32, 32>}, {transform_indices = @transform_6, window_bounds = array<i64: 1, 1, 32>}, {transform_indices = @transform_7, window_bounds = array<i64: 1, 1, 32>}, {transform_indices = @transform_8, window_bounds = array<i64: 1, 1, 32>}, {transform_indices = @transform_9, window_bounds = array<i64: 1, 32, 128>}, {transform_indices = @transform_10, window_bounds = array<i64: 1, 1, 128>}, {transform_indices = @transform_11, window_bounds = array<i64: 1, 128, 32>}, {transform_indices = @transform_12, window_bounds = array<i64: 1, 1, 32>}, {transform_indices = @transform_13, window_bounds = array<i64: 1, 1, 32>}, {transform_indices = @transform_14, window_bounds = array<i64: 1, 1, 32>}, {transform_indices = @transform_15, window_bounds = array<i64: 2, 8, 32>}]} {
    %c0_i32 = arith.constant 0 : i32
    %0 = arith.cmpi eq, %arg1, %c0_i32 : i32
    %1 = arith.extui %0 : i1 to i32
    %c0_i32_0 = arith.constant 0 : i32
    %2 = arith.cmpi ne, %1, %c0_i32_0 : i32
    scf.if %2 {
      %c0_91 = arith.constant 0 : index
      %c0_92 = arith.constant 0 : index
      %c0_93 = arith.constant 0 : index
      %181 = vector.load %arg2[%c0_91, %c0_92, %c0_93] : memref<2x8x32xf32, #tpu.memory_space<vmem>>, vector<2x8x32xf32>
      %c0_94 = arith.constant 0 : index
      %c0_95 = arith.constant 0 : index
      %c0_96 = arith.constant 0 : index
      %182 = vector.load %arg18[%c0_94, %c0_95, %c0_96] : memref<2x8x32xf32, #tpu.memory_space<vmem>>, vector<2x8x32xf32>
      tpu.vector_store %arg18[%c0_94, %c0_95, %c0_96], %181 {strides = array<i32>} : memref<2x8x32xf32, #tpu.memory_space<vmem>>, vector<2x8x32xf32>,
    } else {
    }
    %c0 = arith.constant 0 : index
    %c0_1 = arith.constant 0 : index
    %c0_2 = arith.constant 0 : index
    %3 = vector.load %arg18[%c0, %c0_1, %c0_2] : memref<2x8x32xf32, #tpu.memory_space<vmem>>, vector<2x8x32xf32>
    %4 = vector.shape_cast %3 : vector<2x8x32xf32> to vector<16x32xf32>
    %c0_3 = arith.constant 0 : index
    %c0_4 = arith.constant 0 : index
    %c0_5 = arith.constant 0 : index
    %5 = vector.load %arg5[%c0_3, %c0_4, %c0_5] : memref<1x32x96xf32, #tpu.memory_space<vmem>>, vector<1x32x96xf32>
    %6 = vector.shape_cast %5 : vector<1x32x96xf32> to vector<32x96xf32>
    %cst = arith.constant dense<0.000000e+00> : vector<16x96xf32>
    %7 = tpu.matmul %4, %6, %cst {dimension_numbers = #tpu.dot_dimension_numbers<[1], [0], [0], [1], [0, 0, 1, 1], [], []>} : vector<16x32xf32>, vector<32x96xf32>, vector<16x96xf32> -> vector<16x96xf32>
    %c0_6 = arith.constant 0 : index
    %c0_7 = arith.constant 0 : index
    %c0_8 = arith.constant 0 : index
    %8 = vector.load %arg6[%c0_6, %c0_7, %c0_8] : memref<1x1x96xf32, #tpu.memory_space<vmem>>, vector<1x1x96xf32>
    %9 = vector.shape_cast %8 : vector<1x1x96xf32> to vector<1x96xf32>
    %10 = vector.broadcast %9 : vector<1x96xf32> to vector<16x96xf32>
    %11 = arith.addf %7, %10 : vector<16x96xf32>
    %c0_9 = arith.constant 0 : index
    %c0_10 = arith.constant 0 : index
    %c0_11 = arith.constant 0 : index
    %12 = vector.load %arg3[%c0_9, %c0_10, %c0_11] : memref<2x1x8xf32, #tpu.memory_space<vmem>>, vector<2x1x8xf32>
    %13 = vector.shape_cast %12 : vector<2x1x8xf32> to vector<2x1x8xf32>
    %14 = vector.broadcast %13 : vector<2x1x8xf32> to vector<2x8x8xf32>
    %15 = vector.extract_strided_slice %11 {offsets = [0, 0], sizes = [16, 8], strides = [1, 1]} : vector<16x96xf32> to vector<16x8xf32>
    %16 = vector.shape_cast %15 : vector<16x8xf32> to vector<2x8x8xf32>
    %17 = vector.extract_strided_slice %11 {offsets = [0, 32], sizes = [16, 8], strides = [1, 1]} : vector<16x96xf32> to vector<16x8xf32>
    %18 = vector.shape_cast %17 : vector<16x8xf32> to vector<2x8x8xf32>
    %19 = vector.extract_strided_slice %11 {offsets = [0, 64], sizes = [16, 8], strides = [1, 1]} : vector<16x96xf32> to vector<16x8xf32>
    %20 = vector.shape_cast %19 : vector<16x8xf32> to vector<2x8x8xf32>
    "tpu.trace_start"() <{level = 10 : i32, message = "btd,bsd->bts"}> : () -> ()
    %cst_12 = arith.constant dense<0.000000e+00> : vector<2x8x8xf32>
    %21 = tpu.matmul %16, %18, %cst_12 {dimension_numbers = #tpu.dot_dimension_numbers<[2], [2], [1], [1], [0, 0, 0, 1, 1, 1], [0], [0]>} : vector<2x8x8xf32>, vector<2x8x8xf32>, vector<2x8x8xf32> -> vector<2x8x8xf32>
    "tpu.trace_stop"() : () -> ()
    %22 = arith.addf %21, %14 : vector<2x8x8xf32>
    %cst_13 = arith.constant dense<0xFF800000> : vector<2x8xf32>
    %23 = vector.multi_reduction <maximumf>, %22, %cst_13 [2] : vector<2x8x8xf32> to vector<2x8xf32>
    %24 = vector.shape_cast %23 : vector<2x8xf32> to vector<2x8x1xf32>
    %25 = vector.broadcast %24 : vector<2x8x1xf32> to vector<2x8x8xf32>
    %26 = arith.subf %22, %25 : vector<2x8x8xf32>
    %27 = math.exp %26 : vector<2x8x8xf32>
    %cst_14 = arith.constant dense<0.000000e+00> : vector<2x8xf32>
    %28 = vector.multi_reduction <add>, %27, %cst_14 [2] : vector<2x8x8xf32> to vector<2x8xf32>
    %29 = vector.shape_cast %28 : vector<2x8xf32> to vector<2x8x1xf32>
    %30 = vector.broadcast %29 : vector<2x8x1xf32> to vector<2x8x8xf32>
    %31 = arith.divf %27, %30 : vector<2x8x8xf32>
    "tpu.trace_start"() <{level = 10 : i32, message = "bts,bsd->btd"}> : () -> ()
    %cst_15 = arith.constant dense<0.000000e+00> : vector<2x8x8xf32>
    %32 = tpu.matmul %31, %20, %cst_15 {dimension_numbers = #tpu.dot_dimension_numbers<[2], [1], [1], [2], [0, 0, 0, 1, 1, 2], [0], [0]>} : vector<2x8x8xf32>, vector<2x8x8xf32>, vector<2x8x8xf32> -> vector<2x8x8xf32>
    "tpu.trace_stop"() : () -> ()
    %c0_16 = arith.constant 0 : index
    %c0_17 = arith.constant 0 : index
    %c0_18 = arith.constant 0 : index
    %33 = vector.load %arg19[%c0_16, %c0_17, %c0_18] : memref<2x8x32xf32, #tpu.memory_space<vmem>>, vector<2x8x8xf32>
    tpu.vector_store %arg19[%c0_16, %c0_17, %c0_18], %32 {strides = array<i32>} : memref<2x8x32xf32, #tpu.memory_space<vmem>>, vector<2x8x8xf32>,
    %34 = vector.extract_strided_slice %11 {offsets = [0, 8], sizes = [16, 8], strides = [1, 1]} : vector<16x96xf32> to vector<16x8xf32>
    %35 = vector.shape_cast %34 : vector<16x8xf32> to vector<2x8x8xf32>
    %36 = vector.extract_strided_slice %11 {offsets = [0, 40], sizes = [16, 8], strides = [1, 1]} : vector<16x96xf32> to vector<16x8xf32>
    %37 = vector.shape_cast %36 : vector<16x8xf32> to vector<2x8x8xf32>
    %38 = vector.extract_strided_slice %11 {offsets = [0, 72], sizes = [16, 8], strides = [1, 1]} : vector<16x96xf32> to vector<16x8xf32>
    %39 = vector.shape_cast %38 : vector<16x8xf32> to vector<2x8x8xf32>
    "tpu.trace_start"() <{level = 10 : i32, message = "btd,bsd->bts"}> : () -> ()
    %cst_19 = arith.constant dense<0.000000e+00> : vector<2x8x8xf32>
    %40 = tpu.matmul %35, %37, %cst_19 {dimension_numbers = #tpu.dot_dimension_numbers<[2], [2], [1], [1], [0, 0, 0, 1, 1, 1], [0], [0]>} : vector<2x8x8xf32>, vector<2x8x8xf32>, vector<2x8x8xf32> -> vector<2x8x8xf32>
    "tpu.trace_stop"() : () -> ()
    %41 = arith.addf %40, %14 : vector<2x8x8xf32>
    %cst_20 = arith.constant dense<0xFF800000> : vector<2x8xf32>
    %42 = vector.multi_reduction <maximumf>, %41, %cst_20 [2] : vector<2x8x8xf32> to vector<2x8xf32>
    %43 = vector.shape_cast %42 : vector<2x8xf32> to vector<2x8x1xf32>
    %44 = vector.broadcast %43 : vector<2x8x1xf32> to vector<2x8x8xf32>
    %45 = arith.subf %41, %44 : vector<2x8x8xf32>
    %46 = math.exp %45 : vector<2x8x8xf32>
    %cst_21 = arith.constant dense<0.000000e+00> : vector<2x8xf32>
    %47 = vector.multi_reduction <add>, %46, %cst_21 [2] : vector<2x8x8xf32> to vector<2x8xf32>
    %48 = vector.shape_cast %47 : vector<2x8xf32> to vector<2x8x1xf32>
    %49 = vector.broadcast %48 : vector<2x8x1xf32> to vector<2x8x8xf32>
    %50 = arith.divf %46, %49 : vector<2x8x8xf32>
    "tpu.trace_start"() <{level = 10 : i32, message = "bts,bsd->btd"}> : () -> ()
    %cst_22 = arith.constant dense<0.000000e+00> : vector<2x8x8xf32>
    %51 = tpu.matmul %50, %39, %cst_22 {dimension_numbers = #tpu.dot_dimension_numbers<[2], [1], [1], [2], [0, 0, 0, 1, 1, 2], [0], [0]>} : vector<2x8x8xf32>, vector<2x8x8xf32>, vector<2x8x8xf32> -> vector<2x8x8xf32>
    "tpu.trace_stop"() : () -> ()
    %c0_23 = arith.constant 0 : index
    %c0_24 = arith.constant 0 : index
    %c8 = arith.constant 8 : index
    %52 = vector.load %arg19[%c0_23, %c0_24, %c8] : memref<2x8x32xf32, #tpu.memory_space<vmem>>, vector<2x8x8xf32>
    tpu.vector_store %arg19[%c0_23, %c0_24, %c8], %51 {strides = array<i32>} : memref<2x8x32xf32, #tpu.memory_space<vmem>>, vector<2x8x8xf32>,
    %53 = vector.extract_strided_slice %11 {offsets = [0, 16], sizes = [16, 8], strides = [1, 1]} : vector<16x96xf32> to vector<16x8xf32>
    %54 = vector.shape_cast %53 : vector<16x8xf32> to vector<2x8x8xf32>
    %55 = vector.extract_strided_slice %11 {offsets = [0, 48], sizes = [16, 8], strides = [1, 1]} : vector<16x96xf32> to vector<16x8xf32>
    %56 = vector.shape_cast %55 : vector<16x8xf32> to vector<2x8x8xf32>
    %57 = vector.extract_strided_slice %11 {offsets = [0, 80], sizes = [16, 8], strides = [1, 1]} : vector<16x96xf32> to vector<16x8xf32>
    %58 = vector.shape_cast %57 : vector<16x8xf32> to vector<2x8x8xf32>
    "tpu.trace_start"() <{level = 10 : i32, message = "btd,bsd->bts"}> : () -> ()
    %cst_25 = arith.constant dense<0.000000e+00> : vector<2x8x8xf32>
    %59 = tpu.matmul %54, %56, %cst_25 {dimension_numbers = #tpu.dot_dimension_numbers<[2], [2], [1], [1], [0, 0, 0, 1, 1, 1], [0], [0]>} : vector<2x8x8xf32>, vector<2x8x8xf32>, vector<2x8x8xf32> -> vector<2x8x8xf32>
    "tpu.trace_stop"() : () -> ()
    %60 = arith.addf %59, %14 : vector<2x8x8xf32>
    %cst_26 = arith.constant dense<0xFF800000> : vector<2x8xf32>
    %61 = vector.multi_reduction <maximumf>, %60, %cst_26 [2] : vector<2x8x8xf32> to vector<2x8xf32>
    %62 = vector.shape_cast %61 : vector<2x8xf32> to vector<2x8x1xf32>
    %63 = vector.broadcast %62 : vector<2x8x1xf32> to vector<2x8x8xf32>
    %64 = arith.subf %60, %63 : vector<2x8x8xf32>
    %65 = math.exp %64 : vector<2x8x8xf32>
    %cst_27 = arith.constant dense<0.000000e+00> : vector<2x8xf32>
    %66 = vector.multi_reduction <add>, %65, %cst_27 [2] : vector<2x8x8xf32> to vector<2x8xf32>
    %67 = vector.shape_cast %66 : vector<2x8xf32> to vector<2x8x1xf32>
    %68 = vector.broadcast %67 : vector<2x8x1xf32> to vector<2x8x8xf32>
    %69 = arith.divf %65, %68 : vector<2x8x8xf32>
    "tpu.trace_start"() <{level = 10 : i32, message = "bts,bsd->btd"}> : () -> ()
    %cst_28 = arith.constant dense<0.000000e+00> : vector<2x8x8xf32>
    %70 = tpu.matmul %69, %58, %cst_28 {dimension_numbers = #tpu.dot_dimension_numbers<[2], [1], [1], [2], [0, 0, 0, 1, 1, 2], [0], [0]>} : vector<2x8x8xf32>, vector<2x8x8xf32>, vector<2x8x8xf32> -> vector<2x8x8xf32>
    "tpu.trace_stop"() : () -> ()
    %c0_29 = arith.constant 0 : index
    %c0_30 = arith.constant 0 : index
    %c16 = arith.constant 16 : index
    %71 = vector.load %arg19[%c0_29, %c0_30, %c16] : memref<2x8x32xf32, #tpu.memory_space<vmem>>, vector<2x8x8xf32>
    tpu.vector_store %arg19[%c0_29, %c0_30, %c16], %70 {strides = array<i32>} : memref<2x8x32xf32, #tpu.memory_space<vmem>>, vector<2x8x8xf32>,
    %72 = vector.extract_strided_slice %11 {offsets = [0, 24], sizes = [16, 8], strides = [1, 1]} : vector<16x96xf32> to vector<16x8xf32>
    %73 = vector.shape_cast %72 : vector<16x8xf32> to vector<2x8x8xf32>
    %74 = vector.extract_strided_slice %11 {offsets = [0, 56], sizes = [16, 8], strides = [1, 1]} : vector<16x96xf32> to vector<16x8xf32>
    %75 = vector.shape_cast %74 : vector<16x8xf32> to vector<2x8x8xf32>
    %76 = vector.extract_strided_slice %11 {offsets = [0, 88], sizes = [16, 8], strides = [1, 1]} : vector<16x96xf32> to vector<16x8xf32>
    %77 = vector.shape_cast %76 : vector<16x8xf32> to vector<2x8x8xf32>
    "tpu.trace_start"() <{level = 10 : i32, message = "btd,bsd->bts"}> : () -> ()
    %cst_31 = arith.constant dense<0.000000e+00> : vector<2x8x8xf32>
    %78 = tpu.matmul %73, %75, %cst_31 {dimension_numbers = #tpu.dot_dimension_numbers<[2], [2], [1], [1], [0, 0, 0, 1, 1, 1], [0], [0]>} : vector<2x8x8xf32>, vector<2x8x8xf32>, vector<2x8x8xf32> -> vector<2x8x8xf32>
    "tpu.trace_stop"() : () -> ()
    %79 = arith.addf %78, %14 : vector<2x8x8xf32>
    %cst_32 = arith.constant dense<0xFF800000> : vector<2x8xf32>
    %80 = vector.multi_reduction <maximumf>, %79, %cst_32 [2] : vector<2x8x8xf32> to vector<2x8xf32>
    %81 = vector.shape_cast %80 : vector<2x8xf32> to vector<2x8x1xf32>
    %82 = vector.broadcast %81 : vector<2x8x1xf32> to vector<2x8x8xf32>
    %83 = arith.subf %79, %82 : vector<2x8x8xf32>
    %84 = math.exp %83 : vector<2x8x8xf32>
    %cst_33 = arith.constant dense<0.000000e+00> : vector<2x8xf32>
    %85 = vector.multi_reduction <add>, %84, %cst_33 [2] : vector<2x8x8xf32> to vector<2x8xf32>
    %86 = vector.shape_cast %85 : vector<2x8xf32> to vector<2x8x1xf32>
    %87 = vector.broadcast %86 : vector<2x8x1xf32> to vector<2x8x8xf32>
    %88 = arith.divf %84, %87 : vector<2x8x8xf32>
    "tpu.trace_start"() <{level = 10 : i32, message = "bts,bsd->btd"}> : () -> ()
    %cst_34 = arith.constant dense<0.000000e+00> : vector<2x8x8xf32>
    %89 = tpu.matmul %88, %77, %cst_34 {dimension_numbers = #tpu.dot_dimension_numbers<[2], [1], [1], [2], [0, 0, 0, 1, 1, 2], [0], [0]>} : vector<2x8x8xf32>, vector<2x8x8xf32>, vector<2x8x8xf32> -> vector<2x8x8xf32>
    "tpu.trace_stop"() : () -> ()
    %c0_35 = arith.constant 0 : index
    %c0_36 = arith.constant 0 : index
    %c24 = arith.constant 24 : index
    %90 = vector.load %arg19[%c0_35, %c0_36, %c24] : memref<2x8x32xf32, #tpu.memory_space<vmem>>, vector<2x8x8xf32>
    tpu.vector_store %arg19[%c0_35, %c0_36, %c24], %89 {strides = array<i32>} : memref<2x8x32xf32, #tpu.memory_space<vmem>>, vector<2x8x8xf32>,
    %c0_37 = arith.constant 0 : index
    %c0_38 = arith.constant 0 : index
    %c0_39 = arith.constant 0 : index
    %91 = vector.load %arg19[%c0_37, %c0_38, %c0_39] : memref<2x8x32xf32, #tpu.memory_space<vmem>>, vector<2x8x32xf32>
    %92 = vector.shape_cast %91 : vector<2x8x32xf32> to vector<16x32xf32>
    %c0_40 = arith.constant 0 : index
    %c0_41 = arith.constant 0 : index
    %c0_42 = arith.constant 0 : index
    %93 = vector.load %arg7[%c0_40, %c0_41, %c0_42] : memref<1x32x32xf32, #tpu.memory_space<vmem>>, vector<1x32x32xf32>
    %94 = vector.shape_cast %93 : vector<1x32x32xf32> to vector<32x32xf32>
    %cst_43 = arith.constant dense<0.000000e+00> : vector<16x32xf32>
    %95 = tpu.matmul %92, %94, %cst_43 {dimension_numbers = #tpu.dot_dimension_numbers<[1], [0], [0], [1], [0, 0, 1, 1], [], []>} : vector<16x32xf32>, vector<32x32xf32>, vector<16x32xf32> -> vector<16x32xf32>
    %c0_44 = arith.constant 0 : index
    %c0_45 = arith.constant 0 : index
    %c0_46 = arith.constant 0 : index
    %96 = vector.load %arg8[%c0_44, %c0_45, %c0_46] : memref<1x1x32xf32, #tpu.memory_space<vmem>>, vector<1x1x32xf32>
    %97 = vector.shape_cast %96 : vector<1x1x32xf32> to vector<1x32xf32>
    %98 = vector.broadcast %97 : vector<1x32xf32> to vector<16x32xf32>
    %99 = arith.addf %95, %98 : vector<16x32xf32>
    %cst_47 = arith.constant 0.000000e+00 : f32
    %100 = vector.broadcast %cst_47 : f32 to vector<16x32xf32>
    %101 = arith.maximumf %99, %100 : vector<16x32xf32>
    %102 = arith.addf %4, %101 : vector<16x32xf32>
    %cst_48 = arith.constant 0.000000e+00 : f32
    %103 = vector.broadcast %cst_48 : f32 to vector<16x32xf32>
    %104 = arith.maximumf %102, %103 : vector<16x32xf32>
    %c0_49 = arith.constant 0 : index
    %c0_50 = arith.constant 0 : index
    %c0_51 = arith.constant 0 : index
    %105 = vector.load %arg9[%c0_49, %c0_50, %c0_51] : memref<1x1x32xf32, #tpu.memory_space<vmem>>, vector<1x1x32xf32>
    %106 = vector.shape_cast %105 : vector<1x1x32xf32> to vector<1x32xf32>
    %c0_52 = arith.constant 0 : index
    %c0_53 = arith.constant 0 : index
    %c0_54 = arith.constant 0 : index
    %107 = vector.load %arg10[%c0_52, %c0_53, %c0_54] : memref<1x1x32xf32, #tpu.memory_space<vmem>>, vector<1x1x32xf32>
    %108 = vector.shape_cast %107 : vector<1x1x32xf32> to vector<1x32xf32>
    %cst_55 = arith.constant dense<0.000000e+00> : vector<16xf32>
    %109 = vector.multi_reduction <add>, %104, %cst_55 [1] : vector<16x32xf32> to vector<16xf32>
    %110 = vector.shape_cast %109 : vector<16xf32> to vector<16x1xf32>
    %cst_56 = arith.constant 3.200000e+01 : f32
    %111 = vector.broadcast %cst_56 : f32 to vector<16x1xf32>
    %112 = arith.divf %110, %111 : vector<16x1xf32>
    %113 = vector.broadcast %112 : vector<16x1xf32> to vector<16x32xf32>
    %114 = arith.subf %104, %113 : vector<16x32xf32>
    %115 = arith.mulf %114, %114 : vector<16x32xf32>
    %cst_57 = arith.constant dense<0.000000e+00> : vector<16xf32>
    %116 = vector.multi_reduction <add>, %115, %cst_57 [1] : vector<16x32xf32> to vector<16xf32>
    %117 = vector.shape_cast %116 : vector<16xf32> to vector<16x1xf32>
    %cst_58 = arith.constant 3.200000e+01 : f32
    %118 = vector.broadcast %cst_58 : f32 to vector<16x1xf32>
    %119 = arith.divf %117, %118 : vector<16x1xf32>
    %120 = vector.broadcast %112 : vector<16x1xf32> to vector<16x32xf32>
    %121 = arith.subf %104, %120 : vector<16x32xf32>
    %cst_59 = arith.constant 9.99999974E-6 : f32
    %122 = vector.broadcast %cst_59 : f32 to vector<16x1xf32>
    %123 = arith.addf %119, %122 : vector<16x1xf32>
    %124 = math.rsqrt %123 : vector<16x1xf32>
    %125 = vector.broadcast %124 : vector<16x1xf32> to vector<16x32xf32>
    %126 = arith.mulf %121, %125 : vector<16x32xf32>
    %127 = vector.broadcast %106 : vector<1x32xf32> to vector<16x32xf32>
    %128 = arith.mulf %126, %127 : vector<16x32xf32>
    %129 = vector.broadcast %108 : vector<1x32xf32> to vector<16x32xf32>
    %130 = arith.addf %128, %129 : vector<16x32xf32>
    %c0_60 = arith.constant 0 : index
    %c0_61 = arith.constant 0 : index
    %c0_62 = arith.constant 0 : index
    %131 = vector.load %arg11[%c0_60, %c0_61, %c0_62] : memref<1x32x128xf32, #tpu.memory_space<vmem>>, vector<1x32x128xf32>
    %132 = vector.shape_cast %131 : vector<1x32x128xf32> to vector<32x128xf32>
    %cst_63 = arith.constant dense<0.000000e+00> : vector<16x128xf32>
    %133 = tpu.matmul %130, %132, %cst_63 {dimension_numbers = #tpu.dot_dimension_numbers<[1], [0], [0], [1], [0, 0, 1, 1], [], []>} : vector<16x32xf32>, vector<32x128xf32>, vector<16x128xf32> -> vector<16x128xf32>
    %c0_64 = arith.constant 0 : index
    %c0_65 = arith.constant 0 : index
    %c0_66 = arith.constant 0 : index
    %134 = vector.load %arg12[%c0_64, %c0_65, %c0_66] : memref<1x1x128xf32, #tpu.memory_space<vmem>>, vector<1x1x128xf32>
    %135 = vector.shape_cast %134 : vector<1x1x128xf32> to vector<1x128xf32>
    %136 = vector.broadcast %135 : vector<1x128xf32> to vector<16x128xf32>
    %137 = arith.addf %133, %136 : vector<16x128xf32>
    %cst_67 = arith.constant 0.000000e+00 : f32
    %138 = vector.broadcast %cst_67 : f32 to vector<16x128xf32>
    %139 = arith.maximumf %137, %138 : vector<16x128xf32>
    %c0_68 = arith.constant 0 : index
    %c0_69 = arith.constant 0 : index
    %c0_70 = arith.constant 0 : index
    %140 = vector.load %arg13[%c0_68, %c0_69, %c0_70] : memref<1x128x32xf32, #tpu.memory_space<vmem>>, vector<1x128x32xf32>
    %141 = vector.shape_cast %140 : vector<1x128x32xf32> to vector<128x32xf32>
    %cst_71 = arith.constant dense<0.000000e+00> : vector<16x32xf32>
    %142 = tpu.matmul %139, %141, %cst_71 {dimension_numbers = #tpu.dot_dimension_numbers<[1], [0], [0], [1], [0, 0, 1, 1], [], []>} : vector<16x128xf32>, vector<128x32xf32>, vector<16x32xf32> -> vector<16x32xf32>
    %c0_72 = arith.constant 0 : index
    %c0_73 = arith.constant 0 : index
    %c0_74 = arith.constant 0 : index
    %143 = vector.load %arg14[%c0_72, %c0_73, %c0_74] : memref<1x1x32xf32, #tpu.memory_space<vmem>>, vector<1x1x32xf32>
    %144 = vector.shape_cast %143 : vector<1x1x32xf32> to vector<1x32xf32>
    %145 = vector.broadcast %144 : vector<1x32xf32> to vector<16x32xf32>
    %146 = arith.addf %142, %145 : vector<16x32xf32>
    %147 = arith.addf %130, %146 : vector<16x32xf32>
    %cst_75 = arith.constant 0.000000e+00 : f32
    %148 = vector.broadcast %cst_75 : f32 to vector<16x32xf32>
    %149 = arith.maximumf %147, %148 : vector<16x32xf32>
    %c0_76 = arith.constant 0 : index
    %c0_77 = arith.constant 0 : index
    %c0_78 = arith.constant 0 : index
    %150 = vector.load %arg15[%c0_76, %c0_77, %c0_78] : memref<1x1x32xf32, #tpu.memory_space<vmem>>, vector<1x1x32xf32>
    %151 = vector.shape_cast %150 : vector<1x1x32xf32> to vector<1x32xf32>
    %c0_79 = arith.constant 0 : index
    %c0_80 = arith.constant 0 : index
    %c0_81 = arith.constant 0 : index
    %152 = vector.load %arg16[%c0_79, %c0_80, %c0_81] : memref<1x1x32xf32, #tpu.memory_space<vmem>>, vector<1x1x32xf32>
    %153 = vector.shape_cast %152 : vector<1x1x32xf32> to vector<1x32xf32>
    %cst_82 = arith.constant dense<0.000000e+00> : vector<16xf32>
    %154 = vector.multi_reduction <add>, %149, %cst_82 [1] : vector<16x32xf32> to vector<16xf32>
    %155 = vector.shape_cast %154 : vector<16xf32> to vector<16x1xf32>
    %cst_83 = arith.constant 3.200000e+01 : f32
    %156 = vector.broadcast %cst_83 : f32 to vector<16x1xf32>
    %157 = arith.divf %155, %156 : vector<16x1xf32>
    %158 = vector.broadcast %157 : vector<16x1xf32> to vector<16x32xf32>
    %159 = arith.subf %149, %158 : vector<16x32xf32>
    %160 = arith.mulf %159, %159 : vector<16x32xf32>
    %cst_84 = arith.constant dense<0.000000e+00> : vector<16xf32>
    %161 = vector.multi_reduction <add>, %160, %cst_84 [1] : vector<16x32xf32> to vector<16xf32>
    %162 = vector.shape_cast %161 : vector<16xf32> to vector<16x1xf32>
    %cst_85 = arith.constant 3.200000e+01 : f32
    %163 = vector.broadcast %cst_85 : f32 to vector<16x1xf32>
    %164 = arith.divf %162, %163 : vector<16x1xf32>
    %165 = vector.broadcast %157 : vector<16x1xf32> to vector<16x32xf32>
    %166 = arith.subf %149, %165 : vector<16x32xf32>
    %cst_86 = arith.constant 9.99999974E-6 : f32
    %167 = vector.broadcast %cst_86 : f32 to vector<16x1xf32>
    %168 = arith.addf %164, %167 : vector<16x1xf32>
    %169 = math.rsqrt %168 : vector<16x1xf32>
    %170 = vector.broadcast %169 : vector<16x1xf32> to vector<16x32xf32>
    %171 = arith.mulf %166, %170 : vector<16x32xf32>
    %172 = vector.broadcast %151 : vector<1x32xf32> to vector<16x32xf32>
    %173 = arith.mulf %171, %172 : vector<16x32xf32>
    %174 = vector.broadcast %153 : vector<1x32xf32> to vector<16x32xf32>
    %175 = arith.addf %173, %174 : vector<16x32xf32>
    %176 = vector.shape_cast %175 : vector<16x32xf32> to vector<2x8x32xf32>
    %c0_87 = arith.constant 0 : index
    %c0_88 = arith.constant 0 : index
    %c0_89 = arith.constant 0 : index
    %177 = vector.load %arg18[%c0_87, %c0_88, %c0_89] : memref<2x8x32xf32, #tpu.memory_space<vmem>>, vector<2x8x32xf32>
    tpu.vector_store %arg18[%c0_87, %c0_88, %c0_89], %176 {strides = array<i32>} : memref<2x8x32xf32, #tpu.memory_space<vmem>>, vector<2x8x32xf32>,
    %c1_i32 = arith.constant 1 : i32
    %178 = arith.cmpi eq, %arg1, %c1_i32 : i32
    %179 = arith.extui %178 : i1 to i32
    %c0_i32_90 = arith.constant 0 : i32
    %180 = arith.cmpi ne, %179, %c0_i32_90 : i32
    scf.if %180 {
      %181 = vector.shape_cast %175 : vector<16x32xf32> to vector<2x8x32xf32>
      %c0_91 = arith.constant 0 : index
      %c0_92 = arith.constant 0 : index
      %c0_93 = arith.constant 0 : index
      %182 = vector.load %arg4[%c0_91, %c0_92, %c0_93] : memref<2x8x1xf32, #tpu.memory_space<vmem>>, vector<2x8x1xf32>
      %183 = vector.broadcast %182 : vector<2x8x1xf32> to vector<2x8x32xf32>
      %184 = arith.mulf %181, %183 : vector<2x8x32xf32>
      %c0_94 = arith.constant 0 : index
      %c0_95 = arith.constant 0 : index
      %c0_96 = arith.constant 0 : index
      %185 = vector.load %arg17[%c0_94, %c0_95, %c0_96] : memref<2x8x32xf32, #tpu.memory_space<vmem>>, vector<2x8x32xf32>
      tpu.vector_store %arg17[%c0_94, %c0_95, %c0_96], %184 {strides = array<i32>} : memref<2x8x32xf32, #tpu.memory_space<vmem>>, vector<2x8x32xf32>,
    } else {
    }
    return
  }
  func.func @transform_0(%arg0: i32, %arg1: i32) -> (i32, i32, i32) {
    %c0_i32 = arith.constant 0 : i32
    %c0_i32_0 = arith.constant 0 : i32
    %c0_i32_1 = arith.constant 0 : i32
    return %arg0, %c0_i32, %c0_i32_0 : i32, i32, i32
  }
  func.func @transform_1(%arg0: i32, %arg1: i32) -> (i32, i32, i32) {
    %c0_i32 = arith.constant 0 : i32
    %c0_i32_0 = arith.constant 0 : i32
    %c0_i32_1 = arith.constant 0 : i32
    return %arg0, %c0_i32, %c0_i32_0 : i32, i32, i32
  }
  func.func @transform_2(%arg0: i32, %arg1: i32) -> (i32, i32, i32) {
    %c0_i32 = arith.constant 0 : i32
    %c0_i32_0 = arith.constant 0 : i32
    %c0_i32_1 = arith.constant 0 : i32
    return %arg0, %c0_i32, %c0_i32_0 : i32, i32, i32
  }
  func.func @transform_3(%arg0: i32, %arg1: i32) -> (i32, i32, i32) {
    %c0_i32 = arith.constant 0 : i32
    %c0_i32_0 = arith.constant 0 : i32
    %c0_i32_1 = arith.constant 0 : i32
    return %arg1, %c0_i32, %c0_i32_0 : i32, i32, i32
  }
  func.func @transform_4(%arg0: i32, %arg1: i32) -> (i32, i32, i32) {
    %c0_i32 = arith.constant 0 : i32
    %c0_i32_0 = arith.constant 0 : i32
    %c0_i32_1 = arith.constant 0 : i32
    return %arg1, %c0_i32, %c0_i32_0 : i32, i32, i32
  }
  func.func @transform_5(%arg0: i32, %arg1: i32) -> (i32, i32, i32) {
    %c0_i32 = arith.constant 0 : i32
    %c0_i32_0 = arith.constant 0 : i32
    %c0_i32_1 = arith.constant 0 : i32
    return %arg1, %c0_i32, %c0_i32_0 : i32, i32, i32
  }
  func.func @transform_6(%arg0: i32, %arg1: i32) -> (i32, i32, i32) {
    %c0_i32 = arith.constant 0 : i32
    %c0_i32_0 = arith.constant 0 : i32
    %c0_i32_1 = arith.constant 0 : i32
    return %arg1, %c0_i32, %c0_i32_0 : i32, i32, i32
  }
  func.func @transform_7(%arg0: i32, %arg1: i32) -> (i32, i32, i32) {
    %c0_i32 = arith.constant 0 : i32
    %c0_i32_0 = arith.constant 0 : i32
    %c0_i32_1 = arith.constant 0 : i32
    return %arg1, %c0_i32, %c0_i32_0 : i32, i32, i32
  }
  func.func @transform_8(%arg0: i32, %arg1: i32) -> (i32, i32, i32) {
    %c0_i32 = arith.constant 0 : i32
    %c0_i32_0 = arith.constant 0 : i32
    %c0_i32_1 = arith.constant 0 : i32
    return %arg1, %c0_i32, %c0_i32_0 : i32, i32, i32
  }
  func.func @transform_9(%arg0: i32, %arg1: i32) -> (i32, i32, i32) {
    %c0_i32 = arith.constant 0 : i32
    %c0_i32_0 = arith.constant 0 : i32
    %c0_i32_1 = arith.constant 0 : i32
    return %arg1, %c0_i32, %c0_i32_0 : i32, i32, i32
  }
  func.func @transform_10(%arg0: i32, %arg1: i32) -> (i32, i32, i32) {
    %c0_i32 = arith.constant 0 : i32
    %c0_i32_0 = arith.constant 0 : i32
    %c0_i32_1 = arith.constant 0 : i32
    return %arg1, %c0_i32, %c0_i32_0 : i32, i32, i32
  }
  func.func @transform_11(%arg0: i32, %arg1: i32) -> (i32, i32, i32) {
    %c0_i32 = arith.constant 0 : i32
    %c0_i32_0 = arith.constant 0 : i32
    %c0_i32_1 = arith.constant 0 : i32
    return %arg1, %c0_i32, %c0_i32_0 : i32, i32, i32
  }
  func.func @transform_12(%arg0: i32, %arg1: i32) -> (i32, i32, i32) {
    %c0_i32 = arith.constant 0 : i32
    %c0_i32_0 = arith.constant 0 : i32
    %c0_i32_1 = arith.constant 0 : i32
    return %arg1, %c0_i32, %c0_i32_0 : i32, i32, i32
  }
  func.func @transform_13(%arg0: i32, %arg1: i32) -> (i32, i32, i32) {
    %c0_i32 = arith.constant 0 : i32
    %c0_i32_0 = arith.constant 0 : i32
    %c0_i32_1 = arith.constant 0 : i32
    return %arg1, %c0_i32, %c0_i32_0 : i32, i32, i32
  }
  func.func @transform_14(%arg0: i32, %arg1: i32) -> (i32, i32, i32) {
    %c0_i32 = arith.constant 0 : i32
    %c0_i32_0 = arith.constant 0 : i32
    %c0_i32_1 = arith.constant 0 : i32
    return %arg1, %c0_i32, %c0_i32_0 : i32, i32, i32
  }
  func.func @transform_15(%arg0: i32, %arg1: i32) -> (i32, i32, i32) {
    %c0_i32 = arith.constant 0 : i32
    %c0_i32_0 = arith.constant 0 : i32
    %c0_i32_1 = arith.constant 0 : i32
    return %arg0, %c0_i32, %c0_i32_0 : i32, i32, i32
  }
}

</mosaic_0001>

<llo_original>
// kernel: tpu_custom_call.1
$region0: #{tpu_custom_call.1}
  #allocation0 [shape = 'u32[]', space=smem, size = 0x4, offset = 0x4, fixed_abs, tag = 'smem constant byte address 0x4 - core index']
  #allocation1 [shape = 'u32[144,128]{1,0:T(1,128)}', space=vmem, size = 0x12000, scoped, tag = 'internal scratch']
  #allocation2 [shape = 'f32[2,8,32]{2,1,0:T(8,128)}', space=vmem, size = 0x2000, scoped, tag = 'scratch operand']
  #allocation3 [shape = 'f32[2,8,32]{2,1,0:T(8,128)}', space=vmem, size = 0x2000, scoped, tag = 'scratch operand']
  %s0 = inlined_call_operand.vmem [shape: f32[2,8,32], index: 0, kind: input, shape index: {}]
  %s1 = inlined_call_operand.vmem [shape: f32[2,1,8], index: 1, kind: input, shape index: {}]
  %s2 = inlined_call_operand.vmem [shape: f32[2,8,1], index: 2, kind: input, shape index: {}]
  %s3 = inlined_call_operand.vmem [shape: f32[2,32,96], index: 3, kind: input, shape index: {}]
  %s4 = inlined_call_operand.vmem [shape: f32[2,1,96], index: 4, kind: input, shape index: {}]
  %s5 = inlined_call_operand.vmem [shape: f32[2,32,32], index: 5, kind: input, shape index: {}]
  %s6 = inlined_call_operand.vmem [shape: f32[2,1,32], index: 6, kind: input, shape index: {}]
  %s7 = inlined_call_operand.vmem [shape: f32[2,1,32], index: 7, kind: input, shape index: {}]
  %s8 = inlined_call_operand.vmem [shape: f32[2,1,32], index: 8, kind: input, shape index: {}]
  %s9 = inlined_call_operand.vmem [shape: f32[2,32,128], index: 9, kind: input, shape index: {}]
  %s10 = inlined_call_operand.vmem [shape: f32[2,1,128], index: 10, kind: input, shape index: {}]
  %s11 = inlined_call_operand.vmem [shape: f32[2,128,32], index: 11, kind: input, shape index: {}]
  %s12 = inlined_call_operand.vmem [shape: f32[2,1,32], index: 12, kind: input, shape index: {}]
  %s13 = inlined_call_operand.vmem [shape: f32[2,1,32], index: 13, kind: input, shape index: {}]
  %s14 = inlined_call_operand.vmem [shape: f32[2,1,32], index: 14, kind: input, shape index: {}]
  %s15 = inlined_call_operand.hbm [shape: f32[2,8,32], index: 15, kind: output, shape index: {}]
  %s16 = sld [smem:[#allocation0]]
  $region101: #{tpu_custom_call.1} parent=0
    _
  %s18 = ssub.s32 1, %s16
  %s19 = scalar_select 0, %s18, %s16
  $region1: #{tpu_custom_call.1} parent=0
    #allocation4 [shape = 'u8[8192]{0}', space=vmem, size = 0x2000, scoped, tag = 'output window, operand 0, single buffered']
    #allocation5 [shape = 's32[2]{0}', space=sflag, size = 0x8, scoped, tag = 'scoped memory for tpu_custom_call.1']
    %20 = vsyncpa [#allocation5], 0
    loop: start=0, step=1, limit=4
    $region2: #{tpu_custom_call.1} parent=1 // loop_pre_header
      _
    $region3: #{tpu_custom_call.1} parent=1 // loop_header
      %s22 = sphi 0, %s26
      %p23 = scmp.ge.s32.totalorder %s22, 4
      %s29 = sphi 0, %s41
      %s30 = sphi 0, %s37
      %s31 = sphi 0, %s29
      %s32 = sphi 0, %s30
      %s33 = sphi 0, %s31
      %s34 = sphi 0, %s32
      %s44 = sphi 0, %s46
      %s47 = sphi 0, %s44
      %s48 = sphi 0, %s47
      %s64 = sphi 0, %s48
      %s70 = sphi 0, %s72
      %s73 = sphi 0, %s70
      %s74 = sphi 0, %s73
      %s90 = sphi 0, %s74
      %s96 = sphi 0, %s98
      %s99 = sphi 0, %s96
      %s100 = sphi 0, %s99
      %s116 = sphi 0, %s100
      %s122 = sphi 0, %s124
      %s125 = sphi 0, %s122
      %s126 = sphi 0, %s125
      %s142 = sphi 0, %s126
      %s148 = sphi 0, %s150
      %s151 = sphi 0, %s148
      %s152 = sphi 0, %s151
      %s168 = sphi 0, %s152
      %s174 = sphi 0, %s176
      %s177 = sphi 0, %s174
      %s178 = sphi 0, %s177
      %s194 = sphi 0, %s178
      %s200 = sphi 0, %s202
      %s203 = sphi 0, %s200
      %s204 = sphi 0, %s203
      %s220 = sphi 0, %s204
      %s226 = sphi 0, %s228
      %s229 = sphi 0, %s226
      %s230 = sphi 0, %s229
      %s246 = sphi 0, %s230
      %s252 = sphi 0, %s254
      %s255 = sphi 0, %s252
      %s256 = sphi 0, %s255
      %s272 = sphi 0, %s256
      %s278 = sphi 0, %s280
      %s281 = sphi 0, %s278
      %s282 = sphi 0, %s281
      %s298 = sphi 0, %s282
      %s304 = sphi 0, %s306
      %s307 = sphi 0, %s304
      %s308 = sphi 0, %s307
      %s324 = sphi 0, %s308
      %s330 = sphi 0, %s332
      %s333 = sphi 0, %s330
      %s334 = sphi 0, %s333
      %s350 = sphi 0, %s334
      %s356 = sphi 0, %s358
      %s359 = sphi 0, %s356
      %s360 = sphi 0, %s359
      %s376 = sphi 0, %s360
      %s382 = sphi 0, %s384
      %s385 = sphi 0, %s382
      %s386 = sphi 0, %s385
      %s402 = sphi 0, %s386
      %s408 = sphi 0, %s410
      %s411 = sphi 0, %s408
      %s412 = sphi 0, %s411
      %s428 = sphi 0, %s412
      %s434 = sphi 0, %s436
      %s437 = sphi 0, %s434
      %s438 = sphi 0, %s437
      %s454 = sphi 0, %s438
    $region4: #{tpu_custom_call.1} parent=1 // loop_header_branch
      %25 = sbr.rel (%p23) target = $region8
    $region5: #{tpu_custom_call.1} parent=1 // loop_body
      %s27 = ssub.s32 %s22, 1
      %s28 = ssub.s32 %s22, 2
      %s35 = sadd.s32 1, %s30
      %p36 = scmp.ge.s32.totalorder %s35, 2
      %s37 = scalar_select %p36, 0, %s35
      %s38 = sadd.s32 1, %s29
      %s39 = scalar_select %p36, %s38, %s29
      %p40 = scmp.ge.s32.totalorder %s39, 1
      %s41 = scalar_select %p40, 0, %s39
      %s42 = ssub.s32 %s29, %s41
      %p43 = scmp.eq.s32.totalorder %s42, 0
      %s45 = sadd.s32 %s44, 1
      %s46 = scalar_select %p43, %s44, %s45
      %p49 = pneg %p43
      %p50 = scmp.eq.s32.totalorder %s22, 1
      %p51 = por %p49, %p50
      %p52 = scmp.ne.s32.totalorder %s44, %s47
      %p53 = scmp.eq.s32.totalorder %s22, 0
      %p54 = por %p52, %p53
      %p55 = scmp.ne.s32.totalorder %s44, %s47
      %p56 = scmp.eq.s32.totalorder %s27, 1
      %p57 = por %p55, %p56
      %p58 = scmp.ne.s32.totalorder %s47, %s48
      %p59 = scmp.eq.s32.totalorder %s27, 0
      %p60 = por %p58, %p59
      %p61 = scmp.ne.s32.totalorder %s47, %s48
      %p62 = scmp.eq.s32.totalorder %s28, 1
      %p63 = por %p61, %p62
      %p65 = scmp.ne.s32.totalorder %s48, %s64
      %p66 = scmp.eq.s32.totalorder %s28, 0
      %p67 = por %p65, %p66
      %s68 = ssub.s32 %s29, %s41
      %p69 = scmp.eq.s32.totalorder %s68, 0
      %s71 = sadd.s32 %s70, 1
      %s72 = scalar_select %p69, %s70, %s71
      %p75 = pneg %p69
      %p76 = scmp.eq.s32.totalorder %s22, 1
      %p77 = por %p75, %p76
      %p78 = scmp.ne.s32.totalorder %s70, %s73
      %p79 = scmp.eq.s32.totalorder %s22, 0
      %p80 = por %p78, %p79
      %p81 = scmp.ne.s32.totalorder %s70, %s73
      %p82 = scmp.eq.s32.totalorder %s27, 1
      %p83 = por %p81, %p82
      %p84 = scmp.ne.s32.totalorder %s73, %s74
      %p85 = scmp.eq.s32.totalorder %s27, 0
      %p86 = por %p84, %p85
      %p87 = scmp.ne.s32.totalorder %s73, %s74
      %p88 = scmp.eq.s32.totalorder %s28, 1
      %p89 = por %p87, %p88
      %p91 = scmp.ne.s32.totalorder %s74, %s90
      %p92 = scmp.eq.s32.totalorder %s28, 0
      %p93 = por %p91, %p92
      %s94 = ssub.s32 %s29, %s41
      %p95 = scmp.eq.s32.totalorder %s94, 0
      %s97 = sadd.s32 %s96, 1
      %s98 = scalar_select %p95, %s96, %s97
      %p101 = pneg %p95
      %p102 = scmp.eq.s32.totalorder %s22, 1
      %p103 = por %p101, %p102
      %p104 = scmp.ne.s32.totalorder %s96, %s99
      %p105 = scmp.eq.s32.totalorder %s22, 0
      %p106 = por %p104, %p105
      %p107 = scmp.ne.s32.totalorder %s96, %s99
      %p108 = scmp.eq.s32.totalorder %s27, 1
      %p109 = por %p107, %p108
      %p110 = scmp.ne.s32.totalorder %s99, %s100
      %p111 = scmp.eq.s32.totalorder %s27, 0
      %p112 = por %p110, %p111
      %p113 = scmp.ne.s32.totalorder %s99, %s100
      %p114 = scmp.eq.s32.totalorder %s28, 1
      %p115 = por %p113, %p114
      %p117 = scmp.ne.s32.totalorder %s100, %s116
      %p118 = scmp.eq.s32.totalorder %s28, 0
      %p119 = por %p117, %p118
      %s120 = ssub.s32 %s30, %s37
      %p121 = scmp.eq.s32.totalorder %s120, 0
      %s123 = sadd.s32 %s122, 1
      %s124 = scalar_select %p121, %s122, %s123
      %p127 = pneg %p121
      %p128 = scmp.eq.s32.totalorder %s22, 1
      %p129 = por %p127, %p128
      %p130 = scmp.ne.s32.totalorder %s122, %s125
      %p131 = scmp.eq.s32.totalorder %s22, 0
      %p132 = por %p130, %p131
      %p133 = scmp.ne.s32.totalorder %s122, %s125
      %p134 = scmp.eq.s32.totalorder %s27, 1
      %p135 = por %p133, %p134
      %p136 = scmp.ne.s32.totalorder %s125, %s126
      %p137 = scmp.eq.s32.totalorder %s27, 0
      %p138 = por %p136, %p137
      %p139 = scmp.ne.s32.totalorder %s125, %s126
      %p140 = scmp.eq.s32.totalorder %s28, 1
      %p141 = por %p139, %p140
      %p143 = scmp.ne.s32.totalorder %s126, %s142
      %p144 = scmp.eq.s32.totalorder %s28, 0
      %p145 = por %p143, %p144
      %s146 = ssub.s32 %s30, %s37
      %p147 = scmp.eq.s32.totalorder %s146, 0
      %s149 = sadd.s32 %s148, 1
      %s150 = scalar_select %p147, %s148, %s149
      %p153 = pneg %p147
      %p154 = scmp.eq.s32.totalorder %s22, 1
      %p155 = por %p153, %p154
      %p156 = scmp.ne.s32.totalorder %s148, %s151
      %p157 = scmp.eq.s32.totalorder %s22, 0
      %p158 = por %p156, %p157
      %p159 = scmp.ne.s32.totalorder %s148, %s151
      %p160 = scmp.eq.s32.totalorder %s27, 1
      %p161 = por %p159, %p160
      %p162 = scmp.ne.s32.totalorder %s151, %s152
      %p163 = scmp.eq.s32.totalorder %s27, 0
      %p164 = por %p162, %p163
      %p165 = scmp.ne.s32.totalorder %s151, %s152
      %p166 = scmp.eq.s32.totalorder %s28, 1
      %p167 = por %p165, %p166
      %p169 = scmp.ne.s32.totalorder %s152, %s168
      %p170 = scmp.eq.s32.totalorder %s28, 0
      %p171 = por %p169, %p170
      %s172 = ssub.s32 %s30, %s37
      %p173 = scmp.eq.s32.totalorder %s172, 0
      %s175 = sadd.s32 %s174, 1
      %s176 = scalar_select %p173, %s174, %s175
      %p179 = pneg %p173
      %p180 = scmp.eq.s32.totalorder %s22, 1
      %p181 = por %p179, %p180
      %p182 = scmp.ne.s32.totalorder %s174, %s177
      %p183 = scmp.eq.s32.totalorder %s22, 0
      %p184 = por %p182, %p183
      %p185 = scmp.ne.s32.totalorder %s174, %s177
      %p186 = scmp.eq.s32.totalorder %s27, 1
      %p187 = por %p185, %p186
      %p188 = scmp.ne.s32.totalorder %s177, %s178
      %p189 = scmp.eq.s32.totalorder %s27, 0
      %p190 = por %p188, %p189
      %p191 = scmp.ne.s32.totalorder %s177, %s178
      %p192 = scmp.eq.s32.totalorder %s28, 1
      %p193 = por %p191, %p192
      %p195 = scmp.ne.s32.totalorder %s178, %s194
      %p196 = scmp.eq.s32.totalorder %s28, 0
      %p197 = por %p195, %p196
      %s198 = ssub.s32 %s30, %s37
      %p199 = scmp.eq.s32.totalorder %s198, 0
      %s201 = sadd.s32 %s200, 1
      %s202 = scalar_select %p199, %s200, %s201
      %p205 = pneg %p199
      %p206 = scmp.eq.s32.totalorder %s22, 1
      %p207 = por %p205, %p206
      %p208 = scmp.ne.s32.totalorder %s200, %s203
      %p209 = scmp.eq.s32.totalorder %s22, 0
      %p210 = por %p208, %p209
      %p211 = scmp.ne.s32.totalorder %s200, %s203
      %p212 = scmp.eq.s32.totalorder %s27, 1
      %p213 = por %p211, %p212
      %p214 = scmp.ne.s32.totalorder %s203, %s204
      %p215 = scmp.eq.s32.totalorder %s27, 0
      %p216 = por %p214, %p215
      %p217 = scmp.ne.s32.totalorder %s203, %s204
      %p218 = scmp.eq.s32.totalorder %s28, 1
      %p219 = por %p217, %p218
      %p221 = scmp.ne.s32.totalorder %s204, %s220
      %p222 = scmp.eq.s32.totalorder %s28, 0
      %p223 = por %p221, %p222
      %s224 = ssub.s32 %s30, %s37
      %p225 = scmp.eq.s32.totalorder %s224, 0
      %s227 = sadd.s32 %s226, 1
      %s228 = scalar_select %p225, %s226, %s227
      %p231 = pneg %p225
      %p232 = scmp.eq.s32.totalorder %s22, 1
      %p233 = por %p231, %p232
      %p234 = scmp.ne.s32.totalorder %s226, %s229
      %p235 = scmp.eq.s32.totalorder %s22, 0
      %p236 = por %p234, %p235
      %p237 = scmp.ne.s32.totalorder %s226, %s229
      %p238 = scmp.eq.s32.totalorder %s27, 1
      %p239 = por %p237, %p238
      %p240 = scmp.ne.s32.totalorder %s229, %s230
      %p241 = scmp.eq.s32.totalorder %s27, 0
      %p242 = por %p240, %p241
      %p243 = scmp.ne.s32.totalorder %s229, %s230
      %p244 = scmp.eq.s32.totalorder %s28, 1
      %p245 = por %p243, %p244
      %p247 = scmp.ne.s32.totalorder %s230, %s246
      %p248 = scmp.eq.s32.totalorder %s28, 0
      %p249 = por %p247, %p248
      %s250 = ssub.s32 %s30, %s37
      %p251 = scmp.eq.s32.totalorder %s250, 0
      %s253 = sadd.s32 %s252, 1
      %s254 = scalar_select %p251, %s252, %s253
      %p257 = pneg %p251
      %p258 = scmp.eq.s32.totalorder %s22, 1
      %p259 = por %p257, %p258
      %p260 = scmp.ne.s32.totalorder %s252, %s255
      %p261 = scmp.eq.s32.totalorder %s22, 0
      %p262 = por %p260, %p261
      %p263 = scmp.ne.s32.totalorder %s252, %s255
      %p264 = scmp.eq.s32.totalorder %s27, 1
      %p265 = por %p263, %p264
      %p266 = scmp.ne.s32.totalorder %s255, %s256
      %p267 = scmp.eq.s32.totalorder %s27, 0
      %p268 = por %p266, %p267
      %p269 = scmp.ne.s32.totalorder %s255, %s256
      %p270 = scmp.eq.s32.totalorder %s28, 1
      %p271 = por %p269, %p270
      %p273 = scmp.ne.s32.totalorder %s256, %s272
      %p274 = scmp.eq.s32.totalorder %s28, 0
      %p275 = por %p273, %p274
      %s276 = ssub.s32 %s30, %s37
      %p277 = scmp.eq.s32.totalorder %s276, 0
      %s279 = sadd.s32 %s278, 1
      %s280 = scalar_select %p277, %s278, %s279
      %p283 = pneg %p277
      %p284 = scmp.eq.s32.totalorder %s22, 1
      %p285 = por %p283, %p284
      %p286 = scmp.ne.s32.totalorder %s278, %s281
      %p287 = scmp.eq.s32.totalorder %s22, 0
      %p288 = por %p286, %p287
      %p289 = scmp.ne.s32.totalorder %s278, %s281
      %p290 = scmp.eq.s32.totalorder %s27, 1
      %p291 = por %p289, %p290
      %p292 = scmp.ne.s32.totalorder %s281, %s282
      %p293 = scmp.eq.s32.totalorder %s27, 0
      %p294 = por %p292, %p293
      %p295 = scmp.ne.s32.totalorder %s281, %s282
      %p296 = scmp.eq.s32.totalorder %s28, 1
      %p297 = por %p295, %p296
      %p299 = scmp.ne.s32.totalorder %s282, %s298
      %p300 = scmp.eq.s32.totalorder %s28, 0
      %p301 = por %p299, %p300
      %s302 = ssub.s32 %s30, %s37
      %p303 = scmp.eq.s32.totalorder %s302, 0
      %s305 = sadd.s32 %s304, 1
      %s306 = scalar_select %p303, %s304, %s305
      %p309 = pneg %p303
      %p310 = scmp.eq.s32.totalorder %s22, 1
      %p311 = por %p309, %p310
      %p312 = scmp.ne.s32.totalorder %s304, %s307
      %p313 = scmp.eq.s32.totalorder %s22, 0
      %p314 = por %p312, %p313
      %p315 = scmp.ne.s32.totalorder %s304, %s307
      %p316 = scmp.eq.s32.totalorder %s27, 1
      %p317 = por %p315, %p316
      %p318 = scmp.ne.s32.totalorder %s307, %s308
      %p319 = scmp.eq.s32.totalorder %s27, 0
      %p320 = por %p318, %p319
      %p321 = scmp.ne.s32.totalorder %s307, %s308
      %p322 = scmp.eq.s32.totalorder %s28, 1
      %p323 = por %p321, %p322
      %p325 = scmp.ne.s32.totalorder %s308, %s324
      %p326 = scmp.eq.s32.totalorder %s28, 0
      %p327 = por %p325, %p326
      %s328 = ssub.s32 %s30, %s37
      %p329 = scmp.eq.s32.totalorder %s328, 0
      %s331 = sadd.s32 %s330, 1
      %s332 = scalar_select %p329, %s330, %s331
      %p335 = pneg %p329
      %p336 = scmp.eq.s32.totalorder %s22, 1
      %p337 = por %p335, %p336
      %p338 = scmp.ne.s32.totalorder %s330, %s333
      %p339 = scmp.eq.s32.totalorder %s22, 0
      %p340 = por %p338, %p339
      %p341 = scmp.ne.s32.totalorder %s330, %s333
      %p342 = scmp.eq.s32.totalorder %s27, 1
      %p343 = por %p341, %p342
      %p344 = scmp.ne.s32.totalorder %s333, %s334
      %p345 = scmp.eq.s32.totalorder %s27, 0
      %p346 = por %p344, %p345
      %p347 = scmp.ne.s32.totalorder %s333, %s334
      %p348 = scmp.eq.s32.totalorder %s28, 1
      %p349 = por %p347, %p348
      %p351 = scmp.ne.s32.totalorder %s334, %s350
      %p352 = scmp.eq.s32.totalorder %s28, 0
      %p353 = por %p351, %p352
      %s354 = ssub.s32 %s30, %s37
      %p355 = scmp.eq.s32.totalorder %s354, 0
      %s357 = sadd.s32 %s356, 1
      %s358 = scalar_select %p355, %s356, %s357
      %p361 = pneg %p355
      %p362 = scmp.eq.s32.totalorder %s22, 1
      %p363 = por %p361, %p362
      %p364 = scmp.ne.s32.totalorder %s356, %s359
      %p365 = scmp.eq.s32.totalorder %s22, 0
      %p366 = por %p364, %p365
      %p367 = scmp.ne.s32.totalorder %s356, %s359
      %p368 = scmp.eq.s32.totalorder %s27, 1
      %p369 = por %p367, %p368
      %p370 = scmp.ne.s32.totalorder %s359, %s360
      %p371 = scmp.eq.s32.totalorder %s27, 0
      %p372 = por %p370, %p371
      %p373 = scmp.ne.s32.totalorder %s359, %s360
      %p374 = scmp.eq.s32.totalorder %s28, 1
      %p375 = por %p373, %p374
      %p377 = scmp.ne.s32.totalorder %s360, %s376
      %p378 = scmp.eq.s32.totalorder %s28, 0
      %p379 = por %p377, %p378
      %s380 = ssub.s32 %s30, %s37
      %p381 = scmp.eq.s32.totalorder %s380, 0
      %s383 = sadd.s32 %s382, 1
      %s384 = scalar_select %p381, %s382, %s383
      %p387 = pneg %p381
      %p388 = scmp.eq.s32.totalorder %s22, 1
      %p389 = por %p387, %p388
      %p390 = scmp.ne.s32.totalorder %s382, %s385
      %p391 = scmp.eq.s32.totalorder %s22, 0
      %p392 = por %p390, %p391
      %p393 = scmp.ne.s32.totalorder %s382, %s385
      %p394 = scmp.eq.s32.totalorder %s27, 1
      %p395 = por %p393, %p394
      %p396 = scmp.ne.s32.totalorder %s385, %s386
      %p397 = scmp.eq.s32.totalorder %s27, 0
      %p398 = por %p396, %p397
      %p399 = scmp.ne.s32.totalorder %s385, %s386
      %p400 = scmp.eq.s32.totalorder %s28, 1
      %p401 = por %p399, %p400
      %p403 = scmp.ne.s32.totalorder %s386, %s402
      %p404 = scmp.eq.s32.totalorder %s28, 0
      %p405 = por %p403, %p404
      %s406 = ssub.s32 %s30, %s37
      %p407 = scmp.eq.s32.totalorder %s406, 0
      %s409 = sadd.s32 %s408, 1
      %s410 = scalar_select %p407, %s408, %s409
      %p413 = pneg %p407
      %p414 = scmp.eq.s32.totalorder %s22, 1
      %p415 = por %p413, %p414
      %p416 = scmp.ne.s32.totalorder %s408, %s411
      %p417 = scmp.eq.s32.totalorder %s22, 0
      %p418 = por %p416, %p417
      %p419 = scmp.ne.s32.totalorder %s408, %s411
      %p420 = scmp.eq.s32.totalorder %s27, 1
      %p421 = por %p419, %p420
      %p422 = scmp.ne.s32.totalorder %s411, %s412
      %p423 = scmp.eq.s32.totalorder %s27, 0
      %p424 = por %p422, %p423
      %p425 = scmp.ne.s32.totalorder %s411, %s412
      %p426 = scmp.eq.s32.totalorder %s28, 1
      %p427 = por %p425, %p426
      %p429 = scmp.ne.s32.totalorder %s412, %s428
      %p430 = scmp.eq.s32.totalorder %s28, 0
      %p431 = por %p429, %p430
      %s432 = ssub.s32 %s29, %s41
      %p433 = scmp.eq.s32.totalorder %s432, 0
      %s435 = sadd.s32 %s434, 1
      %s436 = scalar_select %p433, %s434, %s435
      %p439 = pneg %p433
      %p440 = scmp.eq.s32.totalorder %s22, 1
      %p441 = por %p439, %p440
      %p442 = scmp.ne.s32.totalorder %s434, %s437
      %p443 = scmp.eq.s32.totalorder %s22, 0
      %p444 = por %p442, %p443
      %p445 = scmp.ne.s32.totalorder %s434, %s437
      %p446 = scmp.eq.s32.totalorder %s27, 1
      %p447 = por %p445, %p446
      %p448 = scmp.ne.s32.totalorder %s437, %s438
      %p449 = scmp.eq.s32.totalorder %s27, 0
      %p450 = por %p448, %p449
      %p451 = scmp.ne.s32.totalorder %s437, %s438
      %p452 = scmp.eq.s32.totalorder %s28, 1
      %p453 = por %p451, %p452
      %p455 = scmp.ne.s32.totalorder %s438, %s454
      %p456 = scmp.eq.s32.totalorder %s28, 0
      %p457 = por %p455, %p456
      %p458 = scmp.le.s32.totalorder 1, %s22
      %p459 = scmp.lt.s32.totalorder %s22, 3
      %p460 = pnand %p458, %p459
      %p461 = pneg %p460
      // Predicated region
      $region9: #{tpu_custom_call.1} parent=5 // pred_check
        _
      $region10: #{tpu_custom_call.1} parent=5 // pred_check_branch
        %463 = sbr.rel (%p460) target = $region12
      $region11: #{tpu_custom_call.1} parent=5 // pred_region
        %s464 = ssub.s32 %s22, 1
        // Predicated region
        $region13: #{tpu_custom_call.1} parent=11 // pred_check
          %p465 = pneg %p60
        $region14: #{tpu_custom_call.1} parent=11 // pred_check_branch
          %467 = sbr.rel (%p465) target = $region16
        $region15: #{tpu_custom_call.1} parent=11 // pred_region
          %s468 = smul.u32 2, %s31
          %p469 = scmp.lt.s32.totalorder %s468, 1
          %s470 = scalar_select %p469, %s468, 1
          %s471 = smul.addr %s470, 8
          %s472 = scalar_lea.vmem %s0, %s471
          %s473 = smul.u32 2, %s31
        $region16: #{tpu_custom_call.1} parent=11 // pred_fallthru
          _
        // Predicated region
        $region17: #{tpu_custom_call.1} parent=11 // pred_check
          %p474 = pneg %p86
        $region18: #{tpu_custom_call.1} parent=11 // pred_check_branch
          %476 = sbr.rel (%p474) target = $region20
        $region19: #{tpu_custom_call.1} parent=11 // pred_region
          %s477 = smul.u32 2, %s31
          %p478 = scmp.lt.s32.totalorder %s477, 1
          %s479 = scalar_select %p478, %s477, 1
          %s480 = scalar_lea.vmem %s1, %s479
          %s481 = smul.u32 2, %s31
        $region20: #{tpu_custom_call.1} parent=11 // pred_fallthru
          _
        // Predicated region
        $region21: #{tpu_custom_call.1} parent=11 // pred_check
          %p482 = pneg %p112
        $region22: #{tpu_custom_call.1} parent=11 // pred_check_branch
          %484 = sbr.rel (%p482) target = $region24
        $region23: #{tpu_custom_call.1} parent=11 // pred_region
          %s485 = smul.u32 2, %s31
          %p486 = scmp.lt.s32.totalorder %s485, 1
          %s487 = scalar_select %p486, %s485, 1
          %s488 = smul.addr %s487, 8
          %s489 = scalar_lea.vmem %s2, %s488
          %s490 = smul.u32 2, %s31
        $region24: #{tpu_custom_call.1} parent=11 // pred_fallthru
          _
      $region12: #{tpu_custom_call.1} parent=5 // pred_fallthru
        _
      %p491 = scmp.lt.s32.totalorder %s22, 2
      // Predicated region
      $region25: #{tpu_custom_call.1} parent=5 // pred_check
        %p492 = pneg %p491
      $region26: #{tpu_custom_call.1} parent=5 // pred_check_branch
        %494 = sbr.rel (%p492) target = $region28
      $region27: #{tpu_custom_call.1} parent=5 // pred_region
        // Predicated region
        $region29: #{tpu_custom_call.1} parent=27 // pred_check
          %p495 = pneg %p132
        $region30: #{tpu_custom_call.1} parent=27 // pred_check_branch
          %497 = sbr.rel (%p495) target = $region32
        $region31: #{tpu_custom_call.1} parent=27 // pred_region
          %p498 = scmp.lt.s32.totalorder %s30, 1
          %s499 = scalar_select %p498, %s30, 1
          %s500 = smul.addr %s499, 4
          %s501 = smul.addr %s500, 8
          %s502 = scalar_lea.vmem %s3, %s501
        $region32: #{tpu_custom_call.1} parent=27 // pred_fallthru
          _
        // Predicated region
        $region33: #{tpu_custom_call.1} parent=27 // pred_check
          %p503 = pneg %p158
        $region34: #{tpu_custom_call.1} parent=27 // pred_check_branch
          %505 = sbr.rel (%p503) target = $region36
        $region35: #{tpu_custom_call.1} parent=27 // pred_region
          %p506 = scmp.lt.s32.totalorder %s30, 1
          %s507 = scalar_select %p506, %s30, 1
          %s508 = scalar_lea.vmem %s4, %s507
        $region36: #{tpu_custom_call.1} parent=27 // pred_fallthru
          _
        // Predicated region
        $region37: #{tpu_custom_call.1} parent=27 // pred_check
          %p509 = pneg %p184
        $region38: #{tpu_custom_call.1} parent=27 // pred_check_branch
          %511 = sbr.rel (%p509) target = $region40
        $region39: #{tpu_custom_call.1} parent=27 // pred_region
          %p512 = scmp.lt.s32.totalorder %s30, 1
          %s513 = scalar_select %p512, %s30, 1
          %s514 = smul.addr %s513, 4
          %s515 = smul.addr %s514, 8
          %s516 = scalar_lea.vmem %s5, %s515
        $region40: #{tpu_custom_call.1} parent=27 // pred_fallthru
          _
        // Predicated region
        $region41: #{tpu_custom_call.1} parent=27 // pred_check
          %p517 = pneg %p210
        $region42: #{tpu_custom_call.1} parent=27 // pred_check_branch
          %519 = sbr.rel (%p517) target = $region44
        $region43: #{tpu_custom_call.1} parent=27 // pred_region
          %p520 = scmp.lt.s32.totalorder %s30, 1
          %s521 = scalar_select %p520, %s30, 1
          %s522 = scalar_lea.vmem %s6, %s521
        $region44: #{tpu_custom_call.1} parent=27 // pred_fallthru
          _
        // Predicated region
        $region45: #{tpu_custom_call.1} parent=27 // pred_check
          %p523 = pneg %p236
        $region46: #{tpu_custom_call.1} parent=27 // pred_check_branch
          %525 = sbr.rel (%p523) target = $region48
        $region47: #{tpu_custom_call.1} parent=27 // pred_region
          %p526 = scmp.lt.s32.totalorder %s30, 1
          %s527 = scalar_select %p526, %s30, 1
          %s528 = scalar_lea.vmem %s7, %s527
        $region48: #{tpu_custom_call.1} parent=27 // pred_fallthru
          _
        // Predicated region
        $region49: #{tpu_custom_call.1} parent=27 // pred_check
          %p529 = pneg %p262
        $region50: #{tpu_custom_call.1} parent=27 // pred_check_branch
          %531 = sbr.rel (%p529) target = $region52
        $region51: #{tpu_custom_call.1} parent=27 // pred_region
          %p532 = scmp.lt.s32.totalorder %s30, 1
          %s533 = scalar_select %p532, %s30, 1
          %s534 = scalar_lea.vmem %s8, %s533
        $region52: #{tpu_custom_call.1} parent=27 // pred_fallthru
          _
        // Predicated region
        $region53: #{tpu_custom_call.1} parent=27 // pred_check
          %p535 = pneg %p288
        $region54: #{tpu_custom_call.1} parent=27 // pred_check_branch
          %537 = sbr.rel (%p535) target = $region56
        $region55: #{tpu_custom_call.1} parent=27 // pred_region
          %p538 = scmp.lt.s32.totalorder %s30, 1
          %s539 = scalar_select %p538, %s30, 1
          %s540 = smul.addr %s539, 4
          %s541 = smul.addr %s540, 8
          %s542 = scalar_lea.vmem %s9, %s541
        $region56: #{tpu_custom_call.1} parent=27 // pred_fallthru
          _
        // Predicated region
        $region57: #{tpu_custom_call.1} parent=27 // pred_check
          %p543 = pneg %p314
        $region58: #{tpu_custom_call.1} parent=27 // pred_check_branch
          %545 = sbr.rel (%p543) target = $region60
        $region59: #{tpu_custom_call.1} parent=27 // pred_region
          %p546 = scmp.lt.s32.totalorder %s30, 1
          %s547 = scalar_select %p546, %s30, 1
          %s548 = scalar_lea.vmem %s10, %s547
        $region60: #{tpu_custom_call.1} parent=27 // pred_fallthru
          _
        // Predicated region
        $region61: #{tpu_custom_call.1} parent=27 // pred_check
          %p549 = pneg %p340
        $region62: #{tpu_custom_call.1} parent=27 // pred_check_branch
          %551 = sbr.rel (%p549) target = $region64
        $region63: #{tpu_custom_call.1} parent=27 // pred_region
          %p552 = scmp.lt.s32.totalorder %s30, 1
          %s553 = scalar_select %p552, %s30, 1
          %s554 = smul.addr %s553, 16
          %s555 = smul.addr %s554, 8
          %s556 = scalar_lea.vmem %s11, %s555
        $region64: #{tpu_custom_call.1} parent=27 // pred_fallthru
          _
        // Predicated region
        $region65: #{tpu_custom_call.1} parent=27 // pred_check
          %p557 = pneg %p366
        $region66: #{tpu_custom_call.1} parent=27 // pred_check_branch
          %559 = sbr.rel (%p557) target = $region68
        $region67: #{tpu_custom_call.1} parent=27 // pred_region
          %p560 = scmp.lt.s32.totalorder %s30, 1
          %s561 = scalar_select %p560, %s30, 1
          %s562 = scalar_lea.vmem %s12, %s561
        $region68: #{tpu_custom_call.1} parent=27 // pred_fallthru
          _
        // Predicated region
        $region69: #{tpu_custom_call.1} parent=27 // pred_check
          %p563 = pneg %p392
        $region70: #{tpu_custom_call.1} parent=27 // pred_check_branch
          %565 = sbr.rel (%p563) target = $region72
        $region71: #{tpu_custom_call.1} parent=27 // pred_region
          %p566 = scmp.lt.s32.totalorder %s30, 1
          %s567 = scalar_select %p566, %s30, 1
          %s568 = scalar_lea.vmem %s13, %s567
        $region72: #{tpu_custom_call.1} parent=27 // pred_fallthru
          _
        // Predicated region
        $region73: #{tpu_custom_call.1} parent=27 // pred_check
          %p569 = pneg %p418
        $region74: #{tpu_custom_call.1} parent=27 // pred_check_branch
          %571 = sbr.rel (%p569) target = $region76
        $region75: #{tpu_custom_call.1} parent=27 // pred_region
          %p572 = scmp.lt.s32.totalorder %s30, 1
          %s573 = scalar_select %p572, %s30, 1
          %s574 = scalar_lea.vmem %s14, %s573
        $region76: #{tpu_custom_call.1} parent=27 // pred_fallthru
          _
      $region28: #{tpu_custom_call.1} parent=5 // pred_fallthru
        _
      %p575 = scmp.le.s32.totalorder 1, %s22
      %p576 = scmp.lt.s32.totalorder %s22, 3
      %p577 = pnand %p575, %p576
      %p578 = pneg %p577
      // Predicated region
      $region77: #{tpu_custom_call.1} parent=5 // pred_check
        _
      $region78: #{tpu_custom_call.1} parent=5 // pred_check_branch
        %580 = sbr.rel (%p577) target = $region80
      $region79: #{tpu_custom_call.1} parent=5 // pred_region
        %s581 = ssub.s32 %s22, 1
        %s582 = smul.u32 2, %s31
        %p583 = scmp.lt.s32.totalorder %s582, 1
        %s584 = scalar_select %p583, %s582, 1
        %s585 = smul.addr %s584, 8
        %s586 = scalar_lea.vmem %s0, %s585
        %p587 = pneg %p60
        %p588 = pneg %p57
        %s589 = smul.u32 2, %s31
        %p590 = scmp.lt.s32.totalorder %s589, 1
        %s591 = scalar_select %p590, %s589, 1
        %s592 = scalar_lea.vmem %s1, %s591
        %p593 = pneg %p86
        %p594 = pneg %p83
        %s595 = smul.u32 2, %s31
        %p596 = scmp.lt.s32.totalorder %s595, 1
        %s597 = scalar_select %p596, %s595, 1
        %s598 = smul.addr %s597, 8
        %s599 = scalar_lea.vmem %s2, %s598
        %p600 = pneg %p112
        %p601 = pneg %p109
        %p602 = scmp.lt.s32.totalorder %s32, 1
        %s603 = scalar_select %p602, %s32, 1
        %s604 = smul.addr %s603, 4
        %s605 = smul.addr %s604, 8
        %s606 = scalar_lea.vmem %s3, %s605
        %p607 = pneg %p138
        %p608 = pneg %p135
        %p609 = scmp.lt.s32.totalorder %s32, 1
        %s610 = scalar_select %p609, %s32, 1
        %s611 = scalar_lea.vmem %s4, %s610
        %p612 = pneg %p164
        %p613 = pneg %p161
        %p614 = scmp.lt.s32.totalorder %s32, 1
        %s615 = scalar_select %p614, %s32, 1
        %s616 = smul.addr %s615, 4
        %s617 = smul.addr %s616, 8
        %s618 = scalar_lea.vmem %s5, %s617
        %p619 = pneg %p190
        %p620 = pneg %p187
        %p621 = scmp.lt.s32.totalorder %s32, 1
        %s622 = scalar_select %p621, %s32, 1
        %s623 = scalar_lea.vmem %s6, %s622
        %p624 = pneg %p216
        %p625 = pneg %p213
        %p626 = scmp.lt.s32.totalorder %s32, 1
        %s627 = scalar_select %p626, %s32, 1
        %s628 = scalar_lea.vmem %s7, %s627
        %p629 = pneg %p242
        %p630 = pneg %p239
        %p631 = scmp.lt.s32.totalorder %s32, 1
        %s632 = scalar_select %p631, %s32, 1
        %s633 = scalar_lea.vmem %s8, %s632
        %p634 = pneg %p268
        %p635 = pneg %p265
        %p636 = scmp.lt.s32.totalorder %s32, 1
        %s637 = scalar_select %p636, %s32, 1
        %s638 = smul.addr %s637, 4
        %s639 = smul.addr %s638, 8
        %s640 = scalar_lea.vmem %s9, %s639
        %p641 = pneg %p294
        %p642 = pneg %p291
        %p643 = scmp.lt.s32.totalorder %s32, 1
        %s644 = scalar_select %p643, %s32, 1
        %s645 = scalar_lea.vmem %s10, %s644
        %p646 = pneg %p320
        %p647 = pneg %p317
        %p648 = scmp.lt.s32.totalorder %s32, 1
        %s649 = scalar_select %p648, %s32, 1
        %s650 = smul.addr %s649, 16
        %s651 = smul.addr %s650, 8
        %s652 = scalar_lea.vmem %s11, %s651
        %p653 = pneg %p346
        %p654 = pneg %p343
        %p655 = scmp.lt.s32.totalorder %s32, 1
        %s656 = scalar_select %p655, %s32, 1
        %s657 = scalar_lea.vmem %s12, %s656
        %p658 = pneg %p372
        %p659 = pneg %p369
        %p660 = scmp.lt.s32.totalorder %s32, 1
        %s661 = scalar_select %p660, %s32, 1
        %s662 = scalar_lea.vmem %s13, %s661
        %p663 = pneg %p398
        %p664 = pneg %p395
        %p665 = scmp.lt.s32.totalorder %s32, 1
        %s666 = scalar_select %p665, %s32, 1
        %s667 = scalar_lea.vmem %s14, %s666
        %p668 = pneg %p424
        %p669 = pneg %p421
        %p670 = pneg %p450
        %p671 = pneg %p447
        %s672 = smul.u32 2, %s31
        %p673 = scmp.lt.s32.totalorder %s672, 1
        %s674 = scalar_select %p673, %s672, 1
        %s675 = smul.addr %s674, 8
        %s676 = scalar_lea.vmem %s0, %s675
        %s677 = smul.u32 2, %s31
        %s678 = smul.u32 2, %s31
        %p679 = scmp.lt.s32.totalorder %s678, 1
        %s680 = scalar_select %p679, %s678, 1
        %s681 = scalar_lea.vmem %s1, %s680
        %s682 = smul.u32 2, %s31
        %s683 = smul.u32 2, %s31
        %p684 = scmp.lt.s32.totalorder %s683, 1
        %s685 = scalar_select %p684, %s683, 1
        %s686 = smul.addr %s685, 8
        %s687 = scalar_lea.vmem %s2, %s686
        %s688 = smul.u32 2, %s31
        %p689 = scmp.lt.s32.totalorder %s32, 1
        %s690 = scalar_select %p689, %s32, 1
        %s691 = smul.addr %s690, 4
        %s692 = smul.addr %s691, 8
        %s693 = scalar_lea.vmem %s3, %s692
        %p694 = scmp.lt.s32.totalorder %s32, 1
        %s695 = scalar_select %p694, %s32, 1
        %s696 = scalar_lea.vmem %s4, %s695
        %p697 = scmp.lt.s32.totalorder %s32, 1
        %s698 = scalar_select %p697, %s32, 1
        %s699 = smul.addr %s698, 4
        %s700 = smul.addr %s699, 8
        %s701 = scalar_lea.vmem %s5, %s700
        %p702 = scmp.lt.s32.totalorder %s32, 1
        %s703 = scalar_select %p702, %s32, 1
        %s704 = scalar_lea.vmem %s6, %s703
        %p705 = scmp.lt.s32.totalorder %s32, 1
        %s706 = scalar_select %p705, %s32, 1
        %s707 = scalar_lea.vmem %s7, %s706
        %p708 = scmp.lt.s32.totalorder %s32, 1
        %s709 = scalar_select %p708, %s32, 1
        %s710 = scalar_lea.vmem %s8, %s709
        %p711 = scmp.lt.s32.totalorder %s32, 1
        %s712 = scalar_select %p711, %s32, 1
        %s713 = smul.addr %s712, 4
        %s714 = smul.addr %s713, 8
        %s715 = scalar_lea.vmem %s9, %s714
        %p716 = scmp.lt.s32.totalorder %s32, 1
        %s717 = scalar_select %p716, %s32, 1
        %s718 = scalar_lea.vmem %s10, %s717
        %p719 = scmp.lt.s32.totalorder %s32, 1
        %s720 = scalar_select %p719, %s32, 1
        %s721 = smul.addr %s720, 16
        %s722 = smul.addr %s721, 8
        %s723 = scalar_lea.vmem %s11, %s722
        %p724 = scmp.lt.s32.totalorder %s32, 1
        %s725 = scalar_select %p724, %s32, 1
        %s726 = scalar_lea.vmem %s12, %s725
        %p727 = scmp.lt.s32.totalorder %s32, 1
        %s728 = scalar_select %p727, %s32, 1
        %s729 = scalar_lea.vmem %s13, %s728
        %p730 = scmp.lt.s32.totalorder %s32, 1
        %s731 = scalar_select %p730, %s32, 1
        %s732 = scalar_lea.vmem %s14, %s731
        %s733 = smul.u32 2, %s31
        %p734 = scmp.eq.s32.totalorder %s32, 0
        // Predicated region
        $region81: #{tpu_custom_call.1} parent=79 // pred_check
          %p735 = pneg %p734
        $region82: #{tpu_custom_call.1} parent=79 // pred_check_branch
          %737 = sbr.rel (%p735) target = $region84
        $region83: #{tpu_custom_call.1} parent=79 // pred_region
          %v738 = vld [vmem:[%s676] sm:$0xff]
          %v739 = vld [vmem:[%s676 + $0x8] sm:$0xff]
          %vm740 = vcmask 261120
          %741 = vst.msk [vmem:[#allocation2] sm:$0xff] %vm740, %v738
          %742 = vst.msk [vmem:[#allocation2 + $0x8] sm:$0xff] %vm740, %v739
        $region84: #{tpu_custom_call.1} parent=79 // pred_fallthru
          _
        %v743 = vld [vmem:[#allocation2] sm:$0xff]
        %v744 = vld [vmem:[#allocation2 + $0x8] sm:$0xff]
        %v745 = vld [vmem:[%s693] sm:$0xff]
        %v746 = vld [vmem:[%s693 + $0x8] sm:$0xff]
        %v747 = vld [vmem:[%s693 + $0x10] sm:$0xff]
        %v748 = vld [vmem:[%s693 + $0x18] sm:$0xff]
        %v749 = vld [vmem:[%s696] sm:$0x1]
        %v751 = vlaneseq
        %v752 = vshrl.u32 %v751, 7
        %v753 = vsub.s32 0, %v752
        %v754 = vrot.slane %v749, %v753
        %vm756 = vcmask 261120
        %v758 = vsel %vm756, %v743, 0
        %v761 = vsel %vm756, %v744, 0
        %763 = vmatprep.subr.mxu0 0.0
        %764 = vmatpush1.msra.mxu0 %v745
        %765 = vmatprep.subr.mxu0 0.0
        %766 = vmatpush1.msra.mxu0 %v746
        %767 = vmatprep.subr.mxu0 0.0
        %768 = vmatpush1.msra.mxu0 %v747
        %769 = vmatprep.subr.mxu0 0.0
        %770 = vmatpush1.msra.mxu0 %v748
        %771 = vmatprep.subr.mxu0 0.0
        %772 = vmatpush1.msra.mxu0 0.0
        %773 = vmatprep.subr.mxu0 0.0
        %774 = vmatpush1.msra.mxu0 0.0
        %775 = vmatprep.subr.mxu0 0.0
        %776 = vmatpush1.msra.mxu0 0.0
        %777 = vmatprep.subr.mxu0 0.0
        %778 = vmatpush1.msra.mxu0 0.0
        %779 = vmatprep.subr.mxu0 0.0
        %780 = vmatpush1.msra.mxu0 0.0
        %781 = vmatprep.subr.mxu0 0.0
        %782 = vmatpush1.msra.mxu0 0.0
        %783 = vmatprep.subr.mxu0 0.0
        %784 = vmatpush1.msra.mxu0 0.0
        %785 = vmatprep.subr.mxu0 0.0
        %786 = vmatpush1.msra.mxu0 0.0
        %787 = vmatprep.subr.mxu0 0.0
        %788 = vmatpush1.msra.mxu0 0.0
        %789 = vmatprep.subr.mxu0 0.0
        %790 = vmatpush1.msra.mxu0 0.0
        %791 = vmatprep.subr.mxu0 0.0
        %792 = vmatpush1.msra.mxu0 0.0
        %793 = vmatprep.subr.mxu0 0.0
        %794 = vmatpush1.msra.mxu0 0.0
        %795 = vmatprep.subr.mxu0 0.0
        %796 = vmatpush1.msra.mxu0 0.0
        %797 = vmatprep.subr.mxu0 0.0
        %798 = vmatpush1.msra.mxu0 0.0
        %799 = vmatprep.subr.mxu0 0.0
        %800 = vmatpush1.msra.mxu0 0.0
        %801 = vmatprep.subr.mxu0 0.0
        %802 = vmatpush1.msra.mxu0 0.0
        %803 = vmatprep.subr.mxu0 0.0
        %804 = vmatpush1.msra.mxu0 0.0
        %805 = vmatprep.subr.mxu0 0.0
        %806 = vmatpush1.msra.mxu0 0.0
        %807 = vmatprep.subr.mxu0 0.0
        %808 = vmatpush1.msra.mxu0 0.0
        %809 = vmatprep.subr.mxu0 0.0
        %810 = vmatpush1.msra.mxu0 0.0
        %811 = vmatprep.subr.mxu0 0.0
        %812 = vmatpush1.msra.mxu0 0.0
        %813 = vmatprep.subr.mxu0 0.0
        %814 = vmatpush1.msra.mxu0 0.0
        %815 = vmatprep.subr.mxu0 0.0
        %816 = vmatpush1.msra.mxu0 0.0
        %817 = vmatprep.subr.mxu0 0.0
        %818 = vmatpush1.msra.mxu0 0.0
        %819 = vmatprep.subr.mxu0 0.0
        %820 = vmatpush1.msra.mxu0 0.0
        %821 = vmatprep.subr.mxu0 0.0
        %822 = vmatpush1.msra.mxu0 0.0
        %823 = vmatprep.subr.mxu0 0.0
        %824 = vmatpush1.msra.mxu0 0.0
        %825 = vmatprep.subr.mxu0 0.0
        %826 = vmatpush1.msra.mxu0 0.0
        %827 = vmatprep.mubr.f32.mxu0 0.0
        %828 = vmatmul.mubr.f32.gmra.mrb[0].mxu0 %v758
        %v829 = vpop.f32.mrb[0].mxu0
        %v830 = vadd.f32 %v754, %v829
        %v831 = vpop.f32.mrb[0].mxu0
        %832 = vmatprep.mubr.f32.mxu0 0.0
        %833 = vmatmul.mubr.f32.gmra.mrb[0].mxu0 %v761
        %v834 = vpop.f32.mrb[0].mxu0
        %v835 = vadd.f32 %v754, %v834
        %v836 = vpop.f32.mrb[0].mxu0
        %837 = vdwg.mxu0
        %v838 = vld [vmem:[%s681] sm:$0x1]
        %v839 = vld [vmem:[%s681 + $0x1] sm:$0x1]
        %v842 = vlaneseq
        %v843 = vshrl.u32 %v842, 7
        %v844 = vsub.s32 0, %v843
        %v845 = vrot.slane %v838, %v844
        %v846 = vlaneseq
        %v847 = vshrl.u32 %v846, 7
        %v848 = vsub.s32 0, %v847
        %v849 = vrot.slane %v839, %v848
        %853 = vrot.lane.b32.xlu0 %v830, 96
        %v854 = vpop.permute.xlu0 %853
        %vm855 = vcmask 64512
        %v856 = vsel %vm855, %v830, 0
        %v858 = vsel %vm855, %v854, 0
        %860 = vmatprep.subr.mxu0 0.0
        %861 = vmatpush1.xpose.msra.mxu0 %v858
        %862 = vmatprep.subr.mxu0 0.0
        %863 = vmatpush1.xpose.msra.mxu0 0.0
        %864 = vmatprep.subr.mxu0 0.0
        %865 = vmatpush1.xpose.msra.mxu0 0.0
        %866 = vmatprep.subr.mxu0 0.0
        %867 = vmatpush1.xpose.msra.mxu0 0.0
        %868 = vmatprep.subr.mxu0 0.0
        %869 = vmatpush1.xpose.msra.mxu0 0.0
        %870 = vmatprep.subr.mxu0 0.0
        %871 = vmatpush1.xpose.msra.mxu0 0.0
        %872 = vmatprep.subr.mxu0 0.0
        %873 = vmatpush1.xpose.msra.mxu0 0.0
        %874 = vmatprep.subr.mxu0 0.0
        %875 = vmatpush1.xpose.msra.mxu0 0.0
        %876 = vmatprep.subr.mxu0 0.0
        %877 = vmatpush1.xpose.msra.mxu0 0.0
        %878 = vmatprep.subr.mxu0 0.0
        %879 = vmatpush1.xpose.msra.mxu0 0.0
        %880 = vmatprep.subr.mxu0 0.0
        %881 = vmatpush1.xpose.msra.mxu0 0.0
        %882 = vmatprep.subr.mxu0 0.0
        %883 = vmatpush1.xpose.msra.mxu0 0.0
        %884 = vmatprep.subr.mxu0 0.0
        %885 = vmatpush1.xpose.msra.mxu0 0.0
        %886 = vmatprep.subr.mxu0 0.0
        %887 = vmatpush1.xpose.msra.mxu0 0.0
        %888 = vmatprep.subr.mxu0 0.0
        %889 = vmatpush1.xpose.msra.mxu0 0.0
        %890 = vmatprep.subr.mxu0 0.0
        %891 = vmatpush1.xpose.msra.mxu0 0.0
        %892 = vmatprep.subr.mxu0 0.0
        %893 = vmatpush1.xpose.msra.mxu0 0.0
        %894 = vmatprep.subr.mxu0 0.0
        %895 = vmatpush1.xpose.msra.mxu0 0.0
        %896 = vmatprep.subr.mxu0 0.0
        %897 = vmatpush1.xpose.msra.mxu0 0.0
        %898 = vmatprep.subr.mxu0 0.0
        %899 = vmatpush1.xpose.msra.mxu0 0.0
        %900 = vmatprep.subr.mxu0 0.0
        %901 = vmatpush1.xpose.msra.mxu0 0.0
        %902 = vmatprep.subr.mxu0 0.0
        %903 = vmatpush1.xpose.msra.mxu0 0.0
        %904 = vmatprep.subr.mxu0 0.0
        %905 = vmatpush1.xpose.msra.mxu0 0.0
        %906 = vmatprep.subr.mxu0 0.0
        %907 = vmatpush1.xpose.msra.mxu0 0.0
        %908 = vmatprep.subr.mxu0 0.0
        %909 = vmatpush1.xpose.msra.mxu0 0.0
        %910 = vmatprep.subr.mxu0 0.0
        %911 = vmatpush1.xpose.msra.mxu0 0.0
        %912 = vmatprep.subr.mxu0 0.0
        %913 = vmatpush1.xpose.msra.mxu0 0.0
        %914 = vmatprep.subr.mxu0 0.0
        %915 = vmatpush1.xpose.msra.mxu0 0.0
        %916 = vmatprep.subr.mxu0 0.0
        %917 = vmatpush1.xpose.msra.mxu0 0.0
        %918 = vmatprep.subr.mxu0 0.0
        %919 = vmatpush1.xpose.msra.mxu0 0.0
        %920 = vmatprep.subr.mxu0 0.0
        %921 = vmatpush1.xpose.msra.mxu0 0.0
        %922 = vmatprep.subr.mxu0 0.0
        %923 = vmatpush1.xpose.msra.mxu0 0.0
        %924 = vmatprep.mubr.f32.mxu0 0.0
        %925 = vmatmul.mubr.f32.gmra.mrb[0].mxu0 %v856
        %v926 = vpop.f32.mrb[0].mxu0
        %v927 = vadd.f32 %v845, %v926
        %v928 = vpop.f32.mrb[0].mxu0
        %929 = vdwg.mxu0
        %931 = vrot.lane.b32.xlu0 %v835, 96
        %v932 = vpop.permute.xlu0 %931
        %v933 = vsel %vm855, %v835, 0
        %v935 = vsel %vm855, %v932, 0
        %937 = vmatprep.subr.mxu0 0.0
        %938 = vmatpush1.xpose.msra.mxu0 %v935
        %939 = vmatprep.subr.mxu0 0.0
        %940 = vmatpush1.xpose.msra.mxu0 0.0
        %941 = vmatprep.subr.mxu0 0.0
        %942 = vmatpush1.xpose.msra.mxu0 0.0
        %943 = vmatprep.subr.mxu0 0.0
        %944 = vmatpush1.xpose.msra.mxu0 0.0
        %945 = vmatprep.subr.mxu0 0.0
        %946 = vmatpush1.xpose.msra.mxu0 0.0
        %947 = vmatprep.subr.mxu0 0.0
        %948 = vmatpush1.xpose.msra.mxu0 0.0
        %949 = vmatprep.subr.mxu0 0.0
        %950 = vmatpush1.xpose.msra.mxu0 0.0
        %951 = vmatprep.subr.mxu0 0.0
        %952 = vmatpush1.xpose.msra.mxu0 0.0
        %953 = vmatprep.subr.mxu0 0.0
        %954 = vmatpush1.xpose.msra.mxu0 0.0
        %955 = vmatprep.subr.mxu0 0.0
        %956 = vmatpush1.xpose.msra.mxu0 0.0
        %957 = vmatprep.subr.mxu0 0.0
        %958 = vmatpush1.xpose.msra.mxu0 0.0
        %959 = vmatprep.subr.mxu0 0.0
        %960 = vmatpush1.xpose.msra.mxu0 0.0
        %961 = vmatprep.subr.mxu0 0.0
        %962 = vmatpush1.xpose.msra.mxu0 0.0
        %963 = vmatprep.subr.mxu0 0.0
        %964 = vmatpush1.xpose.msra.mxu0 0.0
        %965 = vmatprep.subr.mxu0 0.0
        %966 = vmatpush1.xpose.msra.mxu0 0.0
        %967 = vmatprep.subr.mxu0 0.0
        %968 = vmatpush1.xpose.msra.mxu0 0.0
        %969 = vmatprep.subr.mxu0 0.0
        %970 = vmatpush1.xpose.msra.mxu0 0.0
        %971 = vmatprep.subr.mxu0 0.0
        %972 = vmatpush1.xpose.msra.mxu0 0.0
        %973 = vmatprep.subr.mxu0 0.0
        %974 = vmatpush1.xpose.msra.mxu0 0.0
        %975 = vmatprep.subr.mxu0 0.0
        %976 = vmatpush1.xpose.msra.mxu0 0.0
        %977 = vmatprep.subr.mxu0 0.0
        %978 = vmatpush1.xpose.msra.mxu0 0.0
        %979 = vmatprep.subr.mxu0 0.0
        %980 = vmatpush1.xpose.msra.mxu0 0.0
        %981 = vmatprep.subr.mxu0 0.0
        %982 = vmatpush1.xpose.msra.mxu0 0.0
        %983 = vmatprep.subr.mxu0 0.0
        %984 = vmatpush1.xpose.msra.mxu0 0.0
        %985 = vmatprep.subr.mxu0 0.0
        %986 = vmatpush1.xpose.msra.mxu0 0.0
        %987 = vmatprep.subr.mxu0 0.0
        %988 = vmatpush1.xpose.msra.mxu0 0.0
        %989 = vmatprep.subr.mxu0 0.0
        %990 = vmatpush1.xpose.msra.mxu0 0.0
        %991 = vmatprep.subr.mxu0 0.0
        %992 = vmatpush1.xpose.msra.mxu0 0.0
        %993 = vmatprep.subr.mxu0 0.0
        %994 = vmatpush1.xpose.msra.mxu0 0.0
        %995 = vmatprep.subr.mxu0 0.0
        %996 = vmatpush1.xpose.msra.mxu0 0.0
        %997 = vmatprep.subr.mxu0 0.0
        %998 = vmatpush1.xpose.msra.mxu0 0.0
        %999 = vmatprep.subr.mxu0 0.0
        %1000 = vmatpush1.xpose.msra.mxu0 0.0
        %1001 = vmatprep.mubr.f32.mxu0 0.0
        %1002 = vmatmul.mubr.f32.gmra.mrb[0].mxu0 %v933
        %v1003 = vpop.f32.mrb[0].mxu0
        %v1004 = vadd.f32 %v849, %v1003
        %v1005 = vpop.f32.mrb[0].mxu0
        %1006 = vdwg.mxu0
        %v1007 = vsel %vm855, %v927, -inf
        %1008 = vmax.xlane.f32.xlu0 %v1007
        %v1009 = vpop.xlane.xlu0 %1008
        %v1010 = vsel %vm855, %v1004, -inf
        %1011 = vmax.xlane.f32.xlu0 %v1010
        %v1012 = vpop.xlane.xlu0 %1011
        %v1013 = vsub.f32 %v927, %v1009
        %v1014 = vsub.f32 %v1004, %v1012
        %v1015 = vmul.f32 %v1013, 1.442695
        %v1016 = vpow.pop %v1015
        %v1017 = vmul.f32 %v1014, 1.442695
        %v1018 = vpow.pop %v1017
        %v1019 = vsel %vm855, %v1016, 0.0
        %1020 = vadd.xlane.f32.xlu0 %v1019
        %v1021 = vpop.xlane.xlu0 %1020
        %v1022 = vsel %vm855, %v1018, 0.0
        %1023 = vadd.xlane.f32.xlu0 %v1022
        %v1024 = vpop.xlane.xlu0 %1023
        %v1025 = vrcp.pop %v1021
        %v1026 = vmul.f32 %v1016, %v1025
        %v1027 = vrcp.pop %v1024
        %v1028 = vmul.f32 %v1018, %v1027
        %1029 = vrot.lane.b32.xlu0 %v830, 64
        %v1030 = vpop.permute.xlu0 %1029
        %v1033 = vsel %vm855, %v1026, 0
        %1035 = vmatprep.subr.mxu0 0.0
        %1036 = vmatpush1.msra.mxu0 %v1030
        %1037 = vmatprep.subr.mxu0 0.0
        %1038 = vmatpush1.msra.mxu0 0.0
        %1039 = vmatprep.subr.mxu0 0.0
        %1040 = vmatpush1.msra.mxu0 0.0
        %1041 = vmatprep.subr.mxu0 0.0
        %1042 = vmatpush1.msra.mxu0 0.0
        %1043 = vmatprep.subr.mxu0 0.0
        %1044 = vmatpush1.msra.mxu0 0.0
        %1045 = vmatprep.subr.mxu0 0.0
        %1046 = vmatpush1.msra.mxu0 0.0
        %1047 = vmatprep.subr.mxu0 0.0
        %1048 = vmatpush1.msra.mxu0 0.0
        %1049 = vmatprep.subr.mxu0 0.0
        %1050 = vmatpush1.msra.mxu0 0.0
        %1051 = vmatprep.subr.mxu0 0.0
        %1052 = vmatpush1.msra.mxu0 0.0
        %1053 = vmatprep.subr.mxu0 0.0
        %1054 = vmatpush1.msra.mxu0 0.0
        %1055 = vmatprep.subr.mxu0 0.0
        %1056 = vmatpush1.msra.mxu0 0.0
        %1057 = vmatprep.subr.mxu0 0.0
        %1058 = vmatpush1.msra.mxu0 0.0
        %1059 = vmatprep.subr.mxu0 0.0
        %1060 = vmatpush1.msra.mxu0 0.0
        %1061 = vmatprep.subr.mxu0 0.0
        %1062 = vmatpush1.msra.mxu0 0.0
        %1063 = vmatprep.subr.mxu0 0.0
        %1064 = vmatpush1.msra.mxu0 0.0
        %1065 = vmatprep.subr.mxu0 0.0
        %1066 = vmatpush1.msra.mxu0 0.0
        %1067 = vmatprep.subr.mxu0 0.0
        %1068 = vmatpush1.msra.mxu0 0.0
        %1069 = vmatprep.subr.mxu0 0.0
        %1070 = vmatpush1.msra.mxu0 0.0
        %1071 = vmatprep.subr.mxu0 0.0
        %1072 = vmatpush1.msra.mxu0 0.0
        %1073 = vmatprep.subr.mxu0 0.0
        %1074 = vmatpush1.msra.mxu0 0.0
        %1075 = vmatprep.subr.mxu0 0.0
        %1076 = vmatpush1.msra.mxu0 0.0
        %1077 = vmatprep.subr.mxu0 0.0
        %1078 = vmatpush1.msra.mxu0 0.0
        %1079 = vmatprep.subr.mxu0 0.0
        %1080 = vmatpush1.msra.mxu0 0.0
        %1081 = vmatprep.subr.mxu0 0.0
        %1082 = vmatpush1.msra.mxu0 0.0
        %1083 = vmatprep.subr.mxu0 0.0
        %1084 = vmatpush1.msra.mxu0 0.0
        %1085 = vmatprep.subr.mxu0 0.0
        %1086 = vmatpush1.msra.mxu0 0.0
        %1087 = vmatprep.subr.mxu0 0.0
        %1088 = vmatpush1.msra.mxu0 0.0
        %1089 = vmatprep.subr.mxu0 0.0
        %1090 = vmatpush1.msra.mxu0 0.0
        %1091 = vmatprep.subr.mxu0 0.0
        %1092 = vmatpush1.msra.mxu0 0.0
        %1093 = vmatprep.subr.mxu0 0.0
        %1094 = vmatpush1.msra.mxu0 0.0
        %1095 = vmatprep.subr.mxu0 0.0
        %1096 = vmatpush1.msra.mxu0 0.0
        %1097 = vmatprep.subr.mxu0 0.0
        %1098 = vmatpush1.msra.mxu0 0.0
        %1099 = vmatprep.mubr.f32.mxu0 0.0
        %1100 = vmatmul.mubr.f32.gmra.mrb[0].mxu0 %v1033
        %v1101 = vpop.f32.mrb[0].mxu0
        %v1102 = vadd.f32 0.0, %v1101
        %v1103 = vpop.f32.mrb[0].mxu0
        %1104 = vdwg.mxu0
        %1105 = vrot.lane.b32.xlu0 %v835, 64
        %v1106 = vpop.permute.xlu0 %1105
        %v1109 = vsel %vm855, %v1028, 0
        %1111 = vmatprep.subr.mxu0 0.0
        %1112 = vmatpush1.msra.mxu0 %v1106
        %1113 = vmatprep.subr.mxu0 0.0
        %1114 = vmatpush1.msra.mxu0 0.0
        %1115 = vmatprep.subr.mxu0 0.0
        %1116 = vmatpush1.msra.mxu0 0.0
        %1117 = vmatprep.subr.mxu0 0.0
        %1118 = vmatpush1.msra.mxu0 0.0
        %1119 = vmatprep.subr.mxu0 0.0
        %1120 = vmatpush1.msra.mxu0 0.0
        %1121 = vmatprep.subr.mxu0 0.0
        %1122 = vmatpush1.msra.mxu0 0.0
        %1123 = vmatprep.subr.mxu0 0.0
        %1124 = vmatpush1.msra.mxu0 0.0
        %1125 = vmatprep.subr.mxu0 0.0
        %1126 = vmatpush1.msra.mxu0 0.0
        %1127 = vmatprep.subr.mxu0 0.0
        %1128 = vmatpush1.msra.mxu0 0.0
        %1129 = vmatprep.subr.mxu0 0.0
        %1130 = vmatpush1.msra.mxu0 0.0
        %1131 = vmatprep.subr.mxu0 0.0
        %1132 = vmatpush1.msra.mxu0 0.0
        %1133 = vmatprep.subr.mxu0 0.0
        %1134 = vmatpush1.msra.mxu0 0.0
        %1135 = vmatprep.subr.mxu0 0.0
        %1136 = vmatpush1.msra.mxu0 0.0
        %1137 = vmatprep.subr.mxu0 0.0
        %1138 = vmatpush1.msra.mxu0 0.0
        %1139 = vmatprep.subr.mxu0 0.0
        %1140 = vmatpush1.msra.mxu0 0.0
        %1141 = vmatprep.subr.mxu0 0.0
        %1142 = vmatpush1.msra.mxu0 0.0
        %1143 = vmatprep.subr.mxu0 0.0
        %1144 = vmatpush1.msra.mxu0 0.0
        %1145 = vmatprep.subr.mxu0 0.0
        %1146 = vmatpush1.msra.mxu0 0.0
        %1147 = vmatprep.subr.mxu0 0.0
        %1148 = vmatpush1.msra.mxu0 0.0
        %1149 = vmatprep.subr.mxu0 0.0
        %1150 = vmatpush1.msra.mxu0 0.0
        %1151 = vmatprep.subr.mxu0 0.0
        %1152 = vmatpush1.msra.mxu0 0.0
        %1153 = vmatprep.subr.mxu0 0.0
        %1154 = vmatpush1.msra.mxu0 0.0
        %1155 = vmatprep.subr.mxu0 0.0
        %1156 = vmatpush1.msra.mxu0 0.0
        %1157 = vmatprep.subr.mxu0 0.0
        %1158 = vmatpush1.msra.mxu0 0.0
        %1159 = vmatprep.subr.mxu0 0.0
        %1160 = vmatpush1.msra.mxu0 0.0
        %1161 = vmatprep.subr.mxu0 0.0
        %1162 = vmatpush1.msra.mxu0 0.0
        %1163 = vmatprep.subr.mxu0 0.0
        %1164 = vmatpush1.msra.mxu0 0.0
        %1165 = vmatprep.subr.mxu0 0.0
        %1166 = vmatpush1.msra.mxu0 0.0
        %1167 = vmatprep.subr.mxu0 0.0
        %1168 = vmatpush1.msra.mxu0 0.0
        %1169 = vmatprep.subr.mxu0 0.0
        %1170 = vmatpush1.msra.mxu0 0.0
        %1171 = vmatprep.subr.mxu0 0.0
        %1172 = vmatpush1.msra.mxu0 0.0
        %1173 = vmatprep.subr.mxu0 0.0
        %1174 = vmatpush1.msra.mxu0 0.0
        %1175 = vmatprep.mubr.f32.mxu0 0.0
        %1176 = vmatmul.mubr.f32.gmra.mrb[0].mxu0 %v1109
        %v1177 = vpop.f32.mrb[0].mxu0
        %v1178 = vadd.f32 0.0, %v1177
        %v1179 = vpop.f32.mrb[0].mxu0
        %1180 = vdwg.mxu0
        %1181 = vst.msk [vmem:[#allocation3] sm:$0xff] %vm855, %v1102
        %1182 = vst.msk [vmem:[#allocation3 + $0x8] sm:$0xff] %vm855, %v1178
        %1183 = vrot.lane.b32.xlu0 %v830, 120
        %v1184 = vpop.permute.xlu0 %1183
        %1185 = vrot.lane.b32.xlu0 %v830, 88
        %v1186 = vpop.permute.xlu0 %1185
        %v1187 = vsel %vm855, %v1184, 0
        %v1189 = vsel %vm855, %v1186, 0
        %1191 = vmatprep.subr.mxu0 0.0
        %1192 = vmatpush1.xpose.msra.mxu0 %v1189
        %1193 = vmatprep.subr.mxu0 0.0
        %1194 = vmatpush1.xpose.msra.mxu0 0.0
        %1195 = vmatprep.subr.mxu0 0.0
        %1196 = vmatpush1.xpose.msra.mxu0 0.0
        %1197 = vmatprep.subr.mxu0 0.0
        %1198 = vmatpush1.xpose.msra.mxu0 0.0
        %1199 = vmatprep.subr.mxu0 0.0
        %1200 = vmatpush1.xpose.msra.mxu0 0.0
        %1201 = vmatprep.subr.mxu0 0.0
        %1202 = vmatpush1.xpose.msra.mxu0 0.0
        %1203 = vmatprep.subr.mxu0 0.0
        %1204 = vmatpush1.xpose.msra.mxu0 0.0
        %1205 = vmatprep.subr.mxu0 0.0
        %1206 = vmatpush1.xpose.msra.mxu0 0.0
        %1207 = vmatprep.subr.mxu0 0.0
        %1208 = vmatpush1.xpose.msra.mxu0 0.0
        %1209 = vmatprep.subr.mxu0 0.0
        %1210 = vmatpush1.xpose.msra.mxu0 0.0
        %1211 = vmatprep.subr.mxu0 0.0
        %1212 = vmatpush1.xpose.msra.mxu0 0.0
        %1213 = vmatprep.subr.mxu0 0.0
        %1214 = vmatpush1.xpose.msra.mxu0 0.0
        %1215 = vmatprep.subr.mxu0 0.0
        %1216 = vmatpush1.xpose.msra.mxu0 0.0
        %1217 = vmatprep.subr.mxu0 0.0
        %1218 = vmatpush1.xpose.msra.mxu0 0.0
        %1219 = vmatprep.subr.mxu0 0.0
        %1220 = vmatpush1.xpose.msra.mxu0 0.0
        %1221 = vmatprep.subr.mxu0 0.0
        %1222 = vmatpush1.xpose.msra.mxu0 0.0
        %1223 = vmatprep.subr.mxu0 0.0
        %1224 = vmatpush1.xpose.msra.mxu0 0.0
        %1225 = vmatprep.subr.mxu0 0.0
        %1226 = vmatpush1.xpose.msra.mxu0 0.0
        %1227 = vmatprep.subr.mxu0 0.0
        %1228 = vmatpush1.xpose.msra.mxu0 0.0
        %1229 = vmatprep.subr.mxu0 0.0
        %1230 = vmatpush1.xpose.msra.mxu0 0.0
        %1231 = vmatprep.subr.mxu0 0.0
        %1232 = vmatpush1.xpose.msra.mxu0 0.0
        %1233 = vmatprep.subr.mxu0 0.0
        %1234 = vmatpush1.xpose.msra.mxu0 0.0
        %1235 = vmatprep.subr.mxu0 0.0
        %1236 = vmatpush1.xpose.msra.mxu0 0.0
        %1237 = vmatprep.subr.mxu0 0.0
        %1238 = vmatpush1.xpose.msra.mxu0 0.0
        %1239 = vmatprep.subr.mxu0 0.0
        %1240 = vmatpush1.xpose.msra.mxu0 0.0
        %1241 = vmatprep.subr.mxu0 0.0
        %1242 = vmatpush1.xpose.msra.mxu0 0.0
        %1243 = vmatprep.subr.mxu0 0.0
        %1244 = vmatpush1.xpose.msra.mxu0 0.0
        %1245 = vmatprep.subr.mxu0 0.0
        %1246 = vmatpush1.xpose.msra.mxu0 0.0
        %1247 = vmatprep.subr.mxu0 0.0
        %1248 = vmatpush1.xpose.msra.mxu0 0.0
        %1249 = vmatprep.subr.mxu0 0.0
        %1250 = vmatpush1.xpose.msra.mxu0 0.0
        %1251 = vmatprep.subr.mxu0 0.0
        %1252 = vmatpush1.xpose.msra.mxu0 0.0
        %1253 = vmatprep.subr.mxu0 0.0
        %1254 = vmatpush1.xpose.msra.mxu0 0.0
        %1255 = vmatprep.mubr.f32.mxu0 0.0
        %1256 = vmatmul.mubr.f32.gmra.mrb[0].mxu0 %v1187
        %v1257 = vpop.f32.mrb[0].mxu0
        %v1258 = vadd.f32 %v845, %v1257
        %v1259 = vpop.f32.mrb[0].mxu0
        %1260 = vdwg.mxu0
        %1261 = vrot.lane.b32.xlu0 %v835, 120
        %v1262 = vpop.permute.xlu0 %1261
        %1263 = vrot.lane.b32.xlu0 %v835, 88
        %v1264 = vpop.permute.xlu0 %1263
        %v1265 = vsel %vm855, %v1262, 0
        %v1267 = vsel %vm855, %v1264, 0
        %1269 = vmatprep.subr.mxu0 0.0
        %1270 = vmatpush1.xpose.msra.mxu0 %v1267
        %1271 = vmatprep.subr.mxu0 0.0
        %1272 = vmatpush1.xpose.msra.mxu0 0.0
        %1273 = vmatprep.subr.mxu0 0.0
        %1274 = vmatpush1.xpose.msra.mxu0 0.0
        %1275 = vmatprep.subr.mxu0 0.0
        %1276 = vmatpush1.xpose.msra.mxu0 0.0
        %1277 = vmatprep.subr.mxu0 0.0
        %1278 = vmatpush1.xpose.msra.mxu0 0.0
        %1279 = vmatprep.subr.mxu0 0.0
        %1280 = vmatpush1.xpose.msra.mxu0 0.0
        %1281 = vmatprep.subr.mxu0 0.0
        %1282 = vmatpush1.xpose.msra.mxu0 0.0
        %1283 = vmatprep.subr.mxu0 0.0
        %1284 = vmatpush1.xpose.msra.mxu0 0.0
        %1285 = vmatprep.subr.mxu0 0.0
        %1286 = vmatpush1.xpose.msra.mxu0 0.0
        %1287 = vmatprep.subr.mxu0 0.0
        %1288 = vmatpush1.xpose.msra.mxu0 0.0
        %1289 = vmatprep.subr.mxu0 0.0
        %1290 = vmatpush1.xpose.msra.mxu0 0.0
        %1291 = vmatprep.subr.mxu0 0.0
        %1292 = vmatpush1.xpose.msra.mxu0 0.0
        %1293 = vmatprep.subr.mxu0 0.0
        %1294 = vmatpush1.xpose.msra.mxu0 0.0
        %1295 = vmatprep.subr.mxu0 0.0
        %1296 = vmatpush1.xpose.msra.mxu0 0.0
        %1297 = vmatprep.subr.mxu0 0.0
        %1298 = vmatpush1.xpose.msra.mxu0 0.0
        %1299 = vmatprep.subr.mxu0 0.0
        %1300 = vmatpush1.xpose.msra.mxu0 0.0
        %1301 = vmatprep.subr.mxu0 0.0
        %1302 = vmatpush1.xpose.msra.mxu0 0.0
        %1303 = vmatprep.subr.mxu0 0.0
        %1304 = vmatpush1.xpose.msra.mxu0 0.0
        %1305 = vmatprep.subr.mxu0 0.0
        %1306 = vmatpush1.xpose.msra.mxu0 0.0
        %1307 = vmatprep.subr.mxu0 0.0
        %1308 = vmatpush1.xpose.msra.mxu0 0.0
        %1309 = vmatprep.subr.mxu0 0.0
        %1310 = vmatpush1.xpose.msra.mxu0 0.0
        %1311 = vmatprep.subr.mxu0 0.0
        %1312 = vmatpush1.xpose.msra.mxu0 0.0
        %1313 = vmatprep.subr.mxu0 0.0
        %1314 = vmatpush1.xpose.msra.mxu0 0.0
        %1315 = vmatprep.subr.mxu0 0.0
        %1316 = vmatpush1.xpose.msra.mxu0 0.0
        %1317 = vmatprep.subr.mxu0 0.0
        %1318 = vmatpush1.xpose.msra.mxu0 0.0
        %1319 = vmatprep.subr.mxu0 0.0
        %1320 = vmatpush1.xpose.msra.mxu0 0.0
        %1321 = vmatprep.subr.mxu0 0.0
        %1322 = vmatpush1.xpose.msra.mxu0 0.0
        %1323 = vmatprep.subr.mxu0 0.0
        %1324 = vmatpush1.xpose.msra.mxu0 0.0
        %1325 = vmatprep.subr.mxu0 0.0
        %1326 = vmatpush1.xpose.msra.mxu0 0.0
        %1327 = vmatprep.subr.mxu0 0.0
        %1328 = vmatpush1.xpose.msra.mxu0 0.0
        %1329 = vmatprep.subr.mxu0 0.0
        %1330 = vmatpush1.xpose.msra.mxu0 0.0
        %1331 = vmatprep.subr.mxu0 0.0
        %1332 = vmatpush1.xpose.msra.mxu0 0.0
        %1333 = vmatprep.mubr.f32.mxu0 0.0
        %1334 = vmatmul.mubr.f32.gmra.mrb[0].mxu0 %v1265
        %v1335 = vpop.f32.mrb[0].mxu0
        %v1336 = vadd.f32 %v849, %v1335
        %v1337 = vpop.f32.mrb[0].mxu0
        %1338 = vdwg.mxu0
        %v1339 = vsel %vm855, %v1258, -inf
        %1340 = vmax.xlane.f32.xlu0 %v1339
        %v1341 = vpop.xlane.xlu0 %1340
        %v1342 = vsel %vm855, %v1336, -inf
        %1343 = vmax.xlane.f32.xlu0 %v1342
        %v1344 = vpop.xlane.xlu0 %1343
        %v1345 = vsub.f32 %v1258, %v1341
        %v1346 = vsub.f32 %v1336, %v1344
        %v1347 = vmul.f32 %v1345, 1.442695
        %v1348 = vpow.pop %v1347
        %v1349 = vmul.f32 %v1346, 1.442695
        %v1350 = vpow.pop %v1349
        %v1351 = vsel %vm855, %v1348, 0.0
        %1352 = vadd.xlane.f32.xlu0 %v1351
        %v1353 = vpop.xlane.xlu0 %1352
        %v1354 = vsel %vm855, %v1350, 0.0
        %1355 = vadd.xlane.f32.xlu0 %v1354
        %v1356 = vpop.xlane.xlu0 %1355
        %v1357 = vrcp.pop %v1353
        %v1358 = vmul.f32 %v1348, %v1357
        %v1359 = vrcp.pop %v1356
        %v1360 = vmul.f32 %v1350, %v1359
        %1361 = vrot.lane.b32.xlu0 %v830, 56
        %v1362 = vpop.permute.xlu0 %1361
        %v1365 = vsel %vm855, %v1358, 0
        %1367 = vmatprep.subr.mxu0 0.0
        %1368 = vmatpush1.msra.mxu0 %v1362
        %1369 = vmatprep.subr.mxu0 0.0
        %1370 = vmatpush1.msra.mxu0 0.0
        %1371 = vmatprep.subr.mxu0 0.0
        %1372 = vmatpush1.msra.mxu0 0.0
        %1373 = vmatprep.subr.mxu0 0.0
        %1374 = vmatpush1.msra.mxu0 0.0
        %1375 = vmatprep.subr.mxu0 0.0
        %1376 = vmatpush1.msra.mxu0 0.0
        %1377 = vmatprep.subr.mxu0 0.0
        %1378 = vmatpush1.msra.mxu0 0.0
        %1379 = vmatprep.subr.mxu0 0.0
        %1380 = vmatpush1.msra.mxu0 0.0
        %1381 = vmatprep.subr.mxu0 0.0
        %1382 = vmatpush1.msra.mxu0 0.0
        %1383 = vmatprep.subr.mxu0 0.0
        %1384 = vmatpush1.msra.mxu0 0.0
        %1385 = vmatprep.subr.mxu0 0.0
        %1386 = vmatpush1.msra.mxu0 0.0
        %1387 = vmatprep.subr.mxu0 0.0
        %1388 = vmatpush1.msra.mxu0 0.0
        %1389 = vmatprep.subr.mxu0 0.0
        %1390 = vmatpush1.msra.mxu0 0.0
        %1391 = vmatprep.subr.mxu0 0.0
        %1392 = vmatpush1.msra.mxu0 0.0
        %1393 = vmatprep.subr.mxu0 0.0
        %1394 = vmatpush1.msra.mxu0 0.0
        %1395 = vmatprep.subr.mxu0 0.0
        %1396 = vmatpush1.msra.mxu0 0.0
        %1397 = vmatprep.subr.mxu0 0.0
        %1398 = vmatpush1.msra.mxu0 0.0
        %1399 = vmatprep.subr.mxu0 0.0
        %1400 = vmatpush1.msra.mxu0 0.0
        %1401 = vmatprep.subr.mxu0 0.0
        %1402 = vmatpush1.msra.mxu0 0.0
        %1403 = vmatprep.subr.mxu0 0.0
        %1404 = vmatpush1.msra.mxu0 0.0
        %1405 = vmatprep.subr.mxu0 0.0
        %1406 = vmatpush1.msra.mxu0 0.0
        %1407 = vmatprep.subr.mxu0 0.0
        %1408 = vmatpush1.msra.mxu0 0.0
        %1409 = vmatprep.subr.mxu0 0.0
        %1410 = vmatpush1.msra.mxu0 0.0
        %1411 = vmatprep.subr.mxu0 0.0
        %1412 = vmatpush1.msra.mxu0 0.0
        %1413 = vmatprep.subr.mxu0 0.0
        %1414 = vmatpush1.msra.mxu0 0.0
        %1415 = vmatprep.subr.mxu0 0.0
        %1416 = vmatpush1.msra.mxu0 0.0
        %1417 = vmatprep.subr.mxu0 0.0
        %1418 = vmatpush1.msra.mxu0 0.0
        %1419 = vmatprep.subr.mxu0 0.0
        %1420 = vmatpush1.msra.mxu0 0.0
        %1421 = vmatprep.subr.mxu0 0.0
        %1422 = vmatpush1.msra.mxu0 0.0
        %1423 = vmatprep.subr.mxu0 0.0
        %1424 = vmatpush1.msra.mxu0 0.0
        %1425 = vmatprep.subr.mxu0 0.0
        %1426 = vmatpush1.msra.mxu0 0.0
        %1427 = vmatprep.subr.mxu0 0.0
        %1428 = vmatpush1.msra.mxu0 0.0
        %1429 = vmatprep.subr.mxu0 0.0
        %1430 = vmatpush1.msra.mxu0 0.0
        %1431 = vmatprep.mubr.f32.mxu0 0.0
        %1432 = vmatmul.mubr.f32.gmra.mrb[0].mxu0 %v1365
        %v1433 = vpop.f32.mrb[0].mxu0
        %v1434 = vadd.f32 0.0, %v1433
        %v1435 = vpop.f32.mrb[0].mxu0
        %1436 = vdwg.mxu0
        %1437 = vrot.lane.b32.xlu0 %v835, 56
        %v1438 = vpop.permute.xlu0 %1437
        %v1441 = vsel %vm855, %v1360, 0
        %1443 = vmatprep.subr.mxu0 0.0
        %1444 = vmatpush1.msra.mxu0 %v1438
        %1445 = vmatprep.subr.mxu0 0.0
        %1446 = vmatpush1.msra.mxu0 0.0
        %1447 = vmatprep.subr.mxu0 0.0
        %1448 = vmatpush1.msra.mxu0 0.0
        %1449 = vmatprep.subr.mxu0 0.0
        %1450 = vmatpush1.msra.mxu0 0.0
        %1451 = vmatprep.subr.mxu0 0.0
        %1452 = vmatpush1.msra.mxu0 0.0
        %1453 = vmatprep.subr.mxu0 0.0
        %1454 = vmatpush1.msra.mxu0 0.0
        %1455 = vmatprep.subr.mxu0 0.0
        %1456 = vmatpush1.msra.mxu0 0.0
        %1457 = vmatprep.subr.mxu0 0.0
        %1458 = vmatpush1.msra.mxu0 0.0
        %1459 = vmatprep.subr.mxu0 0.0
        %1460 = vmatpush1.msra.mxu0 0.0
        %1461 = vmatprep.subr.mxu0 0.0
        %1462 = vmatpush1.msra.mxu0 0.0
        %1463 = vmatprep.subr.mxu0 0.0
        %1464 = vmatpush1.msra.mxu0 0.0
        %1465 = vmatprep.subr.mxu0 0.0
        %1466 = vmatpush1.msra.mxu0 0.0
        %1467 = vmatprep.subr.mxu0 0.0
        %1468 = vmatpush1.msra.mxu0 0.0
        %1469 = vmatprep.subr.mxu0 0.0
        %1470 = vmatpush1.msra.mxu0 0.0
        %1471 = vmatprep.subr.mxu0 0.0
        %1472 = vmatpush1.msra.mxu0 0.0
        %1473 = vmatprep.subr.mxu0 0.0
        %1474 = vmatpush1.msra.mxu0 0.0
        %1475 = vmatprep.subr.mxu0 0.0
        %1476 = vmatpush1.msra.mxu0 0.0
        %1477 = vmatprep.subr.mxu0 0.0
        %1478 = vmatpush1.msra.mxu0 0.0
        %1479 = vmatprep.subr.mxu0 0.0
        %1480 = vmatpush1.msra.mxu0 0.0
        %1481 = vmatprep.subr.mxu0 0.0
        %1482 = vmatpush1.msra.mxu0 0.0
        %1483 = vmatprep.subr.mxu0 0.0
        %1484 = vmatpush1.msra.mxu0 0.0
        %1485 = vmatprep.subr.mxu0 0.0
        %1486 = vmatpush1.msra.mxu0 0.0
        %1487 = vmatprep.subr.mxu0 0.0
        %1488 = vmatpush1.msra.mxu0 0.0
        %1489 = vmatprep.subr.mxu0 0.0
        %1490 = vmatpush1.msra.mxu0 0.0
        %1491 = vmatprep.subr.mxu0 0.0
        %1492 = vmatpush1.msra.mxu0 0.0
        %1493 = vmatprep.subr.mxu0 0.0
        %1494 = vmatpush1.msra.mxu0 0.0
        %1495 = vmatprep.subr.mxu0 0.0
        %1496 = vmatpush1.msra.mxu0 0.0
        %1497 = vmatprep.subr.mxu0 0.0
        %1498 = vmatpush1.msra.mxu0 0.0
        %1499 = vmatprep.subr.mxu0 0.0
        %1500 = vmatpush1.msra.mxu0 0.0
        %1501 = vmatprep.subr.mxu0 0.0
        %1502 = vmatpush1.msra.mxu0 0.0
        %1503 = vmatprep.subr.mxu0 0.0
        %1504 = vmatpush1.msra.mxu0 0.0
        %1505 = vmatprep.subr.mxu0 0.0
        %1506 = vmatpush1.msra.mxu0 0.0
        %1507 = vmatprep.mubr.f32.mxu0 0.0
        %1508 = vmatmul.mubr.f32.gmra.mrb[0].mxu0 %v1441
        %v1509 = vpop.f32.mrb[0].mxu0
        %v1510 = vadd.f32 0.0, %v1509
        %v1511 = vpop.f32.mrb[0].mxu0
        %1512 = vdwg.mxu0
        %1515 = vrot.lane.b32.xlu0 %v1434, 8
        %v1516 = vpop.permute.xlu0 %1515
        %1517 = vrot.lane.b32.xlu0 %v1510, 8
        %v1518 = vpop.permute.xlu0 %1517
        %vm1521 = vcmask 130112
        %1522 = vst.msk [vmem:[#allocation3] sm:$0xff] %vm1521, %v1516
        %1523 = vst.msk [vmem:[#allocation3 + $0x8] sm:$0xff] %vm1521, %v1518
        %1524 = vrot.lane.b32.xlu0 %v830, 112
        %v1525 = vpop.permute.xlu0 %1524
        %1526 = vrot.lane.b32.xlu0 %v830, 80
        %v1527 = vpop.permute.xlu0 %1526
        %v1528 = vsel %vm855, %v1525, 0
        %v1530 = vsel %vm855, %v1527, 0
        %1532 = vmatprep.subr.mxu0 0.0
        %1533 = vmatpush1.xpose.msra.mxu0 %v1530
        %1534 = vmatprep.subr.mxu0 0.0
        %1535 = vmatpush1.xpose.msra.mxu0 0.0
        %1536 = vmatprep.subr.mxu0 0.0
        %1537 = vmatpush1.xpose.msra.mxu0 0.0
        %1538 = vmatprep.subr.mxu0 0.0
        %1539 = vmatpush1.xpose.msra.mxu0 0.0
        %1540 = vmatprep.subr.mxu0 0.0
        %1541 = vmatpush1.xpose.msra.mxu0 0.0
        %1542 = vmatprep.subr.mxu0 0.0
        %1543 = vmatpush1.xpose.msra.mxu0 0.0
        %1544 = vmatprep.subr.mxu0 0.0
        %1545 = vmatpush1.xpose.msra.mxu0 0.0
        %1546 = vmatprep.subr.mxu0 0.0
        %1547 = vmatpush1.xpose.msra.mxu0 0.0
        %1548 = vmatprep.subr.mxu0 0.0
        %1549 = vmatpush1.xpose.msra.mxu0 0.0
        %1550 = vmatprep.subr.mxu0 0.0
        %1551 = vmatpush1.xpose.msra.mxu0 0.0
        %1552 = vmatprep.subr.mxu0 0.0
        %1553 = vmatpush1.xpose.msra.mxu0 0.0
        %1554 = vmatprep.subr.mxu0 0.0
        %1555 = vmatpush1.xpose.msra.mxu0 0.0
        %1556 = vmatprep.subr.mxu0 0.0
        %1557 = vmatpush1.xpose.msra.mxu0 0.0
        %1558 = vmatprep.subr.mxu0 0.0
        %1559 = vmatpush1.xpose.msra.mxu0 0.0
        %1560 = vmatprep.subr.mxu0 0.0
        %1561 = vmatpush1.xpose.msra.mxu0 0.0
        %1562 = vmatprep.subr.mxu0 0.0
        %1563 = vmatpush1.xpose.msra.mxu0 0.0
        %1564 = vmatprep.subr.mxu0 0.0
        %1565 = vmatpush1.xpose.msra.mxu0 0.0
        %1566 = vmatprep.subr.mxu0 0.0
        %1567 = vmatpush1.xpose.msra.mxu0 0.0
        %1568 = vmatprep.subr.mxu0 0.0
        %1569 = vmatpush1.xpose.msra.mxu0 0.0
        %1570 = vmatprep.subr.mxu0 0.0
        %1571 = vmatpush1.xpose.msra.mxu0 0.0
        %1572 = vmatprep.subr.mxu0 0.0
        %1573 = vmatpush1.xpose.msra.mxu0 0.0
        %1574 = vmatprep.subr.mxu0 0.0
        %1575 = vmatpush1.xpose.msra.mxu0 0.0
        %1576 = vmatprep.subr.mxu0 0.0
        %1577 = vmatpush1.xpose.msra.mxu0 0.0
        %1578 = vmatprep.subr.mxu0 0.0
        %1579 = vmatpush1.xpose.msra.mxu0 0.0
        %1580 = vmatprep.subr.mxu0 0.0
        %1581 = vmatpush1.xpose.msra.mxu0 0.0
        %1582 = vmatprep.subr.mxu0 0.0
        %1583 = vmatpush1.xpose.msra.mxu0 0.0
        %1584 = vmatprep.subr.mxu0 0.0
        %1585 = vmatpush1.xpose.msra.mxu0 0.0
        %1586 = vmatprep.subr.mxu0 0.0
        %1587 = vmatpush1.xpose.msra.mxu0 0.0
        %1588 = vmatprep.subr.mxu0 0.0
        %1589 = vmatpush1.xpose.msra.mxu0 0.0
        %1590 = vmatprep.subr.mxu0 0.0
        %1591 = vmatpush1.xpose.msra.mxu0 0.0
        %1592 = vmatprep.subr.mxu0 0.0
        %1593 = vmatpush1.xpose.msra.mxu0 0.0
        %1594 = vmatprep.subr.mxu0 0.0
        %1595 = vmatpush1.xpose.msra.mxu0 0.0
        %1596 = vmatprep.mubr.f32.mxu0 0.0
        %1597 = vmatmul.mubr.f32.gmra.mrb[0].mxu0 %v1528
        %v1598 = vpop.f32.mrb[0].mxu0
        %v1599 = vadd.f32 %v845, %v1598
        %v1600 = vpop.f32.mrb[0].mxu0
        %1601 = vdwg.mxu0
        %1602 = vrot.lane.b32.xlu0 %v835, 112
        %v1603 = vpop.permute.xlu0 %1602
        %1604 = vrot.lane.b32.xlu0 %v835, 80
        %v1605 = vpop.permute.xlu0 %1604
        %v1606 = vsel %vm855, %v1603, 0
        %v1608 = vsel %vm855, %v1605, 0
        %1610 = vmatprep.subr.mxu0 0.0
        %1611 = vmatpush1.xpose.msra.mxu0 %v1608
        %1612 = vmatprep.subr.mxu0 0.0
        %1613 = vmatpush1.xpose.msra.mxu0 0.0
        %1614 = vmatprep.subr.mxu0 0.0
        %1615 = vmatpush1.xpose.msra.mxu0 0.0
        %1616 = vmatprep.subr.mxu0 0.0
        %1617 = vmatpush1.xpose.msra.mxu0 0.0
        %1618 = vmatprep.subr.mxu0 0.0
        %1619 = vmatpush1.xpose.msra.mxu0 0.0
        %1620 = vmatprep.subr.mxu0 0.0
        %1621 = vmatpush1.xpose.msra.mxu0 0.0
        %1622 = vmatprep.subr.mxu0 0.0
        %1623 = vmatpush1.xpose.msra.mxu0 0.0
        %1624 = vmatprep.subr.mxu0 0.0
        %1625 = vmatpush1.xpose.msra.mxu0 0.0
        %1626 = vmatprep.subr.mxu0 0.0
        %1627 = vmatpush1.xpose.msra.mxu0 0.0
        %1628 = vmatprep.subr.mxu0 0.0
        %1629 = vmatpush1.xpose.msra.mxu0 0.0
        %1630 = vmatprep.subr.mxu0 0.0
        %1631 = vmatpush1.xpose.msra.mxu0 0.0
        %1632 = vmatprep.subr.mxu0 0.0
        %1633 = vmatpush1.xpose.msra.mxu0 0.0
        %1634 = vmatprep.subr.mxu0 0.0
        %1635 = vmatpush1.xpose.msra.mxu0 0.0
        %1636 = vmatprep.subr.mxu0 0.0
        %1637 = vmatpush1.xpose.msra.mxu0 0.0
        %1638 = vmatprep.subr.mxu0 0.0
        %1639 = vmatpush1.xpose.msra.mxu0 0.0
        %1640 = vmatprep.subr.mxu0 0.0
        %1641 = vmatpush1.xpose.msra.mxu0 0.0
        %1642 = vmatprep.subr.mxu0 0.0
        %1643 = vmatpush1.xpose.msra.mxu0 0.0
        %1644 = vmatprep.subr.mxu0 0.0
        %1645 = vmatpush1.xpose.msra.mxu0 0.0
        %1646 = vmatprep.subr.mxu0 0.0
        %1647 = vmatpush1.xpose.msra.mxu0 0.0
        %1648 = vmatprep.subr.mxu0 0.0
        %1649 = vmatpush1.xpose.msra.mxu0 0.0
        %1650 = vmatprep.subr.mxu0 0.0
        %1651 = vmatpush1.xpose.msra.mxu0 0.0
        %1652 = vmatprep.subr.mxu0 0.0
        %1653 = vmatpush1.xpose.msra.mxu0 0.0
        %1654 = vmatprep.subr.mxu0 0.0
        %1655 = vmatpush1.xpose.msra.mxu0 0.0
        %1656 = vmatprep.subr.mxu0 0.0
        %1657 = vmatpush1.xpose.msra.mxu0 0.0
        %1658 = vmatprep.subr.mxu0 0.0
        %1659 = vmatpush1.xpose.msra.mxu0 0.0
        %1660 = vmatprep.subr.mxu0 0.0
        %1661 = vmatpush1.xpose.msra.mxu0 0.0
        %1662 = vmatprep.subr.mxu0 0.0
        %1663 = vmatpush1.xpose.msra.mxu0 0.0
        %1664 = vmatprep.subr.mxu0 0.0
        %1665 = vmatpush1.xpose.msra.mxu0 0.0
        %1666 = vmatprep.subr.mxu0 0.0
        %1667 = vmatpush1.xpose.msra.mxu0 0.0
        %1668 = vmatprep.subr.mxu0 0.0
        %1669 = vmatpush1.xpose.msra.mxu0 0.0
        %1670 = vmatprep.subr.mxu0 0.0
        %1671 = vmatpush1.xpose.msra.mxu0 0.0
        %1672 = vmatprep.subr.mxu0 0.0
        %1673 = vmatpush1.xpose.msra.mxu0 0.0
        %1674 = vmatprep.mubr.f32.mxu0 0.0
        %1675 = vmatmul.mubr.f32.gmra.mrb[0].mxu0 %v1606
        %v1676 = vpop.f32.mrb[0].mxu0
        %v1677 = vadd.f32 %v849, %v1676
        %v1678 = vpop.f32.mrb[0].mxu0
        %1679 = vdwg.mxu0
        %v1680 = vsel %vm855, %v1599, -inf
        %1681 = vmax.xlane.f32.xlu0 %v1680
        %v1682 = vpop.xlane.xlu0 %1681
        %v1683 = vsel %vm855, %v1677, -inf
        %1684 = vmax.xlane.f32.xlu0 %v1683
        %v1685 = vpop.xlane.xlu0 %1684
        %v1686 = vsub.f32 %v1599, %v1682
        %v1687 = vsub.f32 %v1677, %v1685
        %v1688 = vmul.f32 %v1686, 1.442695
        %v1689 = vpow.pop %v1688
        %v1690 = vmul.f32 %v1687, 1.442695
        %v1691 = vpow.pop %v1690
        %v1692 = vsel %vm855, %v1689, 0.0
        %1693 = vadd.xlane.f32.xlu0 %v1692
        %v1694 = vpop.xlane.xlu0 %1693
        %v1695 = vsel %vm855, %v1691, 0.0
        %1696 = vadd.xlane.f32.xlu0 %v1695
        %v1697 = vpop.xlane.xlu0 %1696
        %v1698 = vrcp.pop %v1694
        %v1699 = vmul.f32 %v1689, %v1698
        %v1700 = vrcp.pop %v1697
        %v1701 = vmul.f32 %v1691, %v1700
        %1702 = vrot.lane.b32.xlu0 %v830, 48
        %v1703 = vpop.permute.xlu0 %1702
        %v1706 = vsel %vm855, %v1699, 0
        %1708 = vmatprep.subr.mxu0 0.0
        %1709 = vmatpush1.msra.mxu0 %v1703
        %1710 = vmatprep.subr.mxu0 0.0
        %1711 = vmatpush1.msra.mxu0 0.0
        %1712 = vmatprep.subr.mxu0 0.0
        %1713 = vmatpush1.msra.mxu0 0.0
        %1714 = vmatprep.subr.mxu0 0.0
        %1715 = vmatpush1.msra.mxu0 0.0
        %1716 = vmatprep.subr.mxu0 0.0
        %1717 = vmatpush1.msra.mxu0 0.0
        %1718 = vmatprep.subr.mxu0 0.0
        %1719 = vmatpush1.msra.mxu0 0.0
        %1720 = vmatprep.subr.mxu0 0.0
        %1721 = vmatpush1.msra.mxu0 0.0
        %1722 = vmatprep.subr.mxu0 0.0
        %1723 = vmatpush1.msra.mxu0 0.0
        %1724 = vmatprep.subr.mxu0 0.0
        %1725 = vmatpush1.msra.mxu0 0.0
        %1726 = vmatprep.subr.mxu0 0.0
        %1727 = vmatpush1.msra.mxu0 0.0
        %1728 = vmatprep.subr.mxu0 0.0
        %1729 = vmatpush1.msra.mxu0 0.0
        %1730 = vmatprep.subr.mxu0 0.0
        %1731 = vmatpush1.msra.mxu0 0.0
        %1732 = vmatprep.subr.mxu0 0.0
        %1733 = vmatpush1.msra.mxu0 0.0
        %1734 = vmatprep.subr.mxu0 0.0
        %1735 = vmatpush1.msra.mxu0 0.0
        %1736 = vmatprep.subr.mxu0 0.0
        %1737 = vmatpush1.msra.mxu0 0.0
        %1738 = vmatprep.subr.mxu0 0.0
        %1739 = vmatpush1.msra.mxu0 0.0
        %1740 = vmatprep.subr.mxu0 0.0
        %1741 = vmatpush1.msra.mxu0 0.0
        %1742 = vmatprep.subr.mxu0 0.0
        %1743 = vmatpush1.msra.mxu0 0.0
        %1744 = vmatprep.subr.mxu0 0.0
        %1745 = vmatpush1.msra.mxu0 0.0
        %1746 = vmatprep.subr.mxu0 0.0
        %1747 = vmatpush1.msra.mxu0 0.0
        %1748 = vmatprep.subr.mxu0 0.0
        %1749 = vmatpush1.msra.mxu0 0.0
        %1750 = vmatprep.subr.mxu0 0.0
        %1751 = vmatpush1.msra.mxu0 0.0
        %1752 = vmatprep.subr.mxu0 0.0
        %1753 = vmatpush1.msra.mxu0 0.0
        %1754 = vmatprep.subr.mxu0 0.0
        %1755 = vmatpush1.msra.mxu0 0.0
        %1756 = vmatprep.subr.mxu0 0.0
        %1757 = vmatpush1.msra.mxu0 0.0
        %1758 = vmatprep.subr.mxu0 0.0
        %1759 = vmatpush1.msra.mxu0 0.0
        %1760 = vmatprep.subr.mxu0 0.0
        %1761 = vmatpush1.msra.mxu0 0.0
        %1762 = vmatprep.subr.mxu0 0.0
        %1763 = vmatpush1.msra.mxu0 0.0
        %1764 = vmatprep.subr.mxu0 0.0
        %1765 = vmatpush1.msra.mxu0 0.0
        %1766 = vmatprep.subr.mxu0 0.0
        %1767 = vmatpush1.msra.mxu0 0.0
        %1768 = vmatprep.subr.mxu0 0.0
        %1769 = vmatpush1.msra.mxu0 0.0
        %1770 = vmatprep.subr.mxu0 0.0
        %1771 = vmatpush1.msra.mxu0 0.0
        %1772 = vmatprep.mubr.f32.mxu0 0.0
        %1773 = vmatmul.mubr.f32.gmra.mrb[0].mxu0 %v1706
        %v1774 = vpop.f32.mrb[0].mxu0
        %v1775 = vadd.f32 0.0, %v1774
        %v1776 = vpop.f32.mrb[0].mxu0
        %1777 = vdwg.mxu0
        %1778 = vrot.lane.b32.xlu0 %v835, 48
        %v1779 = vpop.permute.xlu0 %1778
        %v1782 = vsel %vm855, %v1701, 0
        %1784 = vmatprep.subr.mxu0 0.0
        %1785 = vmatpush1.msra.mxu0 %v1779
        %1786 = vmatprep.subr.mxu0 0.0
        %1787 = vmatpush1.msra.mxu0 0.0
        %1788 = vmatprep.subr.mxu0 0.0
        %1789 = vmatpush1.msra.mxu0 0.0
        %1790 = vmatprep.subr.mxu0 0.0
        %1791 = vmatpush1.msra.mxu0 0.0
        %1792 = vmatprep.subr.mxu0 0.0
        %1793 = vmatpush1.msra.mxu0 0.0
        %1794 = vmatprep.subr.mxu0 0.0
        %1795 = vmatpush1.msra.mxu0 0.0
        %1796 = vmatprep.subr.mxu0 0.0
        %1797 = vmatpush1.msra.mxu0 0.0
        %1798 = vmatprep.subr.mxu0 0.0
        %1799 = vmatpush1.msra.mxu0 0.0
        %1800 = vmatprep.subr.mxu0 0.0
        %1801 = vmatpush1.msra.mxu0 0.0
        %1802 = vmatprep.subr.mxu0 0.0
        %1803 = vmatpush1.msra.mxu0 0.0
        %1804 = vmatprep.subr.mxu0 0.0
        %1805 = vmatpush1.msra.mxu0 0.0
        %1806 = vmatprep.subr.mxu0 0.0
        %1807 = vmatpush1.msra.mxu0 0.0
        %1808 = vmatprep.subr.mxu0 0.0
        %1809 = vmatpush1.msra.mxu0 0.0
        %1810 = vmatprep.subr.mxu0 0.0
        %1811 = vmatpush1.msra.mxu0 0.0
        %1812 = vmatprep.subr.mxu0 0.0
        %1813 = vmatpush1.msra.mxu0 0.0
        %1814 = vmatprep.subr.mxu0 0.0
        %1815 = vmatpush1.msra.mxu0 0.0
        %1816 = vmatprep.subr.mxu0 0.0
        %1817 = vmatpush1.msra.mxu0 0.0
        %1818 = vmatprep.subr.mxu0 0.0
        %1819 = vmatpush1.msra.mxu0 0.0
        %1820 = vmatprep.subr.mxu0 0.0
        %1821 = vmatpush1.msra.mxu0 0.0
        %1822 = vmatprep.subr.mxu0 0.0
        %1823 = vmatpush1.msra.mxu0 0.0
        %1824 = vmatprep.subr.mxu0 0.0
        %1825 = vmatpush1.msra.mxu0 0.0
        %1826 = vmatprep.subr.mxu0 0.0
        %1827 = vmatpush1.msra.mxu0 0.0
        %1828 = vmatprep.subr.mxu0 0.0
        %1829 = vmatpush1.msra.mxu0 0.0
        %1830 = vmatprep.subr.mxu0 0.0
        %1831 = vmatpush1.msra.mxu0 0.0
        %1832 = vmatprep.subr.mxu0 0.0
        %1833 = vmatpush1.msra.mxu0 0.0
        %1834 = vmatprep.subr.mxu0 0.0
        %1835 = vmatpush1.msra.mxu0 0.0
        %1836 = vmatprep.subr.mxu0 0.0
        %1837 = vmatpush1.msra.mxu0 0.0
        %1838 = vmatprep.subr.mxu0 0.0
        %1839 = vmatpush1.msra.mxu0 0.0
        %1840 = vmatprep.subr.mxu0 0.0
        %1841 = vmatpush1.msra.mxu0 0.0
        %1842 = vmatprep.subr.mxu0 0.0
        %1843 = vmatpush1.msra.mxu0 0.0
        %1844 = vmatprep.subr.mxu0 0.0
        %1845 = vmatpush1.msra.mxu0 0.0
        %1846 = vmatprep.subr.mxu0 0.0
        %1847 = vmatpush1.msra.mxu0 0.0
        %1848 = vmatprep.mubr.f32.mxu0 0.0
        %1849 = vmatmul.mubr.f32.gmra.mrb[0].mxu0 %v1782
        %v1850 = vpop.f32.mrb[0].mxu0
        %v1851 = vadd.f32 0.0, %v1850
        %v1852 = vpop.f32.mrb[0].mxu0
        %1853 = vdwg.mxu0
        %1856 = vrot.lane.b32.xlu0 %v1775, 16
        %v1857 = vpop.permute.xlu0 %1856
        %1858 = vrot.lane.b32.xlu0 %v1851, 16
        %v1859 = vpop.permute.xlu0 %1858
        %vm1862 = vcmask 195712
        %1863 = vst.msk [vmem:[#allocation3] sm:$0xff] %vm1862, %v1857
        %1864 = vst.msk [vmem:[#allocation3 + $0x8] sm:$0xff] %vm1862, %v1859
        %1865 = vrot.lane.b32.xlu0 %v830, 104
        %v1866 = vpop.permute.xlu0 %1865
        %1867 = vrot.lane.b32.xlu0 %v830, 72
        %v1868 = vpop.permute.xlu0 %1867
        %v1869 = vsel %vm855, %v1866, 0
        %v1871 = vsel %vm855, %v1868, 0
        %1873 = vmatprep.subr.mxu0 0.0
        %1874 = vmatpush1.xpose.msra.mxu0 %v1871
        %1875 = vmatprep.subr.mxu0 0.0
        %1876 = vmatpush1.xpose.msra.mxu0 0.0
        %1877 = vmatprep.subr.mxu0 0.0
        %1878 = vmatpush1.xpose.msra.mxu0 0.0
        %1879 = vmatprep.subr.mxu0 0.0
        %1880 = vmatpush1.xpose.msra.mxu0 0.0
        %1881 = vmatprep.subr.mxu0 0.0
        %1882 = vmatpush1.xpose.msra.mxu0 0.0
        %1883 = vmatprep.subr.mxu0 0.0
        %1884 = vmatpush1.xpose.msra.mxu0 0.0
        %1885 = vmatprep.subr.mxu0 0.0
        %1886 = vmatpush1.xpose.msra.mxu0 0.0
        %1887 = vmatprep.subr.mxu0 0.0
        %1888 = vmatpush1.xpose.msra.mxu0 0.0
        %1889 = vmatprep.subr.mxu0 0.0
        %1890 = vmatpush1.xpose.msra.mxu0 0.0
        %1891 = vmatprep.subr.mxu0 0.0
        %1892 = vmatpush1.xpose.msra.mxu0 0.0
        %1893 = vmatprep.subr.mxu0 0.0
        %1894 = vmatpush1.xpose.msra.mxu0 0.0
        %1895 = vmatprep.subr.mxu0 0.0
        %1896 = vmatpush1.xpose.msra.mxu0 0.0
        %1897 = vmatprep.subr.mxu0 0.0
        %1898 = vmatpush1.xpose.msra.mxu0 0.0
        %1899 = vmatprep.subr.mxu0 0.0
        %1900 = vmatpush1.xpose.msra.mxu0 0.0
        %1901 = vmatprep.subr.mxu0 0.0
        %1902 = vmatpush1.xpose.msra.mxu0 0.0
        %1903 = vmatprep.subr.mxu0 0.0
        %1904 = vmatpush1.xpose.msra.mxu0 0.0
        %1905 = vmatprep.subr.mxu0 0.0
        %1906 = vmatpush1.xpose.msra.mxu0 0.0
        %1907 = vmatprep.subr.mxu0 0.0
        %1908 = vmatpush1.xpose.msra.mxu0 0.0
        %1909 = vmatprep.subr.mxu0 0.0
        %1910 = vmatpush1.xpose.msra.mxu0 0.0
        %1911 = vmatprep.subr.mxu0 0.0
        %1912 = vmatpush1.xpose.msra.mxu0 0.0
        %1913 = vmatprep.subr.mxu0 0.0
        %1914 = vmatpush1.xpose.msra.mxu0 0.0
        %1915 = vmatprep.subr.mxu0 0.0
        %1916 = vmatpush1.xpose.msra.mxu0 0.0
        %1917 = vmatprep.subr.mxu0 0.0
        %1918 = vmatpush1.xpose.msra.mxu0 0.0
        %1919 = vmatprep.subr.mxu0 0.0
        %1920 = vmatpush1.xpose.msra.mxu0 0.0
        %1921 = vmatprep.subr.mxu0 0.0
        %1922 = vmatpush1.xpose.msra.mxu0 0.0
        %1923 = vmatprep.subr.mxu0 0.0
        %1924 = vmatpush1.xpose.msra.mxu0 0.0
        %1925 = vmatprep.subr.mxu0 0.0
        %1926 = vmatpush1.xpose.msra.mxu0 0.0
        %1927 = vmatprep.subr.mxu0 0.0
        %1928 = vmatpush1.xpose.msra.mxu0 0.0
        %1929 = vmatprep.subr.mxu0 0.0
        %1930 = vmatpush1.xpose.msra.mxu0 0.0
        %1931 = vmatprep.subr.mxu0 0.0
        %1932 = vmatpush1.xpose.msra.mxu0 0.0
        %1933 = vmatprep.subr.mxu0 0.0
        %1934 = vmatpush1.xpose.msra.mxu0 0.0
        %1935 = vmatprep.subr.mxu0 0.0
        %1936 = vmatpush1.xpose.msra.mxu0 0.0
        %1937 = vmatprep.mubr.f32.mxu0 0.0
        %1938 = vmatmul.mubr.f32.gmra.mrb[0].mxu0 %v1869
        %v1939 = vpop.f32.mrb[0].mxu0
        %v1940 = vadd.f32 %v845, %v1939
        %v1941 = vpop.f32.mrb[0].mxu0
        %1942 = vdwg.mxu0
        %1943 = vrot.lane.b32.xlu0 %v835, 104
        %v1944 = vpop.permute.xlu0 %1943
        %1945 = vrot.lane.b32.xlu0 %v835, 72
        %v1946 = vpop.permute.xlu0 %1945
        %v1947 = vsel %vm855, %v1944, 0
        %v1949 = vsel %vm855, %v1946, 0
        %1951 = vmatprep.subr.mxu0 0.0
        %1952 = vmatpush1.xpose.msra.mxu0 %v1949
        %1953 = vmatprep.subr.mxu0 0.0
        %1954 = vmatpush1.xpose.msra.mxu0 0.0
        %1955 = vmatprep.subr.mxu0 0.0
        %1956 = vmatpush1.xpose.msra.mxu0 0.0
        %1957 = vmatprep.subr.mxu0 0.0
        %1958 = vmatpush1.xpose.msra.mxu0 0.0
        %1959 = vmatprep.subr.mxu0 0.0
        %1960 = vmatpush1.xpose.msra.mxu0 0.0
        %1961 = vmatprep.subr.mxu0 0.0
        %1962 = vmatpush1.xpose.msra.mxu0 0.0
        %1963 = vmatprep.subr.mxu0 0.0
        %1964 = vmatpush1.xpose.msra.mxu0 0.0
        %1965 = vmatprep.subr.mxu0 0.0
        %1966 = vmatpush1.xpose.msra.mxu0 0.0
        %1967 = vmatprep.subr.mxu0 0.0
        %1968 = vmatpush1.xpose.msra.mxu0 0.0
        %1969 = vmatprep.subr.mxu0 0.0
        %1970 = vmatpush1.xpose.msra.mxu0 0.0
        %1971 = vmatprep.subr.mxu0 0.0
        %1972 = vmatpush1.xpose.msra.mxu0 0.0
        %1973 = vmatprep.subr.mxu0 0.0
        %1974 = vmatpush1.xpose.msra.mxu0 0.0
        %1975 = vmatprep.subr.mxu0 0.0
        %1976 = vmatpush1.xpose.msra.mxu0 0.0
        %1977 = vmatprep.subr.mxu0 0.0
        %1978 = vmatpush1.xpose.msra.mxu0 0.0
        %1979 = vmatprep.subr.mxu0 0.0
        %1980 = vmatpush1.xpose.msra.mxu0 0.0
        %1981 = vmatprep.subr.mxu0 0.0
        %1982 = vmatpush1.xpose.msra.mxu0 0.0
        %1983 = vmatprep.subr.mxu0 0.0
        %1984 = vmatpush1.xpose.msra.mxu0 0.0
        %1985 = vmatprep.subr.mxu0 0.0
        %1986 = vmatpush1.xpose.msra.mxu0 0.0
        %1987 = vmatprep.subr.mxu0 0.0
        %1988 = vmatpush1.xpose.msra.mxu0 0.0
        %1989 = vmatprep.subr.mxu0 0.0
        %1990 = vmatpush1.xpose.msra.mxu0 0.0
        %1991 = vmatprep.subr.mxu0 0.0
        %1992 = vmatpush1.xpose.msra.mxu0 0.0
        %1993 = vmatprep.subr.mxu0 0.0
        %1994 = vmatpush1.xpose.msra.mxu0 0.0
        %1995 = vmatprep.subr.mxu0 0.0
        %1996 = vmatpush1.xpose.msra.mxu0 0.0
        %1997 = vmatprep.subr.mxu0 0.0
        %1998 = vmatpush1.xpose.msra.mxu0 0.0
        %1999 = vmatprep.subr.mxu0 0.0
        %2000 = vmatpush1.xpose.msra.mxu0 0.0
        %2001 = vmatprep.subr.mxu0 0.0
        %2002 = vmatpush1.xpose.msra.mxu0 0.0
        %2003 = vmatprep.subr.mxu0 0.0
        %2004 = vmatpush1.xpose.msra.mxu0 0.0
        %2005 = vmatprep.subr.mxu0 0.0
        %2006 = vmatpush1.xpose.msra.mxu0 0.0
        %2007 = vmatprep.subr.mxu0 0.0
        %2008 = vmatpush1.xpose.msra.mxu0 0.0
        %2009 = vmatprep.subr.mxu0 0.0
        %2010 = vmatpush1.xpose.msra.mxu0 0.0
        %2011 = vmatprep.subr.mxu0 0.0
        %2012 = vmatpush1.xpose.msra.mxu0 0.0
        %2013 = vmatprep.subr.mxu0 0.0
        %2014 = vmatpush1.xpose.msra.mxu0 0.0
        %2015 = vmatprep.mubr.f32.mxu0 0.0
        %2016 = vmatmul.mubr.f32.gmra.mrb[0].mxu0 %v1947
        %v2017 = vpop.f32.mrb[0].mxu0
        %v2018 = vadd.f32 %v849, %v2017
        %v2019 = vpop.f32.mrb[0].mxu0
        %2020 = vdwg.mxu0
        %v2021 = vsel %vm855, %v1940, -inf
        %2022 = vmax.xlane.f32.xlu0 %v2021
        %v2023 = vpop.xlane.xlu0 %2022
        %v2024 = vsel %vm855, %v2018, -inf
        %2025 = vmax.xlane.f32.xlu0 %v2024
        %v2026 = vpop.xlane.xlu0 %2025
        %v2027 = vsub.f32 %v1940, %v2023
        %v2028 = vsub.f32 %v2018, %v2026
        %v2029 = vmul.f32 %v2027, 1.442695
        %v2030 = vpow.pop %v2029
        %v2031 = vmul.f32 %v2028, 1.442695
        %v2032 = vpow.pop %v2031
        %v2033 = vsel %vm855, %v2030, 0.0
        %2034 = vadd.xlane.f32.xlu0 %v2033
        %v2035 = vpop.xlane.xlu0 %2034
        %v2036 = vsel %vm855, %v2032, 0.0
        %2037 = vadd.xlane.f32.xlu0 %v2036
        %v2038 = vpop.xlane.xlu0 %2037
        %v2039 = vrcp.pop %v2035
        %v2040 = vmul.f32 %v2030, %v2039
        %v2041 = vrcp.pop %v2038
        %v2042 = vmul.f32 %v2032, %v2041
        %2043 = vrot.lane.b32.xlu0 %v830, 40
        %v2044 = vpop.permute.xlu0 %2043
        %v2047 = vsel %vm855, %v2040, 0
        %2049 = vmatprep.subr.mxu0 0.0
        %2050 = vmatpush1.msra.mxu0 %v2044
        %2051 = vmatprep.subr.mxu0 0.0
        %2052 = vmatpush1.msra.mxu0 0.0
        %2053 = vmatprep.subr.mxu0 0.0
        %2054 = vmatpush1.msra.mxu0 0.0
        %2055 = vmatprep.subr.mxu0 0.0
        %2056 = vmatpush1.msra.mxu0 0.0
        %2057 = vmatprep.subr.mxu0 0.0
        %2058 = vmatpush1.msra.mxu0 0.0
        %2059 = vmatprep.subr.mxu0 0.0
        %2060 = vmatpush1.msra.mxu0 0.0
        %2061 = vmatprep.subr.mxu0 0.0
        %2062 = vmatpush1.msra.mxu0 0.0
        %2063 = vmatprep.subr.mxu0 0.0
        %2064 = vmatpush1.msra.mxu0 0.0
        %2065 = vmatprep.subr.mxu0 0.0
        %2066 = vmatpush1.msra.mxu0 0.0
        %2067 = vmatprep.subr.mxu0 0.0
        %2068 = vmatpush1.msra.mxu0 0.0
        %2069 = vmatprep.subr.mxu0 0.0
        %2070 = vmatpush1.msra.mxu0 0.0
        %2071 = vmatprep.subr.mxu0 0.0
        %2072 = vmatpush1.msra.mxu0 0.0
        %2073 = vmatprep.subr.mxu0 0.0
        %2074 = vmatpush1.msra.mxu0 0.0
        %2075 = vmatprep.subr.mxu0 0.0
        %2076 = vmatpush1.msra.mxu0 0.0
        %2077 = vmatprep.subr.mxu0 0.0
        %2078 = vmatpush1.msra.mxu0 0.0
        %2079 = vmatprep.subr.mxu0 0.0
        %2080 = vmatpush1.msra.mxu0 0.0
        %2081 = vmatprep.subr.mxu0 0.0
        %2082 = vmatpush1.msra.mxu0 0.0
        %2083 = vmatprep.subr.mxu0 0.0
        %2084 = vmatpush1.msra.mxu0 0.0
        %2085 = vmatprep.subr.mxu0 0.0
        %2086 = vmatpush1.msra.mxu0 0.0
        %2087 = vmatprep.subr.mxu0 0.0
        %2088 = vmatpush1.msra.mxu0 0.0
        %2089 = vmatprep.subr.mxu0 0.0
        %2090 = vmatpush1.msra.mxu0 0.0
        %2091 = vmatprep.subr.mxu0 0.0
        %2092 = vmatpush1.msra.mxu0 0.0
        %2093 = vmatprep.subr.mxu0 0.0
        %2094 = vmatpush1.msra.mxu0 0.0
        %2095 = vmatprep.subr.mxu0 0.0
        %2096 = vmatpush1.msra.mxu0 0.0
        %2097 = vmatprep.subr.mxu0 0.0
        %2098 = vmatpush1.msra.mxu0 0.0
        %2099 = vmatprep.subr.mxu0 0.0
        %2100 = vmatpush1.msra.mxu0 0.0
        %2101 = vmatprep.subr.mxu0 0.0
        %2102 = vmatpush1.msra.mxu0 0.0
        %2103 = vmatprep.subr.mxu0 0.0
        %2104 = vmatpush1.msra.mxu0 0.0
        %2105 = vmatprep.subr.mxu0 0.0
        %2106 = vmatpush1.msra.mxu0 0.0
        %2107 = vmatprep.subr.mxu0 0.0
        %2108 = vmatpush1.msra.mxu0 0.0
        %2109 = vmatprep.subr.mxu0 0.0
        %2110 = vmatpush1.msra.mxu0 0.0
        %2111 = vmatprep.subr.mxu0 0.0
        %2112 = vmatpush1.msra.mxu0 0.0
        %2113 = vmatprep.mubr.f32.mxu0 0.0
        %2114 = vmatmul.mubr.f32.gmra.mrb[0].mxu0 %v2047
        %v2115 = vpop.f32.mrb[0].mxu0
        %v2116 = vadd.f32 0.0, %v2115
        %v2117 = vpop.f32.mrb[0].mxu0
        %2118 = vdwg.mxu0
        %2119 = vrot.lane.b32.xlu0 %v835, 40
        %v2120 = vpop.permute.xlu0 %2119
        %v2123 = vsel %vm855, %v2042, 0
        %2125 = vmatprep.subr.mxu0 0.0
        %2126 = vmatpush1.msra.mxu0 %v2120
        %2127 = vmatprep.subr.mxu0 0.0
        %2128 = vmatpush1.msra.mxu0 0.0
        %2129 = vmatprep.subr.mxu0 0.0
        %2130 = vmatpush1.msra.mxu0 0.0
        %2131 = vmatprep.subr.mxu0 0.0
        %2132 = vmatpush1.msra.mxu0 0.0
        %2133 = vmatprep.subr.mxu0 0.0
        %2134 = vmatpush1.msra.mxu0 0.0
        %2135 = vmatprep.subr.mxu0 0.0
        %2136 = vmatpush1.msra.mxu0 0.0
        %2137 = vmatprep.subr.mxu0 0.0
        %2138 = vmatpush1.msra.mxu0 0.0
        %2139 = vmatprep.subr.mxu0 0.0
        %2140 = vmatpush1.msra.mxu0 0.0
        %2141 = vmatprep.subr.mxu0 0.0
        %2142 = vmatpush1.msra.mxu0 0.0
        %2143 = vmatprep.subr.mxu0 0.0
        %2144 = vmatpush1.msra.mxu0 0.0
        %2145 = vmatprep.subr.mxu0 0.0
        %2146 = vmatpush1.msra.mxu0 0.0
        %2147 = vmatprep.subr.mxu0 0.0
        %2148 = vmatpush1.msra.mxu0 0.0
        %2149 = vmatprep.subr.mxu0 0.0
        %2150 = vmatpush1.msra.mxu0 0.0
        %2151 = vmatprep.subr.mxu0 0.0
        %2152 = vmatpush1.msra.mxu0 0.0
        %2153 = vmatprep.subr.mxu0 0.0
        %2154 = vmatpush1.msra.mxu0 0.0
        %2155 = vmatprep.subr.mxu0 0.0
        %2156 = vmatpush1.msra.mxu0 0.0
        %2157 = vmatprep.subr.mxu0 0.0
        %2158 = vmatpush1.msra.mxu0 0.0
        %2159 = vmatprep.subr.mxu0 0.0
        %2160 = vmatpush1.msra.mxu0 0.0
        %2161 = vmatprep.subr.mxu0 0.0
        %2162 = vmatpush1.msra.mxu0 0.0
        %2163 = vmatprep.subr.mxu0 0.0
        %2164 = vmatpush1.msra.mxu0 0.0
        %2165 = vmatprep.subr.mxu0 0.0
        %2166 = vmatpush1.msra.mxu0 0.0
        %2167 = vmatprep.subr.mxu0 0.0
        %2168 = vmatpush1.msra.mxu0 0.0
        %2169 = vmatprep.subr.mxu0 0.0
        %2170 = vmatpush1.msra.mxu0 0.0
        %2171 = vmatprep.subr.mxu0 0.0
        %2172 = vmatpush1.msra.mxu0 0.0
        %2173 = vmatprep.subr.mxu0 0.0
        %2174 = vmatpush1.msra.mxu0 0.0
        %2175 = vmatprep.subr.mxu0 0.0
        %2176 = vmatpush1.msra.mxu0 0.0
        %2177 = vmatprep.subr.mxu0 0.0
        %2178 = vmatpush1.msra.mxu0 0.0
        %2179 = vmatprep.subr.mxu0 0.0
        %2180 = vmatpush1.msra.mxu0 0.0
        %2181 = vmatprep.subr.mxu0 0.0
        %2182 = vmatpush1.msra.mxu0 0.0
        %2183 = vmatprep.subr.mxu0 0.0
        %2184 = vmatpush1.msra.mxu0 0.0
        %2185 = vmatprep.subr.mxu0 0.0
        %2186 = vmatpush1.msra.mxu0 0.0
        %2187 = vmatprep.subr.mxu0 0.0
        %2188 = vmatpush1.msra.mxu0 0.0
        %2189 = vmatprep.mubr.f32.mxu0 0.0
        %2190 = vmatmul.mubr.f32.gmra.mrb[0].mxu0 %v2123
        %v2191 = vpop.f32.mrb[0].mxu0
        %v2192 = vadd.f32 0.0, %v2191
        %v2193 = vpop.f32.mrb[0].mxu0
        %2194 = vdwg.mxu0
        %2197 = vrot.lane.b32.xlu0 %v2116, 24
        %v2198 = vpop.permute.xlu0 %2197
        %2199 = vrot.lane.b32.xlu0 %v2192, 24
        %v2200 = vpop.permute.xlu0 %2199
        %vm2203 = vcmask 261312
        %2204 = vst.msk [vmem:[#allocation3] sm:$0xff] %vm2203, %v2198
        %2205 = vst.msk [vmem:[#allocation3 + $0x8] sm:$0xff] %vm2203, %v2200
        %v2206 = vld [vmem:[#allocation3] sm:$0xff]
        %v2207 = vld [vmem:[#allocation3 + $0x8] sm:$0xff]
        %v2208 = vld [vmem:[%s701] sm:$0xff]
        %v2209 = vld [vmem:[%s701 + $0x8] sm:$0xff]
        %v2210 = vld [vmem:[%s701 + $0x10] sm:$0xff]
        %v2211 = vld [vmem:[%s701 + $0x18] sm:$0xff]
        %v2212 = vld [vmem:[%s704] sm:$0x1]
        %v2214 = vlaneseq
        %v2215 = vshrl.u32 %v2214, 7
        %v2216 = vsub.s32 0, %v2215
        %v2217 = vrot.slane %v2212, %v2216
        %v2220 = vsel %vm756, %v2206, 0
        %v2223 = vsel %vm756, %v2207, 0
        %2225 = vmatprep.subr.mxu0 0.0
        %2226 = vmatpush1.msra.mxu0 %v2208
        %2227 = vmatprep.subr.mxu0 0.0
        %2228 = vmatpush1.msra.mxu0 %v2209
        %2229 = vmatprep.subr.mxu0 0.0
        %2230 = vmatpush1.msra.mxu0 %v2210
        %2231 = vmatprep.subr.mxu0 0.0
        %2232 = vmatpush1.msra.mxu0 %v2211
        %2233 = vmatprep.subr.mxu0 0.0
        %2234 = vmatpush1.msra.mxu0 0.0
        %2235 = vmatprep.subr.mxu0 0.0
        %2236 = vmatpush1.msra.mxu0 0.0
        %2237 = vmatprep.subr.mxu0 0.0
        %2238 = vmatpush1.msra.mxu0 0.0
        %2239 = vmatprep.subr.mxu0 0.0
        %2240 = vmatpush1.msra.mxu0 0.0
        %2241 = vmatprep.subr.mxu0 0.0
        %2242 = vmatpush1.msra.mxu0 0.0
        %2243 = vmatprep.subr.mxu0 0.0
        %2244 = vmatpush1.msra.mxu0 0.0
        %2245 = vmatprep.subr.mxu0 0.0
        %2246 = vmatpush1.msra.mxu0 0.0
        %2247 = vmatprep.subr.mxu0 0.0
        %2248 = vmatpush1.msra.mxu0 0.0
        %2249 = vmatprep.subr.mxu0 0.0
        %2250 = vmatpush1.msra.mxu0 0.0
        %2251 = vmatprep.subr.mxu0 0.0
        %2252 = vmatpush1.msra.mxu0 0.0
        %2253 = vmatprep.subr.mxu0 0.0
        %2254 = vmatpush1.msra.mxu0 0.0
        %2255 = vmatprep.subr.mxu0 0.0
        %2256 = vmatpush1.msra.mxu0 0.0
        %2257 = vmatprep.subr.mxu0 0.0
        %2258 = vmatpush1.msra.mxu0 0.0
        %2259 = vmatprep.subr.mxu0 0.0
        %2260 = vmatpush1.msra.mxu0 0.0
        %2261 = vmatprep.subr.mxu0 0.0
        %2262 = vmatpush1.msra.mxu0 0.0
        %2263 = vmatprep.subr.mxu0 0.0
        %2264 = vmatpush1.msra.mxu0 0.0
        %2265 = vmatprep.subr.mxu0 0.0
        %2266 = vmatpush1.msra.mxu0 0.0
        %2267 = vmatprep.subr.mxu0 0.0
        %2268 = vmatpush1.msra.mxu0 0.0
        %2269 = vmatprep.subr.mxu0 0.0
        %2270 = vmatpush1.msra.mxu0 0.0
        %2271 = vmatprep.subr.mxu0 0.0
        %2272 = vmatpush1.msra.mxu0 0.0
        %2273 = vmatprep.subr.mxu0 0.0
        %2274 = vmatpush1.msra.mxu0 0.0
        %2275 = vmatprep.subr.mxu0 0.0
        %2276 = vmatpush1.msra.mxu0 0.0
        %2277 = vmatprep.subr.mxu0 0.0
        %2278 = vmatpush1.msra.mxu0 0.0
        %2279 = vmatprep.subr.mxu0 0.0
        %2280 = vmatpush1.msra.mxu0 0.0
        %2281 = vmatprep.subr.mxu0 0.0
        %2282 = vmatpush1.msra.mxu0 0.0
        %2283 = vmatprep.subr.mxu0 0.0
        %2284 = vmatpush1.msra.mxu0 0.0
        %2285 = vmatprep.subr.mxu0 0.0
        %2286 = vmatpush1.msra.mxu0 0.0
        %2287 = vmatprep.subr.mxu0 0.0
        %2288 = vmatpush1.msra.mxu0 0.0
        %2289 = vmatprep.mubr.f32.mxu0 0.0
        %2290 = vmatmul.mubr.f32.gmra.mrb[0].mxu0 %v2220
        %v2291 = vpop.f32.mrb[0].mxu0
        %v2292 = vadd.f32 %v2217, %v2291
        %v2293 = vpop.f32.mrb[0].mxu0
        %2294 = vmatprep.mubr.f32.mxu0 0.0
        %2295 = vmatmul.mubr.f32.gmra.mrb[0].mxu0 %v2223
        %v2296 = vpop.f32.mrb[0].mxu0
        %v2297 = vadd.f32 %v2217, %v2296
        %v2298 = vpop.f32.mrb[0].mxu0
        %2299 = vdwg.mxu0
        %v2300 = vmax.f32 %v2292, 0.0
        %v2301 = vmax.f32 %v2297, 0.0
        %v2302 = vadd.f32 %v743, %v2300
        %v2303 = vadd.f32 %v744, %v2301
        %v2304 = vmax.f32 %v2302, 0.0
        %v2305 = vmax.f32 %v2303, 0.0
        %v2306 = vld [vmem:[%s707] sm:$0x1]
        %v2307 = vld [vmem:[%s710] sm:$0x1]
        %v2308 = vsel %vm756, %v2304, 0.0
        %2309 = vadd.xlane.f32.xlu0 %v2308
        %v2310 = vpop.xlane.xlu0 %2309
        %v2311 = vsel %vm756, %v2305, 0.0
        %2312 = vadd.xlane.f32.xlu0 %v2311
        %v2313 = vpop.xlane.xlu0 %2312
        %v2314 = vrcp.pop 32.0
        %v2315 = vmul.f32 %v2310, %v2314
        %v2316 = vmul.f32 %v2313, %v2314
        %v2317 = vsub.f32 %v2304, %v2315
        %v2318 = vsub.f32 %v2305, %v2316
        %v2319 = vmul.f32 %v2317, %v2317
        %v2320 = vmul.f32 %v2318, %v2318
        %v2321 = vsel %vm756, %v2319, 0.0
        %2322 = vadd.xlane.f32.xlu0 %v2321
        %v2323 = vpop.xlane.xlu0 %2322
        %v2324 = vsel %vm756, %v2320, 0.0
        %2325 = vadd.xlane.f32.xlu0 %v2324
        %v2326 = vpop.xlane.xlu0 %2325
        %v2327 = vmul.f32 %v2323, %v2314
        %v2328 = vmul.f32 %v2326, %v2314
        %v2329 = vadd.f32 %v2327, 1e-05
        %v2330 = vadd.f32 %v2328, 1e-05
        %v2331 = vrsqrt.pop %v2329
        %v2332 = vrsqrt.pop %v2330
        %v2333 = vmul.f32 %v2317, %v2331
        %v2334 = vmul.f32 %v2318, %v2332
        %v2336 = vlaneseq
        %v2337 = vshrl.u32 %v2336, 7
        %v2338 = vsub.s32 0, %v2337
        %v2339 = vrot.slane %v2306, %v2338
        %v2341 = vmul.f32 %v2333, %v2339
        %v2342 = vmul.f32 %v2334, %v2339
        %v2344 = vlaneseq
        %v2345 = vshrl.u32 %v2344, 7
        %v2346 = vsub.s32 0, %v2345
        %v2347 = vrot.slane %v2307, %v2346
        %v2349 = vadd.f32 %v2341, %v2347
        %v2350 = vadd.f32 %v2342, %v2347
        %v2351 = vld [vmem:[%s715] sm:$0xff]
        %v2352 = vld [vmem:[%s715 + $0x8] sm:$0xff]
        %v2353 = vld [vmem:[%s715 + $0x10] sm:$0xff]
        %v2354 = vld [vmem:[%s715 + $0x18] sm:$0xff]
        %v2355 = vld [vmem:[%s718] sm:$0x1]
        %v2357 = vlaneseq
        %v2358 = vshrl.u32 %v2357, 7
        %v2359 = vsub.s32 0, %v2358
        %v2360 = vrot.slane %v2355, %v2359
        %v2363 = vsel %vm756, %v2349, 0
        %v2366 = vsel %vm756, %v2350, 0
        %2368 = vmatprep.subr.mxu0 0.0
        %2369 = vmatpush1.msra.mxu0 %v2351
        %2370 = vmatprep.subr.mxu0 0.0
        %2371 = vmatpush1.msra.mxu0 %v2352
        %2372 = vmatprep.subr.mxu0 0.0
        %2373 = vmatpush1.msra.mxu0 %v2353
        %2374 = vmatprep.subr.mxu0 0.0
        %2375 = vmatpush1.msra.mxu0 %v2354
        %2376 = vmatprep.subr.mxu0 0.0
        %2377 = vmatpush1.msra.mxu0 0.0
        %2378 = vmatprep.subr.mxu0 0.0
        %2379 = vmatpush1.msra.mxu0 0.0
        %2380 = vmatprep.subr.mxu0 0.0
        %2381 = vmatpush1.msra.mxu0 0.0
        %2382 = vmatprep.subr.mxu0 0.0
        %2383 = vmatpush1.msra.mxu0 0.0
        %2384 = vmatprep.subr.mxu0 0.0
        %2385 = vmatpush1.msra.mxu0 0.0
        %2386 = vmatprep.subr.mxu0 0.0
        %2387 = vmatpush1.msra.mxu0 0.0
        %2388 = vmatprep.subr.mxu0 0.0
        %2389 = vmatpush1.msra.mxu0 0.0
        %2390 = vmatprep.subr.mxu0 0.0
        %2391 = vmatpush1.msra.mxu0 0.0
        %2392 = vmatprep.subr.mxu0 0.0
        %2393 = vmatpush1.msra.mxu0 0.0
        %2394 = vmatprep.subr.mxu0 0.0
        %2395 = vmatpush1.msra.mxu0 0.0
        %2396 = vmatprep.subr.mxu0 0.0
        %2397 = vmatpush1.msra.mxu0 0.0
        %2398 = vmatprep.subr.mxu0 0.0
        %2399 = vmatpush1.msra.mxu0 0.0
        %2400 = vmatprep.subr.mxu0 0.0
        %2401 = vmatpush1.msra.mxu0 0.0
        %2402 = vmatprep.subr.mxu0 0.0
        %2403 = vmatpush1.msra.mxu0 0.0
        %2404 = vmatprep.subr.mxu0 0.0
        %2405 = vmatpush1.msra.mxu0 0.0
        %2406 = vmatprep.subr.mxu0 0.0
        %2407 = vmatpush1.msra.mxu0 0.0
        %2408 = vmatprep.subr.mxu0 0.0
        %2409 = vmatpush1.msra.mxu0 0.0
        %2410 = vmatprep.subr.mxu0 0.0
        %2411 = vmatpush1.msra.mxu0 0.0
        %2412 = vmatprep.subr.mxu0 0.0
        %2413 = vmatpush1.msra.mxu0 0.0
        %2414 = vmatprep.subr.mxu0 0.0
        %2415 = vmatpush1.msra.mxu0 0.0
        %2416 = vmatprep.subr.mxu0 0.0
        %2417 = vmatpush1.msra.mxu0 0.0
        %2418 = vmatprep.subr.mxu0 0.0
        %2419 = vmatpush1.msra.mxu0 0.0
        %2420 = vmatprep.subr.mxu0 0.0
        %2421 = vmatpush1.msra.mxu0 0.0
        %2422 = vmatprep.subr.mxu0 0.0
        %2423 = vmatpush1.msra.mxu0 0.0
        %2424 = vmatprep.subr.mxu0 0.0
        %2425 = vmatpush1.msra.mxu0 0.0
        %2426 = vmatprep.subr.mxu0 0.0
        %2427 = vmatpush1.msra.mxu0 0.0
        %2428 = vmatprep.subr.mxu0 0.0
        %2429 = vmatpush1.msra.mxu0 0.0
        %2430 = vmatprep.subr.mxu0 0.0
        %2431 = vmatpush1.msra.mxu0 0.0
        %2432 = vmatprep.mubr.f32.mxu0 0.0
        %2433 = vmatmul.mubr.f32.gmra.mrb[0].mxu0 %v2363
        %v2434 = vpop.f32.mrb[0].mxu0
        %v2435 = vadd.f32 %v2360, %v2434
        %v2436 = vpop.f32.mrb[0].mxu0
        %2437 = vmatprep.mubr.f32.mxu0 0.0
        %2438 = vmatmul.mubr.f32.gmra.mrb[0].mxu0 %v2366
        %v2439 = vpop.f32.mrb[0].mxu0
        %v2440 = vadd.f32 %v2360, %v2439
        %v2441 = vpop.f32.mrb[0].mxu0
        %2442 = vdwg.mxu0
        %v2443 = vmax.f32 %v2435, 0.0
        %v2444 = vmax.f32 %v2440, 0.0
        %v2445 = vld [vmem:[%s723] sm:$0xff]
        %v2446 = vld [vmem:[%s723 + $0x8] sm:$0xff]
        %v2447 = vld [vmem:[%s723 + $0x10] sm:$0xff]
        %v2448 = vld [vmem:[%s723 + $0x18] sm:$0xff]
        %v2449 = vld [vmem:[%s723 + $0x20] sm:$0xff]
        %v2450 = vld [vmem:[%s723 + $0x28] sm:$0xff]
        %v2451 = vld [vmem:[%s723 + $0x30] sm:$0xff]
        %v2452 = vld [vmem:[%s723 + $0x38] sm:$0xff]
        %v2453 = vld [vmem:[%s723 + $0x40] sm:$0xff]
        %v2454 = vld [vmem:[%s723 + $0x48] sm:$0xff]
        %v2455 = vld [vmem:[%s723 + $0x50] sm:$0xff]
        %v2456 = vld [vmem:[%s723 + $0x58] sm:$0xff]
        %v2457 = vld [vmem:[%s723 + $0x60] sm:$0xff]
        %v2458 = vld [vmem:[%s723 + $0x68] sm:$0xff]
        %v2459 = vld [vmem:[%s723 + $0x70] sm:$0xff]
        %v2460 = vld [vmem:[%s723 + $0x78] sm:$0xff]
        %v2461 = vld [vmem:[%s726] sm:$0x1]
        %v2463 = vlaneseq
        %v2464 = vshrl.u32 %v2463, 7
        %v2465 = vsub.s32 0, %v2464
        %v2466 = vrot.slane %v2461, %v2465
        %2468 = vmatprep.subr.mxu0 0.0
        %2469 = vmatpush1.msra.mxu0 %v2445
        %2470 = vmatprep.subr.mxu0 0.0
        %2471 = vmatpush1.msra.mxu0 %v2446
        %2472 = vmatprep.subr.mxu0 0.0
        %2473 = vmatpush1.msra.mxu0 %v2447
        %2474 = vmatprep.subr.mxu0 0.0
        %2475 = vmatpush1.msra.mxu0 %v2448
        %2476 = vmatprep.subr.mxu0 0.0
        %2477 = vmatpush1.msra.mxu0 %v2449
        %2478 = vmatprep.subr.mxu0 0.0
        %2479 = vmatpush1.msra.mxu0 %v2450
        %2480 = vmatprep.subr.mxu0 0.0
        %2481 = vmatpush1.msra.mxu0 %v2451
        %2482 = vmatprep.subr.mxu0 0.0
        %2483 = vmatpush1.msra.mxu0 %v2452
        %2484 = vmatprep.subr.mxu0 0.0
        %2485 = vmatpush1.msra.mxu0 %v2453
        %2486 = vmatprep.subr.mxu0 0.0
        %2487 = vmatpush1.msra.mxu0 %v2454
        %2488 = vmatprep.subr.mxu0 0.0
        %2489 = vmatpush1.msra.mxu0 %v2455
        %2490 = vmatprep.subr.mxu0 0.0
        %2491 = vmatpush1.msra.mxu0 %v2456
        %2492 = vmatprep.subr.mxu0 0.0
        %2493 = vmatpush1.msra.mxu0 %v2457
        %2494 = vmatprep.subr.mxu0 0.0
        %2495 = vmatpush1.msra.mxu0 %v2458
        %2496 = vmatprep.subr.mxu0 0.0
        %2497 = vmatpush1.msra.mxu0 %v2459
        %2498 = vmatprep.subr.mxu0 0.0
        %2499 = vmatpush1.msra.mxu0 %v2460
        %2500 = vmatprep.subr.mxu0 0.0
        %2501 = vmatpush1.msra.mxu0 0.0
        %2502 = vmatprep.subr.mxu0 0.0
        %2503 = vmatpush1.msra.mxu0 0.0
        %2504 = vmatprep.subr.mxu0 0.0
        %2505 = vmatpush1.msra.mxu0 0.0
        %2506 = vmatprep.subr.mxu0 0.0
        %2507 = vmatpush1.msra.mxu0 0.0
        %2508 = vmatprep.subr.mxu0 0.0
        %2509 = vmatpush1.msra.mxu0 0.0
        %2510 = vmatprep.subr.mxu0 0.0
        %2511 = vmatpush1.msra.mxu0 0.0
        %2512 = vmatprep.subr.mxu0 0.0
        %2513 = vmatpush1.msra.mxu0 0.0
        %2514 = vmatprep.subr.mxu0 0.0
        %2515 = vmatpush1.msra.mxu0 0.0
        %2516 = vmatprep.subr.mxu0 0.0
        %2517 = vmatpush1.msra.mxu0 0.0
        %2518 = vmatprep.subr.mxu0 0.0
        %2519 = vmatpush1.msra.mxu0 0.0
        %2520 = vmatprep.subr.mxu0 0.0
        %2521 = vmatpush1.msra.mxu0 0.0
        %2522 = vmatprep.subr.mxu0 0.0
        %2523 = vmatpush1.msra.mxu0 0.0
        %2524 = vmatprep.subr.mxu0 0.0
        %2525 = vmatpush1.msra.mxu0 0.0
        %2526 = vmatprep.subr.mxu0 0.0
        %2527 = vmatpush1.msra.mxu0 0.0
        %2528 = vmatprep.subr.mxu0 0.0
        %2529 = vmatpush1.msra.mxu0 0.0
        %2530 = vmatprep.subr.mxu0 0.0
        %2531 = vmatpush1.msra.mxu0 0.0
        %2532 = vmatprep.mubr.f32.mxu0 0.0
        %2533 = vmatmul.mubr.f32.gmra.mrb[0].mxu0 %v2443
        %v2534 = vpop.f32.mrb[0].mxu0
        %v2535 = vadd.f32 %v2466, %v2534
        %v2536 = vpop.f32.mrb[0].mxu0
        %2537 = vmatprep.mubr.f32.mxu0 0.0
        %2538 = vmatmul.mubr.f32.gmra.mrb[0].mxu0 %v2444
        %v2539 = vpop.f32.mrb[0].mxu0
        %v2540 = vadd.f32 %v2466, %v2539
        %v2541 = vpop.f32.mrb[0].mxu0
        %2542 = vdwg.mxu0
        %v2543 = vadd.f32 %v2349, %v2535
        %v2544 = vadd.f32 %v2350, %v2540
        %v2545 = vmax.f32 %v2543, 0.0
        %v2546 = vmax.f32 %v2544, 0.0
        %v2547 = vld [vmem:[%s729] sm:$0x1]
        %v2548 = vld [vmem:[%s732] sm:$0x1]
        %v2549 = vsel %vm756, %v2545, 0.0
        %2550 = vadd.xlane.f32.xlu0 %v2549
        %v2551 = vpop.xlane.xlu0 %2550
        %v2552 = vsel %vm756, %v2546, 0.0
        %2553 = vadd.xlane.f32.xlu0 %v2552
        %v2554 = vpop.xlane.xlu0 %2553
        %v2555 = vmul.f32 %v2551, %v2314
        %v2556 = vmul.f32 %v2554, %v2314
        %v2557 = vsub.f32 %v2545, %v2555
        %v2558 = vsub.f32 %v2546, %v2556
        %v2559 = vmul.f32 %v2557, %v2557
        %v2560 = vmul.f32 %v2558, %v2558
        %v2561 = vsel %vm756, %v2559, 0.0
        %2562 = vadd.xlane.f32.xlu0 %v2561
        %v2563 = vpop.xlane.xlu0 %2562
        %v2564 = vsel %vm756, %v2560, 0.0
        %2565 = vadd.xlane.f32.xlu0 %v2564
        %v2566 = vpop.xlane.xlu0 %2565
        %v2567 = vmul.f32 %v2563, %v2314
        %v2568 = vmul.f32 %v2566, %v2314
        %v2569 = vadd.f32 %v2567, 1e-05
        %v2570 = vadd.f32 %v2568, 1e-05
        %v2571 = vrsqrt.pop %v2569
        %v2572 = vrsqrt.pop %v2570
        %v2573 = vmul.f32 %v2557, %v2571
        %v2574 = vmul.f32 %v2558, %v2572
        %v2576 = vlaneseq
        %v2577 = vshrl.u32 %v2576, 7
        %v2578 = vsub.s32 0, %v2577
        %v2579 = vrot.slane %v2547, %v2578
        %v2581 = vmul.f32 %v2573, %v2579
        %v2582 = vmul.f32 %v2574, %v2579
        %v2584 = vlaneseq
        %v2585 = vshrl.u32 %v2584, 7
        %v2586 = vsub.s32 0, %v2585
        %v2587 = vrot.slane %v2548, %v2586
        %v2589 = vadd.f32 %v2581, %v2587
        %v2590 = vadd.f32 %v2582, %v2587
        %2591 = vst.msk [vmem:[#allocation2] sm:$0xff] %vm756, %v2589
        %2592 = vst.msk [vmem:[#allocation2 + $0x8] sm:$0xff] %vm756, %v2590
        %p2593 = scmp.eq.s32.totalorder %s32, 1
        // Predicated region
        $region85: #{tpu_custom_call.1} parent=79 // pred_check
          %p2594 = pneg %p2593
        $region86: #{tpu_custom_call.1} parent=79 // pred_check_branch
          %2596 = sbr.rel (%p2594) target = $region88
        $region87: #{tpu_custom_call.1} parent=79 // pred_region
          %v2597 = vld [vmem:[%s687] sm:$0xff]
          %v2598 = vld [vmem:[%s687 + $0x8] sm:$0xff]
          %2600 = vset.pattern.permute.xlu0 0
          %2601 = vperm.xlu0 %2600, %v2597
          %v2602 = vpop.permute.xlu0 %2601
          %2605 = vset.pattern.permute.xlu0 0
          %2606 = vperm.xlu0 %2605, %v2598
          %v2607 = vpop.permute.xlu0 %2606
          %v2609 = vmul.f32 %v2589, %v2602
          %v2610 = vmul.f32 %v2590, %v2607
          %2611 = vst.msk [vmem:[#allocation4] sm:$0xff] %vm756, %v2609
          %2612 = vst.msk [vmem:[#allocation4 + $0x8] sm:$0xff] %vm756, %v2610
        $region88: #{tpu_custom_call.1} parent=79 // pred_fallthru
          _
        // Predicated region
        $region89: #{tpu_custom_call.1} parent=79 // pred_check
          %p2613 = pneg %p447
        $region90: #{tpu_custom_call.1} parent=79 // pred_check_branch
          %2615 = sbr.rel (%p2613) target = $region92
        $region91: #{tpu_custom_call.1} parent=79 // pred_region
          %s2616 = smul.u32 2, %s31
          %s2618 = ssub.s32 256, 256
          %2619 = vsyncadd [#allocation5], %s2618
          %s2620 = smul.addr %s2616, 128
          %s2621 = scalar_lea.hbm %s15, %s2620
          %s2622 = sshll.u32 [#allocation4], 4
          %s2623 = int_to_ptr.vmem [resolvable:$true] %s2622
          %2628 = dma.vmem_to_hbm [thread:$0]  %s2623, 256, %s2621, [#allocation5], 128, 128, 8
        $region92: #{tpu_custom_call.1} parent=79 // pred_fallthru
          _
        // Predicated region
        $region93: #{tpu_custom_call.1} parent=79 // pred_check
          %p2629 = pneg %p447
        $region94: #{tpu_custom_call.1} parent=79 // pred_check_branch
          %2631 = sbr.rel (%p2629) target = $region96
        $region95: #{tpu_custom_call.1} parent=79 // pred_region
          %2632 = dma.done [#allocation5], 256
        $region96: #{tpu_custom_call.1} parent=79 // pred_fallthru
          _
      $region80: #{tpu_custom_call.1} parent=5 // pred_fallthru
        _
      %p2633 = scmp.le.s32.totalorder 2, %s22
      // Predicated region
      $region97: #{tpu_custom_call.1} parent=5 // pred_check
        %p2634 = pneg %p2633
      $region98: #{tpu_custom_call.1} parent=5 // pred_check_branch
        %2636 = sbr.rel (%p2634) target = $region100
      $region99: #{tpu_custom_call.1} parent=5 // pred_region
        %s2637 = ssub.s32 %s22, 2
      $region100: #{tpu_custom_call.1} parent=5 // pred_fallthru
        _
    $region6: #{tpu_custom_call.1} parent=1 // loop_footer
      %s26 = sadd.s32 1, %s22
    $region7: #{tpu_custom_call.1} parent=1 // loop_footer_branch
      %21 = sbr.rel target = $region3
    $region8: #{tpu_custom_call.1} parent=1 // loop_exit
      _
    %2638 = vsyncpa [#allocation5], 1
    %s2639 = scalar_lea.sflag [#allocation5], 1
    %2640 = vsyncpa %s2639, 1

</llo_original>
